<compile_context>
chip_gen: v6e
topology: v6e:2x2x1
jax: 0.10.0
libtpu: 0.0.40
codegen_flags: <defaults>
</compile_context>

<pallas_src>
import functools

import jax
import jax.numpy as jnp
from jax import lax
from jax.experimental import pallas as pl
from jax.experimental.pallas import tpu as pltpu

EPS = 1e-5                      # nn.LayerNorm default eps
VMEM_LIMIT = 48 * 1024 * 1024   # safe on v5e/v6e (128 MiB) and v7x (64 MiB)
# TODO(synk): raise toward ~100 MiB (and use larger row tiles) on v5e/v6e for
#   production shapes; keep <= 64 MiB on v7x.


def _layer_norm(x, g, b):
    mu = jnp.mean(x, axis=-1, keepdims=True)
    var = jnp.mean((x - mu) ** 2, axis=-1, keepdims=True)
    return (x - mu) * lax.rsqrt(var + EPS) * g + b


# -------- fully fused encoder layer: LN1+MHA+res + LN2+FFN+res (+final LN) ---
def _layer_kernel(x_ref, g1_ref, b1_ref, wqkv_ref, wp_ref, bias_ref,
                  g2_ref, b2_ref, w1_ref, fb1_ref, w2_ref, fb2_ref,
                  gf_ref, bf_ref, o_ref, *,
                  n_head, d_key, d_value, scale, apply_final_ln):
    bf16 = jnp.bfloat16
    Hk = n_head * d_key

    x = x_ref[0]                                       # (S, D) f32, residual 1
    y = _layer_norm(x, g1_ref[...], b1_ref[...])       # preprocesser1 ('n')

    # single wide projection covering Q|K|V for all heads (one MXU pass)
    qkv = jnp.dot(y.astype(bf16), wqkv_ref[...],
                  preferred_element_type=jnp.float32)  # (S, 2*H*dk + H*dv)
    q = (qkv[:, :Hk] * scale).astype(bf16)             # scale applied once to q
    k = qkv[:, Hk:2 * Hk].astype(bf16)
    v = qkv[:, 2 * Hk:].astype(bf16)

    # per-head attention with accumulation straight into the (S, D) output;
    # n_head is a static Python int -> unrolled, static slices, no concat.
    acc = jnp.zeros((x.shape[0], x.shape[1]), jnp.float32)
    for h in range(n_head):
        qh = q[:, h * d_key:(h + 1) * d_key]                           # (S, dk)
        kh = k[:, h * d_key:(h + 1) * d_key]                           # (S, dk)
        vh = v[:, h * d_value:(h + 1) * d_value]                       # (S, dv)
        s = lax.dot_general(qh, kh, (((1,), (1,)), ((), ())),
                            preferred_element_type=jnp.float32)        # q @ k.T
        s = s + bias_ref[0, h]                                         # (S, S)
        s = s - jnp.max(s, axis=-1, keepdims=True)
        p = jnp.exp(s)
        p = p * pl.reciprocal(jnp.sum(p, axis=-1, keepdims=True), approx=True)
        ctx_h = jnp.dot(p.astype(bf16), vh,
                        preferred_element_type=jnp.float32)            # (S, dv)
        acc = acc + jnp.dot(ctx_h.astype(bf16),
                            wp_ref[h * d_value:(h + 1) * d_value, :],
                            preferred_element_type=jnp.float32)        # (S, D)

    attn_out = x + acc                                 # postprocesser1 ('da')

    # ------ fused LN2 + FFN + residual (same activation tile, no HBM trip) ---
    z = _layer_norm(attn_out, g2_ref[...], b2_ref[...])   # preprocesser2 ('n')
    hid = jnp.dot(z.astype(bf16), w1_ref[...],
                  preferred_element_type=jnp.float32) + fb1_ref[...]
    hid = jnp.maximum(hid, 0.0)                            # relu
    ffn = jnp.dot(hid.astype(bf16), w2_ref[...],
                  preferred_element_type=jnp.float32) + fb2_ref[...]
    res = attn_out + ffn                                   # postprocesser2 ('da')

    if apply_final_ln:                                     # stack-final 'n'
        res = _layer_norm(res, gf_ref[...], bf_ref[...])
    o_ref[0] = res.astype(o_ref.dtype)


def encoder_layer_block(x, attn_bias, L, ln_f_g, ln_f_b, *,
                        n_head, d_key, d_value, d_model, apply_final_ln):
    B, S, D = x.shape
    H = n_head
    Dh = L["w1"].shape[1]
    n_qkv = 2 * H * d_key + H * d_value
    scale = float(d_model) ** (-0.5)   # matches reference: d_model**-0.5
    kernel = functools.partial(_layer_kernel, n_head=H, d_key=d_key,
                               d_value=d_value, scale=scale,
                               apply_final_ln=apply_final_ln)
    const = lambda b: (0, 0)
    return pl.pallas_call(
        kernel,
        out_shape=jax.ShapeDtypeStruct((B, S, D), x.dtype),
        grid_spec=pltpu.PrefetchScalarGridSpec(
            num_scalar_prefetch=0,
            grid=(B,),
            # TODO(synk): at production B add an S (q-row) grid axis so each
            #   TensorCore gets >1 step and DMAs pipeline behind compute.
            in_specs=[
                pl.BlockSpec((1, S, D), lambda b: (b, 0, 0)),          # x
                pl.BlockSpec((1, D), const),                           # ln1 gamma
                pl.BlockSpec((1, D), const),                           # ln1 beta
                pl.BlockSpec((D, n_qkv), const),                       # wq|wk|wv (bf16)
                pl.BlockSpec((H * d_value, D), const),                 # wproj (bf16)
                pl.BlockSpec((1, H, S, S), lambda b: (b, 0, 0, 0)),    # attn_bias
                pl.BlockSpec((1, D), const),                           # ln2 gamma
                pl.BlockSpec((1, D), const),                           # ln2 beta
                pl.BlockSpec((D, Dh), const),                          # w1 (bf16)
                pl.BlockSpec((1, Dh), const),                          # b1
                pl.BlockSpec((Dh, D), const),                          # w2 (bf16)
                pl.BlockSpec((1, D), const),                           # b2
                pl.BlockSpec((1, D), const),                           # final ln gamma
                pl.BlockSpec((1, D), const),                           # final ln beta
            ],
            out_specs=pl.BlockSpec((1, S, D), lambda b: (b, 0, 0)),
        ),
        compiler_params=pltpu.CompilerParams(
            dimension_semantics=("parallel",),
            vmem_limit_bytes=VMEM_LIMIT),
    )(x, L["ln1_g"].reshape(1, -1), L["ln1_b"].reshape(1, -1),
      L["wqkv"], L["wproj"], attn_bias,
      L["ln2_g"].reshape(1, -1), L["ln2_b"].reshape(1, -1),
      L["w1"], L["b1"].reshape(1, -1), L["w2"], L["b2"].reshape(1, -1),
      ln_f_g.reshape(1, -1), ln_f_b.reshape(1, -1))


# ------------------------------ Encoder forward ------------------------------
@functools.partial(jax.jit,
                   static_argnames=("n_head", "d_key", "d_value", "d_model"))
def encoder_forward(x, attn_bias, params, *, n_head, d_key, d_value, d_model):
    n_layers = len(params["layers"])
    for li, L in enumerate(params["layers"]):
        x = encoder_layer_block(
            x, attn_bias, L, params["ln_g"], params["ln_b"],
            n_head=n_head, d_key=d_key, d_value=d_value, d_model=d_model,
            apply_final_ln=(li == n_layers - 1))
    return x


# --------------------------- pure-JAX reference ------------------------------
# Mirrors the kernel's mixed precision (bf16 MXU inputs, f32 accumulation,
# f32 elementwise) so the comparison isolates kernel correctness.
def ref_encoder(x, attn_bias, params, n_head, d_key, d_value, d_model):
    bf16 = jnp.bfloat16

    def ln(t, g, b):
        mu = t.mean(-1, keepdims=True)
        var = ((t - mu) ** 2).mean(-1, keepdims=True)
        return (t - mu) / jnp.sqrt(var + EPS) * g + b

    B, S, D = x.shape
    Hk = n_head * d_key
    scale = d_model ** (-0.5)
    for L in params["layers"]:
        y = ln(x, L["ln1_g"], L["ln1_b"])
        qkv = jnp.dot(y.astype(bf16), L["wqkv"],
                      preferred_element_type=jnp.float32)
        q = (qkv[..., :Hk] * scale).astype(bf16)
        k = qkv[..., Hk:2 * Hk].astype(bf16)
        v = qkv[..., 2 * Hk:].astype(bf16)
        qh = q.reshape(B, S, n_head, d_key).transpose(0, 2, 1, 3)
        kh = k.reshape(B, S, n_head, d_key).transpose(0, 2, 1, 3)
        vh = v.reshape(B, S, n_head, d_value).transpose(0, 2, 1, 3)
        s = jnp.einsum("bhqd,bhkd->bhqk", qh, kh,
                       preferred_element_type=jnp.float32) + attn_bias
        w = jax.nn.softmax(s, axis=-1)
        ctx = jnp.einsum("bhqk,bhkd->bhqd", w.astype(bf16), vh,
                         preferred_element_type=jnp.float32)
        ctx = ctx.transpose(0, 2, 1, 3).reshape(B, S, n_head * d_value)
        attn_out = x + jnp.dot(ctx.astype(bf16), L["wproj"],
                               preferred_element_type=jnp.float32)
        z = ln(attn_out, L["ln2_g"], L["ln2_b"])
        h = jax.nn.relu(jnp.dot(z.astype(bf16), L["w1"],
                                preferred_element_type=jnp.float32) + L["b1"])
        x = attn_out + jnp.dot(h.astype(bf16), L["w2"],
                               preferred_element_type=jnp.float32) + L["b2"]
    return ln(x, params["ln_g"], params["ln_b"])


# ----------------------------------- main ------------------------------------
if __name__ == "__main__":
    B, S = 2, 8
    n_layer, n_head = 2, 2
    d_key = d_value = 16
    d_model, d_inner = 32, 64
    bf16 = jnp.bfloat16

    key = jax.random.PRNGKey(0)
    ks = iter(jax.random.split(key, 8 * n_layer * 16))

    def rnd(shape, scale=0.1):
        return jax.random.normal(next(ks), shape, dtype=jnp.float32) * scale

    layers = []
    for _ in range(n_layer):
        wq = rnd((d_model, n_head * d_key))
        wk = rnd((d_model, n_head * d_key))
        wv = rnd((d_model, n_head * d_value))
        layers.append(dict(
            ln1_g=1.0 + rnd((d_model,)), ln1_b=rnd((d_model,)),
            # fused Q|K|V projection weight, stored bf16 (native MXU input)
            wqkv=jnp.concatenate([wq, wk, wv], axis=1).astype(bf16),
            wproj=rnd((n_head * d_value, d_model)).astype(bf16),
            ln2_g=1.0 + rnd((d_model,)), ln2_b=rnd((d_model,)),
            w1=rnd((d_model, d_inner)).astype(bf16), b1=rnd((d_inner,)),
            w2=rnd((d_inner, d_model)).astype(bf16), b2=rnd((d_model,)),
        ))
    params = dict(layers=layers,
                  ln_g=1.0 + rnd((d_model,)), ln_b=rnd((d_model,)))

    enc_input = jax.random.normal(next(ks), (B, S, d_model), dtype=jnp.float32)
    attn_bias = rnd((B, n_head, S, S), scale=1.0)

    out = encoder_forward(enc_input, attn_bias, params,
                          n_head=n_head, d_key=d_key,
                          d_value=d_value, d_model=d_model)
    out = jax.block_until_ready(out)

    ref = ref_encoder(enc_input, attn_bias, params,
                      n_head, d_key, d_value, d_model)
    assert out.shape == (B, S, d_model)
    # tolerance covers the EUP approximate-reciprocal softmax denominator and
    # the per-head f32 accumulation-order difference vs the fused reference
    assert jnp.allclose(out, ref, atol=5e-3, rtol=5e-3), (
        float(jnp.max(jnp.abs(out - ref))))

    print("KERNEL_OK")
</pallas_src>

<mosaic_0001>
module attributes {stable_mosaic.version = 11 : i64} {
  func.func @_layer_kernel(%arg0: i32, %arg1: memref<1x8x32xf32, #tpu.memory_space<vmem>>, %arg2: memref<1x32xf32, #tpu.memory_space<vmem>>, %arg3: memref<1x32xf32, #tpu.memory_space<vmem>>, %arg4: memref<32x96xbf16, #tpu.memory_space<vmem>>, %arg5: memref<32x32xbf16, #tpu.memory_space<vmem>>, %arg6: memref<1x2x8x8xf32, #tpu.memory_space<vmem>>, %arg7: memref<1x32xf32, #tpu.memory_space<vmem>>, %arg8: memref<1x32xf32, #tpu.memory_space<vmem>>, %arg9: memref<32x64xbf16, #tpu.memory_space<vmem>>, %arg10: memref<1x64xf32, #tpu.memory_space<vmem>>, %arg11: memref<64x32xbf16, #tpu.memory_space<vmem>>, %arg12: memref<1x32xf32, #tpu.memory_space<vmem>>, %arg13: memref<1x32xf32, #tpu.memory_space<vmem>>, %arg14: memref<1x32xf32, #tpu.memory_space<vmem>>, %arg15: memref<1x8x32xf32, #tpu.memory_space<vmem>>) attributes {dimension_semantics = [#tpu.dimension_semantics<parallel>], iteration_bounds = array<i64: 2>, scalar_prefetch = 0 : i64, scratch_operands = 0 : i64, tpu.core_type = #tpu.core_type<tc>, window_params = [{transform_indices = @transform_0, window_bounds = array<i64: 1, 8, 32>}, {pipeline_mode = #tpu.pipeline_mode<synchronous>, transform_indices = @transform_1, window_bounds = array<i64: 1, 32>}, {pipeline_mode = #tpu.pipeline_mode<synchronous>, transform_indices = @transform_2, window_bounds = array<i64: 1, 32>}, {pipeline_mode = #tpu.pipeline_mode<synchronous>, transform_indices = @transform_3, window_bounds = array<i64: 32, 96>}, {pipeline_mode = #tpu.pipeline_mode<synchronous>, transform_indices = @transform_4, window_bounds = array<i64: 32, 32>}, {transform_indices = @transform_5, window_bounds = array<i64: 1, 2, 8, 8>}, {pipeline_mode = #tpu.pipeline_mode<synchronous>, transform_indices = @transform_6, window_bounds = array<i64: 1, 32>}, {pipeline_mode = #tpu.pipeline_mode<synchronous>, transform_indices = @transform_7, window_bounds = array<i64: 1, 32>}, {pipeline_mode = #tpu.pipeline_mode<synchronous>, transform_indices = @transform_8, window_bounds = array<i64: 32, 64>}, {pipeline_mode = #tpu.pipeline_mode<synchronous>, transform_indices = @transform_9, window_bounds = array<i64: 1, 64>}, {pipeline_mode = #tpu.pipeline_mode<synchronous>, transform_indices = @transform_10, window_bounds = array<i64: 64, 32>}, {pipeline_mode = #tpu.pipeline_mode<synchronous>, transform_indices = @transform_11, window_bounds = array<i64: 1, 32>}, {pipeline_mode = #tpu.pipeline_mode<synchronous>, transform_indices = @transform_12, window_bounds = array<i64: 1, 32>}, {pipeline_mode = #tpu.pipeline_mode<synchronous>, transform_indices = @transform_13, window_bounds = array<i64: 1, 32>}, {transform_indices = @transform_14, window_bounds = array<i64: 1, 8, 32>}]} {
    %c0 = arith.constant 0 : index
    %c0_0 = arith.constant 0 : index
    %c0_1 = arith.constant 0 : index
    %0 = vector.load %arg1[%c0, %c0_0, %c0_1] : memref<1x8x32xf32, #tpu.memory_space<vmem>>, vector<1x8x32xf32>
    %1 = vector.shape_cast %0 : vector<1x8x32xf32> to vector<8x32xf32>
    %c0_2 = arith.constant 0 : index
    %c0_3 = arith.constant 0 : index
    %2 = vector.load %arg2[%c0_2, %c0_3] : memref<1x32xf32, #tpu.memory_space<vmem>>, vector<1x32xf32>
    %c0_4 = arith.constant 0 : index
    %c0_5 = arith.constant 0 : index
    %3 = vector.load %arg3[%c0_4, %c0_5] : memref<1x32xf32, #tpu.memory_space<vmem>>, vector<1x32xf32>
    %cst = arith.constant dense<0.000000e+00> : vector<8xf32>
    %4 = vector.multi_reduction <add>, %1, %cst [1] : vector<8x32xf32> to vector<8xf32>
    %5 = vector.shape_cast %4 : vector<8xf32> to vector<8x1xf32>
    %cst_6 = arith.constant 3.200000e+01 : f32
    %6 = vector.broadcast %cst_6 : f32 to vector<8x1xf32>
    %7 = arith.divf %5, %6 : vector<8x1xf32>
    %8 = vector.broadcast %7 : vector<8x1xf32> to vector<8x32xf32>
    %9 = arith.subf %1, %8 : vector<8x32xf32>
    %10 = arith.mulf %9, %9 : vector<8x32xf32>
    %cst_7 = arith.constant dense<0.000000e+00> : vector<8xf32>
    %11 = vector.multi_reduction <add>, %10, %cst_7 [1] : vector<8x32xf32> to vector<8xf32>
    %12 = vector.shape_cast %11 : vector<8xf32> to vector<8x1xf32>
    %cst_8 = arith.constant 3.200000e+01 : f32
    %13 = vector.broadcast %cst_8 : f32 to vector<8x1xf32>
    %14 = arith.divf %12, %13 : vector<8x1xf32>
    %15 = vector.broadcast %7 : vector<8x1xf32> to vector<8x32xf32>
    %16 = arith.subf %1, %15 : vector<8x32xf32>
    %cst_9 = arith.constant 9.99999974E-6 : f32
    %17 = vector.broadcast %cst_9 : f32 to vector<8x1xf32>
    %18 = arith.addf %14, %17 : vector<8x1xf32>
    %19 = math.rsqrt %18 : vector<8x1xf32>
    %20 = vector.broadcast %19 : vector<8x1xf32> to vector<8x32xf32>
    %21 = arith.mulf %16, %20 : vector<8x32xf32>
    %22 = vector.broadcast %2 : vector<1x32xf32> to vector<8x32xf32>
    %23 = arith.mulf %21, %22 : vector<8x32xf32>
    %24 = vector.broadcast %3 : vector<1x32xf32> to vector<8x32xf32>
    %25 = arith.addf %23, %24 : vector<8x32xf32>
    %26 = arith.truncf %25 : vector<8x32xf32> to vector<8x32xbf16>
    %c0_10 = arith.constant 0 : index
    %c0_11 = arith.constant 0 : index
    %27 = vector.load %arg4[%c0_10, %c0_11] : memref<32x96xbf16, #tpu.memory_space<vmem>>, vector<32x96xbf16>
    %cst_12 = arith.constant dense<0.000000e+00> : vector<8x96xf32>
    %28 = tpu.matmul %26, %27, %cst_12 {dimension_numbers = #tpu.dot_dimension_numbers<[1], [0], [0], [1], [0, 0, 1, 1], [], []>} : vector<8x32xbf16>, vector<32x96xbf16>, vector<8x96xf32> -> vector<8x96xf32>
    %29 = vector.extract_strided_slice %28 {offsets = [0, 0], sizes = [8, 32], strides = [1, 1]} : vector<8x96xf32> to vector<8x32xf32>
    %cst_13 = arith.constant 0.176776692 : f32
    %30 = vector.broadcast %cst_13 : f32 to vector<8x32xf32>
    %31 = arith.mulf %29, %30 : vector<8x32xf32>
    %32 = arith.truncf %31 : vector<8x32xf32> to vector<8x32xbf16>
    %33 = vector.extract_strided_slice %28 {offsets = [0, 32], sizes = [8, 32], strides = [1, 1]} : vector<8x96xf32> to vector<8x32xf32>
    %34 = arith.truncf %33 : vector<8x32xf32> to vector<8x32xbf16>
    %35 = vector.extract_strided_slice %28 {offsets = [0, 64], sizes = [8, 32], strides = [1, 1]} : vector<8x96xf32> to vector<8x32xf32>
    %36 = arith.truncf %35 : vector<8x32xf32> to vector<8x32xbf16>
    %cst_14 = arith.constant 0.000000e+00 : f32
    %37 = vector.broadcast %cst_14 : f32 to vector<8x32xf32>
    %38 = vector.extract_strided_slice %32 {offsets = [0, 0], sizes = [8, 16], strides = [1, 1]} : vector<8x32xbf16> to vector<8x16xbf16>
    %39 = vector.extract_strided_slice %34 {offsets = [0, 0], sizes = [8, 16], strides = [1, 1]} : vector<8x32xbf16> to vector<8x16xbf16>
    %40 = vector.extract_strided_slice %36 {offsets = [0, 0], sizes = [8, 16], strides = [1, 1]} : vector<8x32xbf16> to vector<8x16xbf16>
    %cst_15 = arith.constant dense<0.000000e+00> : vector<8x8xf32>
    %41 = tpu.matmul %38, %39, %cst_15 {dimension_numbers = #tpu.dot_dimension_numbers<[1], [1], [0], [0], [0, 0, 1, 0], [], []>} : vector<8x16xbf16>, vector<8x16xbf16>, vector<8x8xf32> -> vector<8x8xf32>
    %c0_16 = arith.constant 0 : index
    %c0_17 = arith.constant 0 : index
    %c0_18 = arith.constant 0 : index
    %c0_19 = arith.constant 0 : index
    %42 = vector.load %arg6[%c0_16, %c0_17, %c0_18, %c0_19] : memref<1x2x8x8xf32, #tpu.memory_space<vmem>>, vector<1x1x8x8xf32>
    %43 = vector.shape_cast %42 : vector<1x1x8x8xf32> to vector<8x8xf32>
    %44 = arith.addf %41, %43 : vector<8x8xf32>
    %cst_20 = arith.constant dense<0xFF800000> : vector<8xf32>
    %45 = vector.multi_reduction <maximumf>, %44, %cst_20 [1] : vector<8x8xf32> to vector<8xf32>
    %46 = vector.shape_cast %45 : vector<8xf32> to vector<8x1xf32>
    %47 = vector.broadcast %46 : vector<8x1xf32> to vector<8x8xf32>
    %48 = arith.subf %44, %47 : vector<8x8xf32>
    %49 = math.exp %48 : vector<8x8xf32>
    %cst_21 = arith.constant dense<0.000000e+00> : vector<8xf32>
    %50 = vector.multi_reduction <add>, %49, %cst_21 [1] : vector<8x8xf32> to vector<8xf32>
    %51 = vector.shape_cast %50 : vector<8xf32> to vector<8x1xf32>
    %52 = tpu.reciprocal %51 {approx = true} : vector<8x1xf32> -> vector<8x1xf32>
    %53 = vector.broadcast %52 : vector<8x1xf32> to vector<8x8xf32>
    %54 = arith.mulf %49, %53 : vector<8x8xf32>
    %55 = arith.truncf %54 : vector<8x8xf32> to vector<8x8xbf16>
    %cst_22 = arith.constant dense<0.000000e+00> : vector<8x16xf32>
    %56 = tpu.matmul %55, %40, %cst_22 {dimension_numbers = #tpu.dot_dimension_numbers<[1], [0], [0], [1], [0, 0, 1, 1], [], []>} : vector<8x8xbf16>, vector<8x16xbf16>, vector<8x16xf32> -> vector<8x16xf32>
    %57 = arith.truncf %56 : vector<8x16xf32> to vector<8x16xbf16>
    %c0_23 = arith.constant 0 : index
    %c0_24 = arith.constant 0 : index
    %58 = vector.load %arg5[%c0_23, %c0_24] : memref<32x32xbf16, #tpu.memory_space<vmem>>, vector<16x32xbf16>
    %cst_25 = arith.constant dense<0.000000e+00> : vector<8x32xf32>
    %59 = tpu.matmul %57, %58, %cst_25 {dimension_numbers = #tpu.dot_dimension_numbers<[1], [0], [0], [1], [0, 0, 1, 1], [], []>} : vector<8x16xbf16>, vector<16x32xbf16>, vector<8x32xf32> -> vector<8x32xf32>
    %60 = arith.addf %37, %59 : vector<8x32xf32>
    %61 = vector.extract_strided_slice %32 {offsets = [0, 16], sizes = [8, 16], strides = [1, 1]} : vector<8x32xbf16> to vector<8x16xbf16>
    %62 = vector.extract_strided_slice %34 {offsets = [0, 16], sizes = [8, 16], strides = [1, 1]} : vector<8x32xbf16> to vector<8x16xbf16>
    %63 = vector.extract_strided_slice %36 {offsets = [0, 16], sizes = [8, 16], strides = [1, 1]} : vector<8x32xbf16> to vector<8x16xbf16>
    %cst_26 = arith.constant dense<0.000000e+00> : vector<8x8xf32>
    %64 = tpu.matmul %61, %62, %cst_26 {dimension_numbers = #tpu.dot_dimension_numbers<[1], [1], [0], [0], [0, 0, 1, 0], [], []>} : vector<8x16xbf16>, vector<8x16xbf16>, vector<8x8xf32> -> vector<8x8xf32>
    %c0_27 = arith.constant 0 : index
    %c1 = arith.constant 1 : index
    %c0_28 = arith.constant 0 : index
    %c0_29 = arith.constant 0 : index
    %65 = vector.load %arg6[%c0_27, %c1, %c0_28, %c0_29] : memref<1x2x8x8xf32, #tpu.memory_space<vmem>>, vector<1x1x8x8xf32>
    %66 = vector.shape_cast %65 : vector<1x1x8x8xf32> to vector<8x8xf32>
    %67 = arith.addf %64, %66 : vector<8x8xf32>
    %cst_30 = arith.constant dense<0xFF800000> : vector<8xf32>
    %68 = vector.multi_reduction <maximumf>, %67, %cst_30 [1] : vector<8x8xf32> to vector<8xf32>
    %69 = vector.shape_cast %68 : vector<8xf32> to vector<8x1xf32>
    %70 = vector.broadcast %69 : vector<8x1xf32> to vector<8x8xf32>
    %71 = arith.subf %67, %70 : vector<8x8xf32>
    %72 = math.exp %71 : vector<8x8xf32>
    %cst_31 = arith.constant dense<0.000000e+00> : vector<8xf32>
    %73 = vector.multi_reduction <add>, %72, %cst_31 [1] : vector<8x8xf32> to vector<8xf32>
    %74 = vector.shape_cast %73 : vector<8xf32> to vector<8x1xf32>
    %75 = tpu.reciprocal %74 {approx = true} : vector<8x1xf32> -> vector<8x1xf32>
    %76 = vector.broadcast %75 : vector<8x1xf32> to vector<8x8xf32>
    %77 = arith.mulf %72, %76 : vector<8x8xf32>
    %78 = arith.truncf %77 : vector<8x8xf32> to vector<8x8xbf16>
    %cst_32 = arith.constant dense<0.000000e+00> : vector<8x16xf32>
    %79 = tpu.matmul %78, %63, %cst_32 {dimension_numbers = #tpu.dot_dimension_numbers<[1], [0], [0], [1], [0, 0, 1, 1], [], []>} : vector<8x8xbf16>, vector<8x16xbf16>, vector<8x16xf32> -> vector<8x16xf32>
    %80 = arith.truncf %79 : vector<8x16xf32> to vector<8x16xbf16>
    %c16 = arith.constant 16 : index
    %c0_33 = arith.constant 0 : index
    %81 = vector.load %arg5[%c16, %c0_33] : memref<32x32xbf16, #tpu.memory_space<vmem>>, vector<16x32xbf16>
    %cst_34 = arith.constant dense<0.000000e+00> : vector<8x32xf32>
    %82 = tpu.matmul %80, %81, %cst_34 {dimension_numbers = #tpu.dot_dimension_numbers<[1], [0], [0], [1], [0, 0, 1, 1], [], []>} : vector<8x16xbf16>, vector<16x32xbf16>, vector<8x32xf32> -> vector<8x32xf32>
    %83 = arith.addf %60, %82 : vector<8x32xf32>
    %84 = arith.addf %1, %83 : vector<8x32xf32>
    %c0_35 = arith.constant 0 : index
    %c0_36 = arith.constant 0 : index
    %85 = vector.load %arg7[%c0_35, %c0_36] : memref<1x32xf32, #tpu.memory_space<vmem>>, vector<1x32xf32>
    %c0_37 = arith.constant 0 : index
    %c0_38 = arith.constant 0 : index
    %86 = vector.load %arg8[%c0_37, %c0_38] : memref<1x32xf32, #tpu.memory_space<vmem>>, vector<1x32xf32>
    %cst_39 = arith.constant dense<0.000000e+00> : vector<8xf32>
    %87 = vector.multi_reduction <add>, %84, %cst_39 [1] : vector<8x32xf32> to vector<8xf32>
    %88 = vector.shape_cast %87 : vector<8xf32> to vector<8x1xf32>
    %cst_40 = arith.constant 3.200000e+01 : f32
    %89 = vector.broadcast %cst_40 : f32 to vector<8x1xf32>
    %90 = arith.divf %88, %89 : vector<8x1xf32>
    %91 = vector.broadcast %90 : vector<8x1xf32> to vector<8x32xf32>
    %92 = arith.subf %84, %91 : vector<8x32xf32>
    %93 = arith.mulf %92, %92 : vector<8x32xf32>
    %cst_41 = arith.constant dense<0.000000e+00> : vector<8xf32>
    %94 = vector.multi_reduction <add>, %93, %cst_41 [1] : vector<8x32xf32> to vector<8xf32>
    %95 = vector.shape_cast %94 : vector<8xf32> to vector<8x1xf32>
    %cst_42 = arith.constant 3.200000e+01 : f32
    %96 = vector.broadcast %cst_42 : f32 to vector<8x1xf32>
    %97 = arith.divf %95, %96 : vector<8x1xf32>
    %98 = vector.broadcast %90 : vector<8x1xf32> to vector<8x32xf32>
    %99 = arith.subf %84, %98 : vector<8x32xf32>
    %cst_43 = arith.constant 9.99999974E-6 : f32
    %100 = vector.broadcast %cst_43 : f32 to vector<8x1xf32>
    %101 = arith.addf %97, %100 : vector<8x1xf32>
    %102 = math.rsqrt %101 : vector<8x1xf32>
    %103 = vector.broadcast %102 : vector<8x1xf32> to vector<8x32xf32>
    %104 = arith.mulf %99, %103 : vector<8x32xf32>
    %105 = vector.broadcast %85 : vector<1x32xf32> to vector<8x32xf32>
    %106 = arith.mulf %104, %105 : vector<8x32xf32>
    %107 = vector.broadcast %86 : vector<1x32xf32> to vector<8x32xf32>
    %108 = arith.addf %106, %107 : vector<8x32xf32>
    %109 = arith.truncf %108 : vector<8x32xf32> to vector<8x32xbf16>
    %c0_44 = arith.constant 0 : index
    %c0_45 = arith.constant 0 : index
    %110 = vector.load %arg9[%c0_44, %c0_45] : memref<32x64xbf16, #tpu.memory_space<vmem>>, vector<32x64xbf16>
    %cst_46 = arith.constant dense<0.000000e+00> : vector<8x64xf32>
    %111 = tpu.matmul %109, %110, %cst_46 {dimension_numbers = #tpu.dot_dimension_numbers<[1], [0], [0], [1], [0, 0, 1, 1], [], []>} : vector<8x32xbf16>, vector<32x64xbf16>, vector<8x64xf32> -> vector<8x64xf32>
    %c0_47 = arith.constant 0 : index
    %c0_48 = arith.constant 0 : index
    %112 = vector.load %arg10[%c0_47, %c0_48] : memref<1x64xf32, #tpu.memory_space<vmem>>, vector<1x64xf32>
    %113 = vector.broadcast %112 : vector<1x64xf32> to vector<8x64xf32>
    %114 = arith.addf %111, %113 : vector<8x64xf32>
    %cst_49 = arith.constant 0.000000e+00 : f32
    %115 = vector.broadcast %cst_49 : f32 to vector<8x64xf32>
    %116 = arith.maximumf %114, %115 : vector<8x64xf32>
    %117 = arith.truncf %116 : vector<8x64xf32> to vector<8x64xbf16>
    %c0_50 = arith.constant 0 : index
    %c0_51 = arith.constant 0 : index
    %118 = vector.load %arg11[%c0_50, %c0_51] : memref<64x32xbf16, #tpu.memory_space<vmem>>, vector<64x32xbf16>
    %cst_52 = arith.constant dense<0.000000e+00> : vector<8x32xf32>
    %119 = tpu.matmul %117, %118, %cst_52 {dimension_numbers = #tpu.dot_dimension_numbers<[1], [0], [0], [1], [0, 0, 1, 1], [], []>} : vector<8x64xbf16>, vector<64x32xbf16>, vector<8x32xf32> -> vector<8x32xf32>
    %c0_53 = arith.constant 0 : index
    %c0_54 = arith.constant 0 : index
    %120 = vector.load %arg12[%c0_53, %c0_54] : memref<1x32xf32, #tpu.memory_space<vmem>>, vector<1x32xf32>
    %121 = vector.broadcast %120 : vector<1x32xf32> to vector<8x32xf32>
    %122 = arith.addf %119, %121 : vector<8x32xf32>
    %123 = arith.addf %84, %122 : vector<8x32xf32>
    %c0_55 = arith.constant 0 : index
    %c0_56 = arith.constant 0 : index
    %124 = vector.load %arg13[%c0_55, %c0_56] : memref<1x32xf32, #tpu.memory_space<vmem>>, vector<1x32xf32>
    %c0_57 = arith.constant 0 : index
    %c0_58 = arith.constant 0 : index
    %125 = vector.load %arg14[%c0_57, %c0_58] : memref<1x32xf32, #tpu.memory_space<vmem>>, vector<1x32xf32>
    %cst_59 = arith.constant dense<0.000000e+00> : vector<8xf32>
    %126 = vector.multi_reduction <add>, %123, %cst_59 [1] : vector<8x32xf32> to vector<8xf32>
    %127 = vector.shape_cast %126 : vector<8xf32> to vector<8x1xf32>
    %cst_60 = arith.constant 3.200000e+01 : f32
    %128 = vector.broadcast %cst_60 : f32 to vector<8x1xf32>
    %129 = arith.divf %127, %128 : vector<8x1xf32>
    %130 = vector.broadcast %129 : vector<8x1xf32> to vector<8x32xf32>
    %131 = arith.subf %123, %130 : vector<8x32xf32>
    %132 = arith.mulf %131, %131 : vector<8x32xf32>
    %cst_61 = arith.constant dense<0.000000e+00> : vector<8xf32>
    %133 = vector.multi_reduction <add>, %132, %cst_61 [1] : vector<8x32xf32> to vector<8xf32>
    %134 = vector.shape_cast %133 : vector<8xf32> to vector<8x1xf32>
    %cst_62 = arith.constant 3.200000e+01 : f32
    %135 = vector.broadcast %cst_62 : f32 to vector<8x1xf32>
    %136 = arith.divf %134, %135 : vector<8x1xf32>
    %137 = vector.broadcast %129 : vector<8x1xf32> to vector<8x32xf32>
    %138 = arith.subf %123, %137 : vector<8x32xf32>
    %cst_63 = arith.constant 9.99999974E-6 : f32
    %139 = vector.broadcast %cst_63 : f32 to vector<8x1xf32>
    %140 = arith.addf %136, %139 : vector<8x1xf32>
    %141 = math.rsqrt %140 : vector<8x1xf32>
    %142 = vector.broadcast %141 : vector<8x1xf32> to vector<8x32xf32>
    %143 = arith.mulf %138, %142 : vector<8x32xf32>
    %144 = vector.broadcast %124 : vector<1x32xf32> to vector<8x32xf32>
    %145 = arith.mulf %143, %144 : vector<8x32xf32>
    %146 = vector.broadcast %125 : vector<1x32xf32> to vector<8x32xf32>
    %147 = arith.addf %145, %146 : vector<8x32xf32>
    %c0_64 = arith.constant 0 : index
    %c0_65 = arith.constant 0 : index
    %c0_66 = arith.constant 0 : index
    %148 = vector.load %arg15[%c0_64, %c0_65, %c0_66] : memref<1x8x32xf32, #tpu.memory_space<vmem>>, vector<1x8x32xf32>
    %149 = vector.shape_cast %148 : vector<1x8x32xf32> to vector<8x32xf32>
    %150 = vector.shape_cast %147 : vector<8x32xf32> to vector<1x8x32xf32>
    tpu.vector_store %arg15[%c0_64, %c0_65, %c0_66], %150 {strides = array<i32>} : memref<1x8x32xf32, #tpu.memory_space<vmem>>, vector<1x8x32xf32>,
    return
  }
  func.func @transform_0(%arg0: i32) -> (i32, i32, i32) {
    %c0_i32 = arith.constant 0 : i32
    %c0_i32_0 = arith.constant 0 : i32
    %c0_i32_1 = arith.constant 0 : i32
    return %arg0, %c0_i32, %c0_i32_0 : i32, i32, i32
  }
  func.func @transform_1(%arg0: i32) -> (i32, i32) {
    %c0_i32 = arith.constant 0 : i32
    %c0_i32_0 = arith.constant 0 : i32
    %c0_i32_1 = arith.constant 0 : i32
    return %c0_i32, %c0_i32_0 : i32, i32
  }
  func.func @transform_2(%arg0: i32) -> (i32, i32) {
    %c0_i32 = arith.constant 0 : i32
    %c0_i32_0 = arith.constant 0 : i32
    %c0_i32_1 = arith.constant 0 : i32
    return %c0_i32, %c0_i32_0 : i32, i32
  }
  func.func @transform_3(%arg0: i32) -> (i32, i32) {
    %c0_i32 = arith.constant 0 : i32
    %c0_i32_0 = arith.constant 0 : i32
    %c0_i32_1 = arith.constant 0 : i32
    return %c0_i32, %c0_i32_0 : i32, i32
  }
  func.func @transform_4(%arg0: i32) -> (i32, i32) {
    %c0_i32 = arith.constant 0 : i32
    %c0_i32_0 = arith.constant 0 : i32
    %c0_i32_1 = arith.constant 0 : i32
    return %c0_i32, %c0_i32_0 : i32, i32
  }
  func.func @transform_5(%arg0: i32) -> (i32, i32, i32, i32) {
    %c0_i32 = arith.constant 0 : i32
    %c0_i32_0 = arith.constant 0 : i32
    %c0_i32_1 = arith.constant 0 : i32
    %c0_i32_2 = arith.constant 0 : i32
    return %arg0, %c0_i32, %c0_i32_0, %c0_i32_1 : i32, i32, i32, i32
  }
  func.func @transform_6(%arg0: i32) -> (i32, i32) {
    %c0_i32 = arith.constant 0 : i32
    %c0_i32_0 = arith.constant 0 : i32
    %c0_i32_1 = arith.constant 0 : i32
    return %c0_i32, %c0_i32_0 : i32, i32
  }
  func.func @transform_7(%arg0: i32) -> (i32, i32) {
    %c0_i32 = arith.constant 0 : i32
    %c0_i32_0 = arith.constant 0 : i32
    %c0_i32_1 = arith.constant 0 : i32
    return %c0_i32, %c0_i32_0 : i32, i32
  }
  func.func @transform_8(%arg0: i32) -> (i32, i32) {
    %c0_i32 = arith.constant 0 : i32
    %c0_i32_0 = arith.constant 0 : i32
    %c0_i32_1 = arith.constant 0 : i32
    return %c0_i32, %c0_i32_0 : i32, i32
  }
  func.func @transform_9(%arg0: i32) -> (i32, i32) {
    %c0_i32 = arith.constant 0 : i32
    %c0_i32_0 = arith.constant 0 : i32
    %c0_i32_1 = arith.constant 0 : i32
    return %c0_i32, %c0_i32_0 : i32, i32
  }
  func.func @transform_10(%arg0: i32) -> (i32, i32) {
    %c0_i32 = arith.constant 0 : i32
    %c0_i32_0 = arith.constant 0 : i32
    %c0_i32_1 = arith.constant 0 : i32
    return %c0_i32, %c0_i32_0 : i32, i32
  }
  func.func @transform_11(%arg0: i32) -> (i32, i32) {
    %c0_i32 = arith.constant 0 : i32
    %c0_i32_0 = arith.constant 0 : i32
    %c0_i32_1 = arith.constant 0 : i32
    return %c0_i32, %c0_i32_0 : i32, i32
  }
  func.func @transform_12(%arg0: i32) -> (i32, i32) {
    %c0_i32 = arith.constant 0 : i32
    %c0_i32_0 = arith.constant 0 : i32
    %c0_i32_1 = arith.constant 0 : i32
    return %c0_i32, %c0_i32_0 : i32, i32
  }
  func.func @transform_13(%arg0: i32) -> (i32, i32) {
    %c0_i32 = arith.constant 0 : i32
    %c0_i32_0 = arith.constant 0 : i32
    %c0_i32_1 = arith.constant 0 : i32
    return %c0_i32, %c0_i32_0 : i32, i32
  }
  func.func @transform_14(%arg0: i32) -> (i32, i32, i32) {
    %c0_i32 = arith.constant 0 : i32
    %c0_i32_0 = arith.constant 0 : i32
    %c0_i32_1 = arith.constant 0 : i32
    return %arg0, %c0_i32, %c0_i32_0 : i32, i32, i32
  }
}

module attributes {stable_mosaic.version = 11 : i64} {
  func.func @_layer_kernel(%arg0: i32, %arg1: memref<1x8x32xf32, #tpu.memory_space<vmem>>, %arg2: memref<1x32xf32, #tpu.memory_space<vmem>>, %arg3: memref<1x32xf32, #tpu.memory_space<vmem>>, %arg4: memref<32x96xbf16, #tpu.memory_space<vmem>>, %arg5: memref<32x32xbf16, #tpu.memory_space<vmem>>, %arg6: memref<1x2x8x8xf32, #tpu.memory_space<vmem>>, %arg7: memref<1x32xf32, #tpu.memory_space<vmem>>, %arg8: memref<1x32xf32, #tpu.memory_space<vmem>>, %arg9: memref<32x64xbf16, #tpu.memory_space<vmem>>, %arg10: memref<1x64xf32, #tpu.memory_space<vmem>>, %arg11: memref<64x32xbf16, #tpu.memory_space<vmem>>, %arg12: memref<1x32xf32, #tpu.memory_space<vmem>>, %arg13: memref<1x32xf32, #tpu.memory_space<vmem>>, %arg14: memref<1x32xf32, #tpu.memory_space<vmem>>, %arg15: memref<1x8x32xf32, #tpu.memory_space<vmem>>) attributes {dimension_semantics = [#tpu.dimension_semantics<parallel>], iteration_bounds = array<i64: 2>, scalar_prefetch = 0 : i64, scratch_operands = 0 : i64, tpu.core_type = #tpu.core_type<tc>, window_params = [{transform_indices = @transform_0, window_bounds = array<i64: 1, 8, 32>}, {pipeline_mode = #tpu.pipeline_mode<synchronous>, transform_indices = @transform_1, window_bounds = array<i64: 1, 32>}, {pipeline_mode = #tpu.pipeline_mode<synchronous>, transform_indices = @transform_2, window_bounds = array<i64: 1, 32>}, {pipeline_mode = #tpu.pipeline_mode<synchronous>, transform_indices = @transform_3, window_bounds = array<i64: 32, 96>}, {pipeline_mode = #tpu.pipeline_mode<synchronous>, transform_indices = @transform_4, window_bounds = array<i64: 32, 32>}, {transform_indices = @transform_5, window_bounds = array<i64: 1, 2, 8, 8>}, {pipeline_mode = #tpu.pipeline_mode<synchronous>, transform_indices = @transform_6, window_bounds = array<i64: 1, 32>}, {pipeline_mode = #tpu.pipeline_mode<synchronous>, transform_indices = @transform_7, window_bounds = array<i64: 1, 32>}, {pipeline_mode = #tpu.pipeline_mode<synchronous>, transform_indices = @transform_8, window_bounds = array<i64: 32, 64>}, {pipeline_mode = #tpu.pipeline_mode<synchronous>, transform_indices = @transform_9, window_bounds = array<i64: 1, 64>}, {pipeline_mode = #tpu.pipeline_mode<synchronous>, transform_indices = @transform_10, window_bounds = array<i64: 64, 32>}, {pipeline_mode = #tpu.pipeline_mode<synchronous>, transform_indices = @transform_11, window_bounds = array<i64: 1, 32>}, {pipeline_mode = #tpu.pipeline_mode<synchronous>, transform_indices = @transform_12, window_bounds = array<i64: 1, 32>}, {pipeline_mode = #tpu.pipeline_mode<synchronous>, transform_indices = @transform_13, window_bounds = array<i64: 1, 32>}, {transform_indices = @transform_14, window_bounds = array<i64: 1, 8, 32>}]} {
    %c0 = arith.constant 0 : index
    %c0_0 = arith.constant 0 : index
    %c0_1 = arith.constant 0 : index
    %0 = vector.load %arg1[%c0, %c0_0, %c0_1] : memref<1x8x32xf32, #tpu.memory_space<vmem>>, vector<1x8x32xf32>
    %1 = vector.shape_cast %0 : vector<1x8x32xf32> to vector<8x32xf32>
    %c0_2 = arith.constant 0 : index
    %c0_3 = arith.constant 0 : index
    %2 = vector.load %arg2[%c0_2, %c0_3] : memref<1x32xf32, #tpu.memory_space<vmem>>, vector<1x32xf32>
    %c0_4 = arith.constant 0 : index
    %c0_5 = arith.constant 0 : index
    %3 = vector.load %arg3[%c0_4, %c0_5] : memref<1x32xf32, #tpu.memory_space<vmem>>, vector<1x32xf32>
    %cst = arith.constant dense<0.000000e+00> : vector<8xf32>
    %4 = vector.multi_reduction <add>, %1, %cst [1] : vector<8x32xf32> to vector<8xf32>
    %5 = vector.shape_cast %4 : vector<8xf32> to vector<8x1xf32>
    %cst_6 = arith.constant 3.200000e+01 : f32
    %6 = vector.broadcast %cst_6 : f32 to vector<8x1xf32>
    %7 = arith.divf %5, %6 : vector<8x1xf32>
    %8 = vector.broadcast %7 : vector<8x1xf32> to vector<8x32xf32>
    %9 = arith.subf %1, %8 : vector<8x32xf32>
    %10 = arith.mulf %9, %9 : vector<8x32xf32>
    %cst_7 = arith.constant dense<0.000000e+00> : vector<8xf32>
    %11 = vector.multi_reduction <add>, %10, %cst_7 [1] : vector<8x32xf32> to vector<8xf32>
    %12 = vector.shape_cast %11 : vector<8xf32> to vector<8x1xf32>
    %cst_8 = arith.constant 3.200000e+01 : f32
    %13 = vector.broadcast %cst_8 : f32 to vector<8x1xf32>
    %14 = arith.divf %12, %13 : vector<8x1xf32>
    %15 = vector.broadcast %7 : vector<8x1xf32> to vector<8x32xf32>
    %16 = arith.subf %1, %15 : vector<8x32xf32>
    %cst_9 = arith.constant 9.99999974E-6 : f32
    %17 = vector.broadcast %cst_9 : f32 to vector<8x1xf32>
    %18 = arith.addf %14, %17 : vector<8x1xf32>
    %19 = math.rsqrt %18 : vector<8x1xf32>
    %20 = vector.broadcast %19 : vector<8x1xf32> to vector<8x32xf32>
    %21 = arith.mulf %16, %20 : vector<8x32xf32>
    %22 = vector.broadcast %2 : vector<1x32xf32> to vector<8x32xf32>
    %23 = arith.mulf %21, %22 : vector<8x32xf32>
    %24 = vector.broadcast %3 : vector<1x32xf32> to vector<8x32xf32>
    %25 = arith.addf %23, %24 : vector<8x32xf32>
    %26 = arith.truncf %25 : vector<8x32xf32> to vector<8x32xbf16>
    %c0_10 = arith.constant 0 : index
    %c0_11 = arith.constant 0 : index
    %27 = vector.load %arg4[%c0_10, %c0_11] : memref<32x96xbf16, #tpu.memory_space<vmem>>, vector<32x96xbf16>
    %cst_12 = arith.constant dense<0.000000e+00> : vector<8x96xf32>
    %28 = tpu.matmul %26, %27, %cst_12 {dimension_numbers = #tpu.dot_dimension_numbers<[1], [0], [0], [1], [0, 0, 1, 1], [], []>} : vector<8x32xbf16>, vector<32x96xbf16>, vector<8x96xf32> -> vector<8x96xf32>
    %29 = vector.extract_strided_slice %28 {offsets = [0, 0], sizes = [8, 32], strides = [1, 1]} : vector<8x96xf32> to vector<8x32xf32>
    %cst_13 = arith.constant 0.176776692 : f32
    %30 = vector.broadcast %cst_13 : f32 to vector<8x32xf32>
    %31 = arith.mulf %29, %30 : vector<8x32xf32>
    %32 = arith.truncf %31 : vector<8x32xf32> to vector<8x32xbf16>
    %33 = vector.extract_strided_slice %28 {offsets = [0, 32], sizes = [8, 32], strides = [1, 1]} : vector<8x96xf32> to vector<8x32xf32>
    %34 = arith.truncf %33 : vector<8x32xf32> to vector<8x32xbf16>
    %35 = vector.extract_strided_slice %28 {offsets = [0, 64], sizes = [8, 32], strides = [1, 1]} : vector<8x96xf32> to vector<8x32xf32>
    %36 = arith.truncf %35 : vector<8x32xf32> to vector<8x32xbf16>
    %cst_14 = arith.constant 0.000000e+00 : f32
    %37 = vector.broadcast %cst_14 : f32 to vector<8x32xf32>
    %38 = vector.extract_strided_slice %32 {offsets = [0, 0], sizes = [8, 16], strides = [1, 1]} : vector<8x32xbf16> to vector<8x16xbf16>
    %39 = vector.extract_strided_slice %34 {offsets = [0, 0], sizes = [8, 16], strides = [1, 1]} : vector<8x32xbf16> to vector<8x16xbf16>
    %40 = vector.extract_strided_slice %36 {offsets = [0, 0], sizes = [8, 16], strides = [1, 1]} : vector<8x32xbf16> to vector<8x16xbf16>
    %cst_15 = arith.constant dense<0.000000e+00> : vector<8x8xf32>
    %41 = tpu.matmul %38, %39, %cst_15 {dimension_numbers = #tpu.dot_dimension_numbers<[1], [1], [0], [0], [0, 0, 1, 0], [], []>} : vector<8x16xbf16>, vector<8x16xbf16>, vector<8x8xf32> -> vector<8x8xf32>
    %c0_16 = arith.constant 0 : index
    %c0_17 = arith.constant 0 : index
    %c0_18 = arith.constant 0 : index
    %c0_19 = arith.constant 0 : index
    %42 = vector.load %arg6[%c0_16, %c0_17, %c0_18, %c0_19] : memref<1x2x8x8xf32, #tpu.memory_space<vmem>>, vector<1x1x8x8xf32>
    %43 = vector.shape_cast %42 : vector<1x1x8x8xf32> to vector<8x8xf32>
    %44 = arith.addf %41, %43 : vector<8x8xf32>
    %cst_20 = arith.constant dense<0xFF800000> : vector<8xf32>
    %45 = vector.multi_reduction <maximumf>, %44, %cst_20 [1] : vector<8x8xf32> to vector<8xf32>
    %46 = vector.shape_cast %45 : vector<8xf32> to vector<8x1xf32>
    %47 = vector.broadcast %46 : vector<8x1xf32> to vector<8x8xf32>
    %48 = arith.subf %44, %47 : vector<8x8xf32>
    %49 = math.exp %48 : vector<8x8xf32>
    %cst_21 = arith.constant dense<0.000000e+00> : vector<8xf32>
    %50 = vector.multi_reduction <add>, %49, %cst_21 [1] : vector<8x8xf32> to vector<8xf32>
    %51 = vector.shape_cast %50 : vector<8xf32> to vector<8x1xf32>
    %52 = tpu.reciprocal %51 {approx = true} : vector<8x1xf32> -> vector<8x1xf32>
    %53 = vector.broadcast %52 : vector<8x1xf32> to vector<8x8xf32>
    %54 = arith.mulf %49, %53 : vector<8x8xf32>
    %55 = arith.truncf %54 : vector<8x8xf32> to vector<8x8xbf16>
    %cst_22 = arith.constant dense<0.000000e+00> : vector<8x16xf32>
    %56 = tpu.matmul %55, %40, %cst_22 {dimension_numbers = #tpu.dot_dimension_numbers<[1], [0], [0], [1], [0, 0, 1, 1], [], []>} : vector<8x8xbf16>, vector<8x16xbf16>, vector<8x16xf32> -> vector<8x16xf32>
    %57 = arith.truncf %56 : vector<8x16xf32> to vector<8x16xbf16>
    %c0_23 = arith.constant 0 : index
    %c0_24 = arith.constant 0 : index
    %58 = vector.load %arg5[%c0_23, %c0_24] : memref<32x32xbf16, #tpu.memory_space<vmem>>, vector<16x32xbf16>
    %cst_25 = arith.constant dense<0.000000e+00> : vector<8x32xf32>
    %59 = tpu.matmul %57, %58, %cst_25 {dimension_numbers = #tpu.dot_dimension_numbers<[1], [0], [0], [1], [0, 0, 1, 1], [], []>} : vector<8x16xbf16>, vector<16x32xbf16>, vector<8x32xf32> -> vector<8x32xf32>
    %60 = arith.addf %37, %59 : vector<8x32xf32>
    %61 = vector.extract_strided_slice %32 {offsets = [0, 16], sizes = [8, 16], strides = [1, 1]} : vector<8x32xbf16> to vector<8x16xbf16>
    %62 = vector.extract_strided_slice %34 {offsets = [0, 16], sizes = [8, 16], strides = [1, 1]} : vector<8x32xbf16> to vector<8x16xbf16>
    %63 = vector.extract_strided_slice %36 {offsets = [0, 16], sizes = [8, 16], strides = [1, 1]} : vector<8x32xbf16> to vector<8x16xbf16>
    %cst_26 = arith.constant dense<0.000000e+00> : vector<8x8xf32>
    %64 = tpu.matmul %61, %62, %cst_26 {dimension_numbers = #tpu.dot_dimension_numbers<[1], [1], [0], [0], [0, 0, 1, 0], [], []>} : vector<8x16xbf16>, vector<8x16xbf16>, vector<8x8xf32> -> vector<8x8xf32>
    %c0_27 = arith.constant 0 : index
    %c1 = arith.constant 1 : index
    %c0_28 = arith.constant 0 : index
    %c0_29 = arith.constant 0 : index
    %65 = vector.load %arg6[%c0_27, %c1, %c0_28, %c0_29] : memref<1x2x8x8xf32, #tpu.memory_space<vmem>>, vector<1x1x8x8xf32>
    %66 = vector.shape_cast %65 : vector<1x1x8x8xf32> to vector<8x8xf32>
    %67 = arith.addf %64, %66 : vector<8x8xf32>
    %cst_30 = arith.constant dense<0xFF800000> : vector<8xf32>
    %68 = vector.multi_reduction <maximumf>, %67, %cst_30 [1] : vector<8x8xf32> to vector<8xf32>
    %69 = vector.shape_cast %68 : vector<8xf32> to vector<8x1xf32>
    %70 = vector.broadcast %69 : vector<8x1xf32> to vector<8x8xf32>
    %71 = arith.subf %67, %70 : vector<8x8xf32>
    %72 = math.exp %71 : vector<8x8xf32>
    %cst_31 = arith.constant dense<0.000000e+00> : vector<8xf32>
    %73 = vector.multi_reduction <add>, %72, %cst_31 [1] : vector<8x8xf32> to vector<8xf32>
    %74 = vector.shape_cast %73 : vector<8xf32> to vector<8x1xf32>
    %75 = tpu.reciprocal %74 {approx = true} : vector<8x1xf32> -> vector<8x1xf32>
    %76 = vector.broadcast %75 : vector<8x1xf32> to vector<8x8xf32>
    %77 = arith.mulf %72, %76 : vector<8x8xf32>
    %78 = arith.truncf %77 : vector<8x8xf32> to vector<8x8xbf16>
    %cst_32 = arith.constant dense<0.000000e+00> : vector<8x16xf32>
    %79 = tpu.matmul %78, %63, %cst_32 {dimension_numbers = #tpu.dot_dimension_numbers<[1], [0], [0], [1], [0, 0, 1, 1], [], []>} : vector<8x8xbf16>, vector<8x16xbf16>, vector<8x16xf32> -> vector<8x16xf32>
    %80 = arith.truncf %79 : vector<8x16xf32> to vector<8x16xbf16>
    %c16 = arith.constant 16 : index
    %c0_33 = arith.constant 0 : index
    %81 = vector.load %arg5[%c16, %c0_33] : memref<32x32xbf16, #tpu.memory_space<vmem>>, vector<16x32xbf16>
    %cst_34 = arith.constant dense<0.000000e+00> : vector<8x32xf32>
    %82 = tpu.matmul %80, %81, %cst_34 {dimension_numbers = #tpu.dot_dimension_numbers<[1], [0], [0], [1], [0, 0, 1, 1], [], []>} : vector<8x16xbf16>, vector<16x32xbf16>, vector<8x32xf32> -> vector<8x32xf32>
    %83 = arith.addf %60, %82 : vector<8x32xf32>
    %84 = arith.addf %1, %83 : vector<8x32xf32>
    %c0_35 = arith.constant 0 : index
    %c0_36 = arith.constant 0 : index
    %85 = vector.load %arg7[%c0_35, %c0_36] : memref<1x32xf32, #tpu.memory_space<vmem>>, vector<1x32xf32>
    %c0_37 = arith.constant 0 : index
    %c0_38 = arith.constant 0 : index
    %86 = vector.load %arg8[%c0_37, %c0_38] : memref<1x32xf32, #tpu.memory_space<vmem>>, vector<1x32xf32>
    %cst_39 = arith.constant dense<0.000000e+00> : vector<8xf32>
    %87 = vector.multi_reduction <add>, %84, %cst_39 [1] : vector<8x32xf32> to vector<8xf32>
    %88 = vector.shape_cast %87 : vector<8xf32> to vector<8x1xf32>
    %cst_40 = arith.constant 3.200000e+01 : f32
    %89 = vector.broadcast %cst_40 : f32 to vector<8x1xf32>
    %90 = arith.divf %88, %89 : vector<8x1xf32>
    %91 = vector.broadcast %90 : vector<8x1xf32> to vector<8x32xf32>
    %92 = arith.subf %84, %91 : vector<8x32xf32>
    %93 = arith.mulf %92, %92 : vector<8x32xf32>
    %cst_41 = arith.constant dense<0.000000e+00> : vector<8xf32>
    %94 = vector.multi_reduction <add>, %93, %cst_41 [1] : vector<8x32xf32> to vector<8xf32>
    %95 = vector.shape_cast %94 : vector<8xf32> to vector<8x1xf32>
    %cst_42 = arith.constant 3.200000e+01 : f32
    %96 = vector.broadcast %cst_42 : f32 to vector<8x1xf32>
    %97 = arith.divf %95, %96 : vector<8x1xf32>
    %98 = vector.broadcast %90 : vector<8x1xf32> to vector<8x32xf32>
    %99 = arith.subf %84, %98 : vector<8x32xf32>
    %cst_43 = arith.constant 9.99999974E-6 : f32
    %100 = vector.broadcast %cst_43 : f32 to vector<8x1xf32>
    %101 = arith.addf %97, %100 : vector<8x1xf32>
    %102 = math.rsqrt %101 : vector<8x1xf32>
    %103 = vector.broadcast %102 : vector<8x1xf32> to vector<8x32xf32>
    %104 = arith.mulf %99, %103 : vector<8x32xf32>
    %105 = vector.broadcast %85 : vector<1x32xf32> to vector<8x32xf32>
    %106 = arith.mulf %104, %105 : vector<8x32xf32>
    %107 = vector.broadcast %86 : vector<1x32xf32> to vector<8x32xf32>
    %108 = arith.addf %106, %107 : vector<8x32xf32>
    %109 = arith.truncf %108 : vector<8x32xf32> to vector<8x32xbf16>
    %c0_44 = arith.constant 0 : index
    %c0_45 = arith.constant 0 : index
    %110 = vector.load %arg9[%c0_44, %c0_45] : memref<32x64xbf16, #tpu.memory_space<vmem>>, vector<32x64xbf16>
    %cst_46 = arith.constant dense<0.000000e+00> : vector<8x64xf32>
    %111 = tpu.matmul %109, %110, %cst_46 {dimension_numbers = #tpu.dot_dimension_numbers<[1], [0], [0], [1], [0, 0, 1, 1], [], []>} : vector<8x32xbf16>, vector<32x64xbf16>, vector<8x64xf32> -> vector<8x64xf32>
    %c0_47 = arith.constant 0 : index
    %c0_48 = arith.constant 0 : index
    %112 = vector.load %arg10[%c0_47, %c0_48] : memref<1x64xf32, #tpu.memory_space<vmem>>, vector<1x64xf32>
    %113 = vector.broadcast %112 : vector<1x64xf32> to vector<8x64xf32>
    %114 = arith.addf %111, %113 : vector<8x64xf32>
    %cst_49 = arith.constant 0.000000e+00 : f32
    %115 = vector.broadcast %cst_49 : f32 to vector<8x64xf32>
    %116 = arith.maximumf %114, %115 : vector<8x64xf32>
    %117 = arith.truncf %116 : vector<8x64xf32> to vector<8x64xbf16>
    %c0_50 = arith.constant 0 : index
    %c0_51 = arith.constant 0 : index
    %118 = vector.load %arg11[%c0_50, %c0_51] : memref<64x32xbf16, #tpu.memory_space<vmem>>, vector<64x32xbf16>
    %cst_52 = arith.constant dense<0.000000e+00> : vector<8x32xf32>
    %119 = tpu.matmul %117, %118, %cst_52 {dimension_numbers = #tpu.dot_dimension_numbers<[1], [0], [0], [1], [0, 0, 1, 1], [], []>} : vector<8x64xbf16>, vector<64x32xbf16>, vector<8x32xf32> -> vector<8x32xf32>
    %c0_53 = arith.constant 0 : index
    %c0_54 = arith.constant 0 : index
    %120 = vector.load %arg12[%c0_53, %c0_54] : memref<1x32xf32, #tpu.memory_space<vmem>>, vector<1x32xf32>
    %121 = vector.broadcast %120 : vector<1x32xf32> to vector<8x32xf32>
    %122 = arith.addf %119, %121 : vector<8x32xf32>
    %123 = arith.addf %84, %122 : vector<8x32xf32>
    %c0_55 = arith.constant 0 : index
    %c0_56 = arith.constant 0 : index
    %c0_57 = arith.constant 0 : index
    %124 = vector.load %arg15[%c0_55, %c0_56, %c0_57] : memref<1x8x32xf32, #tpu.memory_space<vmem>>, vector<1x8x32xf32>
    %125 = vector.shape_cast %124 : vector<1x8x32xf32> to vector<8x32xf32>
    %126 = vector.shape_cast %123 : vector<8x32xf32> to vector<1x8x32xf32>
    tpu.vector_store %arg15[%c0_55, %c0_56, %c0_57], %126 {strides = array<i32>} : memref<1x8x32xf32, #tpu.memory_space<vmem>>, vector<1x8x32xf32>,
    return
  }
  func.func @transform_0(%arg0: i32) -> (i32, i32, i32) {
    %c0_i32 = arith.constant 0 : i32
    %c0_i32_0 = arith.constant 0 : i32
    %c0_i32_1 = arith.constant 0 : i32
    return %arg0, %c0_i32, %c0_i32_0 : i32, i32, i32
  }
  func.func @transform_1(%arg0: i32) -> (i32, i32) {
    %c0_i32 = arith.constant 0 : i32
    %c0_i32_0 = arith.constant 0 : i32
    %c0_i32_1 = arith.constant 0 : i32
    return %c0_i32, %c0_i32_0 : i32, i32
  }
  func.func @transform_2(%arg0: i32) -> (i32, i32) {
    %c0_i32 = arith.constant 0 : i32
    %c0_i32_0 = arith.constant 0 : i32
    %c0_i32_1 = arith.constant 0 : i32
    return %c0_i32, %c0_i32_0 : i32, i32
  }
  func.func @transform_3(%arg0: i32) -> (i32, i32) {
    %c0_i32 = arith.constant 0 : i32
    %c0_i32_0 = arith.constant 0 : i32
    %c0_i32_1 = arith.constant 0 : i32
    return %c0_i32, %c0_i32_0 : i32, i32
  }
  func.func @transform_4(%arg0: i32) -> (i32, i32) {
    %c0_i32 = arith.constant 0 : i32
    %c0_i32_0 = arith.constant 0 : i32
    %c0_i32_1 = arith.constant 0 : i32
    return %c0_i32, %c0_i32_0 : i32, i32
  }
  func.func @transform_5(%arg0: i32) -> (i32, i32, i32, i32) {
    %c0_i32 = arith.constant 0 : i32
    %c0_i32_0 = arith.constant 0 : i32
    %c0_i32_1 = arith.constant 0 : i32
    %c0_i32_2 = arith.constant 0 : i32
    return %arg0, %c0_i32, %c0_i32_0, %c0_i32_1 : i32, i32, i32, i32
  }
  func.func @transform_6(%arg0: i32) -> (i32, i32) {
    %c0_i32 = arith.constant 0 : i32
    %c0_i32_0 = arith.constant 0 : i32
    %c0_i32_1 = arith.constant 0 : i32
    return %c0_i32, %c0_i32_0 : i32, i32
  }
  func.func @transform_7(%arg0: i32) -> (i32, i32) {
    %c0_i32 = arith.constant 0 : i32
    %c0_i32_0 = arith.constant 0 : i32
    %c0_i32_1 = arith.constant 0 : i32
    return %c0_i32, %c0_i32_0 : i32, i32
  }
  func.func @transform_8(%arg0: i32) -> (i32, i32) {
    %c0_i32 = arith.constant 0 : i32
    %c0_i32_0 = arith.constant 0 : i32
    %c0_i32_1 = arith.constant 0 : i32
    return %c0_i32, %c0_i32_0 : i32, i32
  }
  func.func @transform_9(%arg0: i32) -> (i32, i32) {
    %c0_i32 = arith.constant 0 : i32
    %c0_i32_0 = arith.constant 0 : i32
    %c0_i32_1 = arith.constant 0 : i32
    return %c0_i32, %c0_i32_0 : i32, i32
  }
  func.func @transform_10(%arg0: i32) -> (i32, i32) {
    %c0_i32 = arith.constant 0 : i32
    %c0_i32_0 = arith.constant 0 : i32
    %c0_i32_1 = arith.constant 0 : i32
    return %c0_i32, %c0_i32_0 : i32, i32
  }
  func.func @transform_11(%arg0: i32) -> (i32, i32) {
    %c0_i32 = arith.constant 0 : i32
    %c0_i32_0 = arith.constant 0 : i32
    %c0_i32_1 = arith.constant 0 : i32
    return %c0_i32, %c0_i32_0 : i32, i32
  }
  func.func @transform_12(%arg0: i32) -> (i32, i32) {
    %c0_i32 = arith.constant 0 : i32
    %c0_i32_0 = arith.constant 0 : i32
    %c0_i32_1 = arith.constant 0 : i32
    return %c0_i32, %c0_i32_0 : i32, i32
  }
  func.func @transform_13(%arg0: i32) -> (i32, i32) {
    %c0_i32 = arith.constant 0 : i32
    %c0_i32_0 = arith.constant 0 : i32
    %c0_i32_1 = arith.constant 0 : i32
    return %c0_i32, %c0_i32_0 : i32, i32
  }
  func.func @transform_14(%arg0: i32) -> (i32, i32, i32) {
    %c0_i32 = arith.constant 0 : i32
    %c0_i32_0 = arith.constant 0 : i32
    %c0_i32_1 = arith.constant 0 : i32
    return %arg0, %c0_i32, %c0_i32_0 : i32, i32, i32
  }
}

</mosaic_0001>

<llo_original>
// kernel: encoder_forward.2
$region0: #{encoder_forward.2}
  #allocation0 [shape = 'u32[]', space=smem, size = 0x4, offset = 0x4, fixed_abs, tag = 'smem constant byte address 0x4 - core index']
  #allocation1 [shape = 'u32[144,128]{1,0:T(1,128)}', space=vmem, size = 0x12000, scoped, tag = 'internal scratch']
  %s0 = inlined_call_operand.vmem [shape: f32[2,8,32], index: 0, kind: input, shape index: {}]
  %s1 = inlined_call_operand.hbm [shape: f32[1,32], index: 1, kind: input, shape index: {}]
  %s2 = inlined_call_operand.hbm [shape: f32[1,32], index: 2, kind: input, shape index: {}]
  %s3 = inlined_call_operand.vmem [shape: bf16[32,96], index: 3, kind: input, shape index: {}]
  %s4 = inlined_call_operand.hbm [shape: bf16[32,32], index: 4, kind: input, shape index: {}]
  %s5 = inlined_call_operand.vmem [shape: f32[2,2,8,8], index: 5, kind: input, shape index: {}]
  %s6 = inlined_call_operand.vmem [shape: f32[1,32], index: 6, kind: input, shape index: {}]
  %s7 = inlined_call_operand.hbm [shape: f32[1,32], index: 7, kind: input, shape index: {}]
  %s8 = inlined_call_operand.hbm [shape: bf16[32,64], index: 8, kind: input, shape index: {}]
  %s9 = inlined_call_operand.hbm [shape: f32[1,64], index: 9, kind: input, shape index: {}]
  %s10 = inlined_call_operand.vmem [shape: bf16[64,32], index: 10, kind: input, shape index: {}]
  %s11 = inlined_call_operand.hbm [shape: f32[1,32], index: 11, kind: input, shape index: {}]
  %s12 = inlined_call_operand.vmem [shape: f32[1,32], index: 12, kind: input, shape index: {}]
  %s13 = inlined_call_operand.vmem [shape: f32[1,32], index: 13, kind: input, shape index: {}]
  %s14 = inlined_call_operand.vmem [shape: f32[2,8,32], index: 14, kind: output, shape index: {}]
  %s15 = sld [smem:[#allocation0]]
  $region117: #{encoder_forward.2} parent=0
    _
  %s17 = ssub.s32 1, %s15
  %s18 = scalar_select 0, %s17, %s15
  $region1: #{encoder_forward.2} parent=0
    #allocation2 [shape = 'u8[512]{0}', space=vmem, size = 0x400, scoped, tag = 'input window, operand 1, single buffered']
    #allocation3 [shape = 's32[2]{0}', space=sflag, size = 0x8, scoped, tag = 'scoped memory for encoder_forward.2']
    #allocation4 [shape = 'u8[512]{0}', space=vmem, size = 0x400, scoped, tag = 'input window, operand 2, single buffered']
    #allocation5 [shape = 's32[1]{0}', space=sflag, size = 0x4, scoped, tag = 'scoped memory for encoder_forward.2']
    #allocation6 [shape = 'u8[8192]{0}', space=vmem, size = 0x2000, scoped, tag = 'input window, operand 4, single buffered']
    #allocation7 [shape = 'u8[512]{0}', space=vmem, size = 0x400, scoped, tag = 'input window, operand 7, single buffered']
    #allocation8 [shape = 's32[1]{0}', space=sflag, size = 0x4, scoped, tag = 'scoped memory for encoder_forward.2']
    #allocation9 [shape = 'u8[8192]{0}', space=vmem, size = 0x2000, scoped, tag = 'input window, operand 8, single buffered']
    #allocation10 [shape = 'u8[512]{0}', space=vmem, size = 0x400, scoped, tag = 'input window, operand 9, single buffered']
    #allocation11 [shape = 's32[1]{0}', space=sflag, size = 0x4, scoped, tag = 'scoped memory for encoder_forward.2']
    #allocation12 [shape = 'u8[512]{0}', space=vmem, size = 0x400, scoped, tag = 'input window, operand 11, single buffered']
    %19 = vsyncpa [#allocation3], 0
    %20 = vsyncpa [#allocation5], 0
    %21 = vsyncpa [#allocation8], 0
    %22 = vsyncpa [#allocation11], 0
    loop: start=0, step=1, limit=4
    $region2: #{encoder_forward.2} parent=1 // loop_pre_header
      _
    $region3: #{encoder_forward.2} parent=1 // loop_header
      %s24 = sphi 0, %s28
      %p25 = scmp.ge.s32.totalorder %s24, 4
      %s34 = sphi 0, %s36
      %s37 = sphi 0, %s34
      %s38 = sphi 0, %s37
      %s54 = sphi 0, %s38
      %s58 = sphi 0, %s58
      %s60 = sphi 0, %s58
      %s61 = sphi 0, %s60
      %s75 = sphi 0, %s61
      %s79 = sphi 0, %s79
      %s81 = sphi 0, %s79
      %s82 = sphi 0, %s81
      %s96 = sphi 0, %s82
      %s100 = sphi 0, %s100
      %s102 = sphi 0, %s100
      %s103 = sphi 0, %s102
      %s117 = sphi 0, %s103
      %s121 = sphi 0, %s121
      %s123 = sphi 0, %s121
      %s124 = sphi 0, %s123
      %s138 = sphi 0, %s124
      %s144 = sphi 0, %s146
      %s147 = sphi 0, %s144
      %s148 = sphi 0, %s147
      %s164 = sphi 0, %s148
      %s168 = sphi 0, %s168
      %s170 = sphi 0, %s168
      %s171 = sphi 0, %s170
      %s185 = sphi 0, %s171
      %s189 = sphi 0, %s189
      %s191 = sphi 0, %s189
      %s192 = sphi 0, %s191
      %s206 = sphi 0, %s192
      %s210 = sphi 0, %s210
      %s212 = sphi 0, %s210
      %s213 = sphi 0, %s212
      %s227 = sphi 0, %s213
      %s231 = sphi 0, %s231
      %s233 = sphi 0, %s231
      %s234 = sphi 0, %s233
      %s248 = sphi 0, %s234
      %s252 = sphi 0, %s252
      %s254 = sphi 0, %s252
      %s255 = sphi 0, %s254
      %s269 = sphi 0, %s255
      %s273 = sphi 0, %s273
      %s275 = sphi 0, %s273
      %s276 = sphi 0, %s275
      %s290 = sphi 0, %s276
      %s294 = sphi 0, %s294
      %s296 = sphi 0, %s294
      %s297 = sphi 0, %s296
      %s311 = sphi 0, %s297
      %s315 = sphi 0, %s315
      %s317 = sphi 0, %s315
      %s318 = sphi 0, %s317
      %s332 = sphi 0, %s318
      %s338 = sphi 0, %s340
      %s341 = sphi 0, %s338
      %s342 = sphi 0, %s341
      %s358 = sphi 0, %s342
    $region4: #{encoder_forward.2} parent=1 // loop_header_branch
      %27 = sbr.rel (%p25) target = $region8
    $region5: #{encoder_forward.2} parent=1 // loop_body
      %s29 = ssub.s32 %s24, 1
      %s30 = ssub.s32 %s24, 2
      %s31 = sadd.s32 %s24, 1
      %s32 = ssub.s32 %s24, %s31
      %p33 = scmp.eq.s32.totalorder %s32, 0
      %s35 = sadd.s32 %s34, 1
      %s36 = scalar_select %p33, %s34, %s35
      %p39 = pneg %p33
      %p40 = scmp.eq.s32.totalorder %s24, 1
      %p41 = por %p39, %p40
      %p42 = scmp.ne.s32.totalorder %s34, %s37
      %p43 = scmp.eq.s32.totalorder %s24, 0
      %p44 = por %p42, %p43
      %p45 = scmp.ne.s32.totalorder %s34, %s37
      %p46 = scmp.eq.s32.totalorder %s29, 1
      %p47 = por %p45, %p46
      %p48 = scmp.ne.s32.totalorder %s37, %s38
      %p49 = scmp.eq.s32.totalorder %s29, 0
      %p50 = por %p48, %p49
      %p51 = scmp.ne.s32.totalorder %s37, %s38
      %p52 = scmp.eq.s32.totalorder %s30, 1
      %p53 = por %p51, %p52
      %p55 = scmp.ne.s32.totalorder %s38, %s54
      %p56 = scmp.eq.s32.totalorder %s30, 0
      %p57 = por %p55, %p56
      %s59 = sadd.s32 %s58, 1
      %p62 = scmp.eq.s32.totalorder %s24, 1
      %p63 = scmp.ne.s32.totalorder %s58, %s60
      %p64 = scmp.eq.s32.totalorder %s24, 0
      %p65 = por %p63, %p64
      %p66 = scmp.ne.s32.totalorder %s58, %s60
      %p67 = scmp.eq.s32.totalorder %s29, 1
      %p68 = por %p66, %p67
      %p69 = scmp.ne.s32.totalorder %s60, %s61
      %p70 = scmp.eq.s32.totalorder %s29, 0
      %p71 = por %p69, %p70
      %p72 = scmp.ne.s32.totalorder %s60, %s61
      %p73 = scmp.eq.s32.totalorder %s30, 1
      %p74 = por %p72, %p73
      %p76 = scmp.ne.s32.totalorder %s61, %s75
      %p77 = scmp.eq.s32.totalorder %s30, 0
      %p78 = por %p76, %p77
      %s80 = sadd.s32 %s79, 1
      %p83 = scmp.eq.s32.totalorder %s24, 1
      %p84 = scmp.ne.s32.totalorder %s79, %s81
      %p85 = scmp.eq.s32.totalorder %s24, 0
      %p86 = por %p84, %p85
      %p87 = scmp.ne.s32.totalorder %s79, %s81
      %p88 = scmp.eq.s32.totalorder %s29, 1
      %p89 = por %p87, %p88
      %p90 = scmp.ne.s32.totalorder %s81, %s82
      %p91 = scmp.eq.s32.totalorder %s29, 0
      %p92 = por %p90, %p91
      %p93 = scmp.ne.s32.totalorder %s81, %s82
      %p94 = scmp.eq.s32.totalorder %s30, 1
      %p95 = por %p93, %p94
      %p97 = scmp.ne.s32.totalorder %s82, %s96
      %p98 = scmp.eq.s32.totalorder %s30, 0
      %p99 = por %p97, %p98
      %s101 = sadd.s32 %s100, 1
      %p104 = scmp.eq.s32.totalorder %s24, 1
      %p105 = scmp.ne.s32.totalorder %s100, %s102
      %p106 = scmp.eq.s32.totalorder %s24, 0
      %p107 = por %p105, %p106
      %p108 = scmp.ne.s32.totalorder %s100, %s102
      %p109 = scmp.eq.s32.totalorder %s29, 1
      %p110 = por %p108, %p109
      %p111 = scmp.ne.s32.totalorder %s102, %s103
      %p112 = scmp.eq.s32.totalorder %s29, 0
      %p113 = por %p111, %p112
      %p114 = scmp.ne.s32.totalorder %s102, %s103
      %p115 = scmp.eq.s32.totalorder %s30, 1
      %p116 = por %p114, %p115
      %p118 = scmp.ne.s32.totalorder %s103, %s117
      %p119 = scmp.eq.s32.totalorder %s30, 0
      %p120 = por %p118, %p119
      %s122 = sadd.s32 %s121, 1
      %p125 = scmp.eq.s32.totalorder %s24, 1
      %p126 = scmp.ne.s32.totalorder %s121, %s123
      %p127 = scmp.eq.s32.totalorder %s24, 0
      %p128 = por %p126, %p127
      %p129 = scmp.ne.s32.totalorder %s121, %s123
      %p130 = scmp.eq.s32.totalorder %s29, 1
      %p131 = por %p129, %p130
      %p132 = scmp.ne.s32.totalorder %s123, %s124
      %p133 = scmp.eq.s32.totalorder %s29, 0
      %p134 = por %p132, %p133
      %p135 = scmp.ne.s32.totalorder %s123, %s124
      %p136 = scmp.eq.s32.totalorder %s30, 1
      %p137 = por %p135, %p136
      %p139 = scmp.ne.s32.totalorder %s124, %s138
      %p140 = scmp.eq.s32.totalorder %s30, 0
      %p141 = por %p139, %p140
      %s142 = ssub.s32 %s24, %s31
      %p143 = scmp.eq.s32.totalorder %s142, 0
      %s145 = sadd.s32 %s144, 1
      %s146 = scalar_select %p143, %s144, %s145
      %p149 = pneg %p143
      %p150 = scmp.eq.s32.totalorder %s24, 1
      %p151 = por %p149, %p150
      %p152 = scmp.ne.s32.totalorder %s144, %s147
      %p153 = scmp.eq.s32.totalorder %s24, 0
      %p154 = por %p152, %p153
      %p155 = scmp.ne.s32.totalorder %s144, %s147
      %p156 = scmp.eq.s32.totalorder %s29, 1
      %p157 = por %p155, %p156
      %p158 = scmp.ne.s32.totalorder %s147, %s148
      %p159 = scmp.eq.s32.totalorder %s29, 0
      %p160 = por %p158, %p159
      %p161 = scmp.ne.s32.totalorder %s147, %s148
      %p162 = scmp.eq.s32.totalorder %s30, 1
      %p163 = por %p161, %p162
      %p165 = scmp.ne.s32.totalorder %s148, %s164
      %p166 = scmp.eq.s32.totalorder %s30, 0
      %p167 = por %p165, %p166
      %s169 = sadd.s32 %s168, 1
      %p172 = scmp.eq.s32.totalorder %s24, 1
      %p173 = scmp.ne.s32.totalorder %s168, %s170
      %p174 = scmp.eq.s32.totalorder %s24, 0
      %p175 = por %p173, %p174
      %p176 = scmp.ne.s32.totalorder %s168, %s170
      %p177 = scmp.eq.s32.totalorder %s29, 1
      %p178 = por %p176, %p177
      %p179 = scmp.ne.s32.totalorder %s170, %s171
      %p180 = scmp.eq.s32.totalorder %s29, 0
      %p181 = por %p179, %p180
      %p182 = scmp.ne.s32.totalorder %s170, %s171
      %p183 = scmp.eq.s32.totalorder %s30, 1
      %p184 = por %p182, %p183
      %p186 = scmp.ne.s32.totalorder %s171, %s185
      %p187 = scmp.eq.s32.totalorder %s30, 0
      %p188 = por %p186, %p187
      %s190 = sadd.s32 %s189, 1
      %p193 = scmp.eq.s32.totalorder %s24, 1
      %p194 = scmp.ne.s32.totalorder %s189, %s191
      %p195 = scmp.eq.s32.totalorder %s24, 0
      %p196 = por %p194, %p195
      %p197 = scmp.ne.s32.totalorder %s189, %s191
      %p198 = scmp.eq.s32.totalorder %s29, 1
      %p199 = por %p197, %p198
      %p200 = scmp.ne.s32.totalorder %s191, %s192
      %p201 = scmp.eq.s32.totalorder %s29, 0
      %p202 = por %p200, %p201
      %p203 = scmp.ne.s32.totalorder %s191, %s192
      %p204 = scmp.eq.s32.totalorder %s30, 1
      %p205 = por %p203, %p204
      %p207 = scmp.ne.s32.totalorder %s192, %s206
      %p208 = scmp.eq.s32.totalorder %s30, 0
      %p209 = por %p207, %p208
      %s211 = sadd.s32 %s210, 1
      %p214 = scmp.eq.s32.totalorder %s24, 1
      %p215 = scmp.ne.s32.totalorder %s210, %s212
      %p216 = scmp.eq.s32.totalorder %s24, 0
      %p217 = por %p215, %p216
      %p218 = scmp.ne.s32.totalorder %s210, %s212
      %p219 = scmp.eq.s32.totalorder %s29, 1
      %p220 = por %p218, %p219
      %p221 = scmp.ne.s32.totalorder %s212, %s213
      %p222 = scmp.eq.s32.totalorder %s29, 0
      %p223 = por %p221, %p222
      %p224 = scmp.ne.s32.totalorder %s212, %s213
      %p225 = scmp.eq.s32.totalorder %s30, 1
      %p226 = por %p224, %p225
      %p228 = scmp.ne.s32.totalorder %s213, %s227
      %p229 = scmp.eq.s32.totalorder %s30, 0
      %p230 = por %p228, %p229
      %s232 = sadd.s32 %s231, 1
      %p235 = scmp.eq.s32.totalorder %s24, 1
      %p236 = scmp.ne.s32.totalorder %s231, %s233
      %p237 = scmp.eq.s32.totalorder %s24, 0
      %p238 = por %p236, %p237
      %p239 = scmp.ne.s32.totalorder %s231, %s233
      %p240 = scmp.eq.s32.totalorder %s29, 1
      %p241 = por %p239, %p240
      %p242 = scmp.ne.s32.totalorder %s233, %s234
      %p243 = scmp.eq.s32.totalorder %s29, 0
      %p244 = por %p242, %p243
      %p245 = scmp.ne.s32.totalorder %s233, %s234
      %p246 = scmp.eq.s32.totalorder %s30, 1
      %p247 = por %p245, %p246
      %p249 = scmp.ne.s32.totalorder %s234, %s248
      %p250 = scmp.eq.s32.totalorder %s30, 0
      %p251 = por %p249, %p250
      %s253 = sadd.s32 %s252, 1
      %p256 = scmp.eq.s32.totalorder %s24, 1
      %p257 = scmp.ne.s32.totalorder %s252, %s254
      %p258 = scmp.eq.s32.totalorder %s24, 0
      %p259 = por %p257, %p258
      %p260 = scmp.ne.s32.totalorder %s252, %s254
      %p261 = scmp.eq.s32.totalorder %s29, 1
      %p262 = por %p260, %p261
      %p263 = scmp.ne.s32.totalorder %s254, %s255
      %p264 = scmp.eq.s32.totalorder %s29, 0
      %p265 = por %p263, %p264
      %p266 = scmp.ne.s32.totalorder %s254, %s255
      %p267 = scmp.eq.s32.totalorder %s30, 1
      %p268 = por %p266, %p267
      %p270 = scmp.ne.s32.totalorder %s255, %s269
      %p271 = scmp.eq.s32.totalorder %s30, 0
      %p272 = por %p270, %p271
      %s274 = sadd.s32 %s273, 1
      %p277 = scmp.eq.s32.totalorder %s24, 1
      %p278 = scmp.ne.s32.totalorder %s273, %s275
      %p279 = scmp.eq.s32.totalorder %s24, 0
      %p280 = por %p278, %p279
      %p281 = scmp.ne.s32.totalorder %s273, %s275
      %p282 = scmp.eq.s32.totalorder %s29, 1
      %p283 = por %p281, %p282
      %p284 = scmp.ne.s32.totalorder %s275, %s276
      %p285 = scmp.eq.s32.totalorder %s29, 0
      %p286 = por %p284, %p285
      %p287 = scmp.ne.s32.totalorder %s275, %s276
      %p288 = scmp.eq.s32.totalorder %s30, 1
      %p289 = por %p287, %p288
      %p291 = scmp.ne.s32.totalorder %s276, %s290
      %p292 = scmp.eq.s32.totalorder %s30, 0
      %p293 = por %p291, %p292
      %s295 = sadd.s32 %s294, 1
      %p298 = scmp.eq.s32.totalorder %s24, 1
      %p299 = scmp.ne.s32.totalorder %s294, %s296
      %p300 = scmp.eq.s32.totalorder %s24, 0
      %p301 = por %p299, %p300
      %p302 = scmp.ne.s32.totalorder %s294, %s296
      %p303 = scmp.eq.s32.totalorder %s29, 1
      %p304 = por %p302, %p303
      %p305 = scmp.ne.s32.totalorder %s296, %s297
      %p306 = scmp.eq.s32.totalorder %s29, 0
      %p307 = por %p305, %p306
      %p308 = scmp.ne.s32.totalorder %s296, %s297
      %p309 = scmp.eq.s32.totalorder %s30, 1
      %p310 = por %p308, %p309
      %p312 = scmp.ne.s32.totalorder %s297, %s311
      %p313 = scmp.eq.s32.totalorder %s30, 0
      %p314 = por %p312, %p313
      %s316 = sadd.s32 %s315, 1
      %p319 = scmp.eq.s32.totalorder %s24, 1
      %p320 = scmp.ne.s32.totalorder %s315, %s317
      %p321 = scmp.eq.s32.totalorder %s24, 0
      %p322 = por %p320, %p321
      %p323 = scmp.ne.s32.totalorder %s315, %s317
      %p324 = scmp.eq.s32.totalorder %s29, 1
      %p325 = por %p323, %p324
      %p326 = scmp.ne.s32.totalorder %s317, %s318
      %p327 = scmp.eq.s32.totalorder %s29, 0
      %p328 = por %p326, %p327
      %p329 = scmp.ne.s32.totalorder %s317, %s318
      %p330 = scmp.eq.s32.totalorder %s30, 1
      %p331 = por %p329, %p330
      %p333 = scmp.ne.s32.totalorder %s318, %s332
      %p334 = scmp.eq.s32.totalorder %s30, 0
      %p335 = por %p333, %p334
      %s336 = ssub.s32 %s24, %s31
      %p337 = scmp.eq.s32.totalorder %s336, 0
      %s339 = sadd.s32 %s338, 1
      %s340 = scalar_select %p337, %s338, %s339
      %p343 = pneg %p337
      %p344 = scmp.eq.s32.totalorder %s24, 1
      %p345 = por %p343, %p344
      %p346 = scmp.ne.s32.totalorder %s338, %s341
      %p347 = scmp.eq.s32.totalorder %s24, 0
      %p348 = por %p346, %p347
      %p349 = scmp.ne.s32.totalorder %s338, %s341
      %p350 = scmp.eq.s32.totalorder %s29, 1
      %p351 = por %p349, %p350
      %p352 = scmp.ne.s32.totalorder %s341, %s342
      %p353 = scmp.eq.s32.totalorder %s29, 0
      %p354 = por %p352, %p353
      %p355 = scmp.ne.s32.totalorder %s341, %s342
      %p356 = scmp.eq.s32.totalorder %s30, 1
      %p357 = por %p355, %p356
      %p359 = scmp.ne.s32.totalorder %s342, %s358
      %p360 = scmp.eq.s32.totalorder %s30, 0
      %p361 = por %p359, %p360
      %p362 = scmp.le.s32.totalorder 1, %s24
      %p363 = scmp.lt.s32.totalorder %s24, 3
      %p364 = pnand %p362, %p363
      %p365 = pneg %p364
      // Predicated region
      $region9: #{encoder_forward.2} parent=5 // pred_check
        _
      $region10: #{encoder_forward.2} parent=5 // pred_check_branch
        %367 = sbr.rel (%p364) target = $region12
      $region11: #{encoder_forward.2} parent=5 // pred_region
        %s368 = ssub.s32 %s24, 1
        // Predicated region
        $region13: #{encoder_forward.2} parent=11 // pred_check
          %p369 = pneg %p71
        $region14: #{encoder_forward.2} parent=11 // pred_check_branch
          %371 = sbr.rel (%p369) target = $region16
        $region15: #{encoder_forward.2} parent=11 // pred_region
          %s373 = ssub.s32 16, 16
          %374 = vsyncadd [#allocation3], %s373
          %s376 = sshll.u32 [#allocation2], 4
          %s377 = int_to_ptr.vmem [resolvable:$true] %s376
          %379 = dma.hbm_to_vmem [thread:$0]  %s1, 16, %s377, [#allocation3]
        $region16: #{encoder_forward.2} parent=11 // pred_fallthru
          _
        // Predicated region
        $region17: #{encoder_forward.2} parent=11 // pred_check
          %p380 = pneg %p92
        $region18: #{encoder_forward.2} parent=11 // pred_check_branch
          %382 = sbr.rel (%p380) target = $region20
        $region19: #{encoder_forward.2} parent=11 // pred_region
          %s384 = ssub.s32 16, 16
          %385 = vsyncadd [#allocation5], %s384
          %s387 = sshll.u32 [#allocation4], 4
          %s388 = int_to_ptr.vmem [resolvable:$true] %s387
          %390 = dma.hbm_to_vmem [thread:$0]  %s2, 16, %s388, [#allocation5]
        $region20: #{encoder_forward.2} parent=11 // pred_fallthru
          _
        // Predicated region
        $region21: #{encoder_forward.2} parent=11 // pred_check
          %p391 = pneg %p113
        $region22: #{encoder_forward.2} parent=11 // pred_check_branch
          %393 = sbr.rel (%p391) target = $region24
        $region23: #{encoder_forward.2} parent=11 // pred_region
          _
        $region24: #{encoder_forward.2} parent=11 // pred_fallthru
          _
        // Predicated region
        $region25: #{encoder_forward.2} parent=11 // pred_check
          %p394 = pneg %p134
        $region26: #{encoder_forward.2} parent=11 // pred_check_branch
          %396 = sbr.rel (%p394) target = $region28
        $region27: #{encoder_forward.2} parent=11 // pred_region
          %s398 = ssub.s32 256, 256
          %399 = vsyncadd [#allocation5], %s398
          %s400 = sshll.u32 [#allocation6], 4
          %s401 = int_to_ptr.vmem [resolvable:$true] %s400
          %406 = dma.hbm_to_vmem [thread:$0]  %s4, 256, %s401, [#allocation5], 64, 64, 4
        $region28: #{encoder_forward.2} parent=11 // pred_fallthru
          _
        // Predicated region
        $region29: #{encoder_forward.2} parent=11 // pred_check
          %p407 = pneg %p181
        $region30: #{encoder_forward.2} parent=11 // pred_check_branch
          %409 = sbr.rel (%p407) target = $region32
        $region31: #{encoder_forward.2} parent=11 // pred_region
          _
        $region32: #{encoder_forward.2} parent=11 // pred_fallthru
          _
        // Predicated region
        $region33: #{encoder_forward.2} parent=11 // pred_check
          %p410 = pneg %p202
        $region34: #{encoder_forward.2} parent=11 // pred_check_branch
          %412 = sbr.rel (%p410) target = $region36
        $region35: #{encoder_forward.2} parent=11 // pred_region
          %s414 = ssub.s32 16, 16
          %415 = vsyncadd [#allocation8], %s414
          %s417 = sshll.u32 [#allocation7], 4
          %s418 = int_to_ptr.vmem [resolvable:$true] %s417
          %420 = dma.hbm_to_vmem [thread:$0]  %s7, 16, %s418, [#allocation8]
        $region36: #{encoder_forward.2} parent=11 // pred_fallthru
          _
        // Predicated region
        $region37: #{encoder_forward.2} parent=11 // pred_check
          %p421 = pneg %p223
        $region38: #{encoder_forward.2} parent=11 // pred_check_branch
          %423 = sbr.rel (%p421) target = $region40
        $region39: #{encoder_forward.2} parent=11 // pred_region
          %s425 = ssub.s32 256, 256
          %426 = vsyncadd [#allocation8], %s425
          %s427 = sshll.u32 [#allocation9], 4
          %s428 = int_to_ptr.vmem [resolvable:$true] %s427
          %433 = dma.hbm_to_vmem [thread:$0]  %s8, 256, %s428, [#allocation8], 64, 64, 4
        $region40: #{encoder_forward.2} parent=11 // pred_fallthru
          _
        // Predicated region
        $region41: #{encoder_forward.2} parent=11 // pred_check
          %p434 = pneg %p244
        $region42: #{encoder_forward.2} parent=11 // pred_check_branch
          %436 = sbr.rel (%p434) target = $region44
        $region43: #{encoder_forward.2} parent=11 // pred_region
          %s438 = ssub.s32 16, 16
          %439 = vsyncadd [#allocation11], %s438
          %s441 = sshll.u32 [#allocation10], 4
          %s442 = int_to_ptr.vmem [resolvable:$true] %s441
          %444 = dma.hbm_to_vmem [thread:$0]  %s9, 16, %s442, [#allocation11]
        $region44: #{encoder_forward.2} parent=11 // pred_fallthru
          _
        // Predicated region
        $region45: #{encoder_forward.2} parent=11 // pred_check
          %p445 = pneg %p265
        $region46: #{encoder_forward.2} parent=11 // pred_check_branch
          %447 = sbr.rel (%p445) target = $region48
        $region47: #{encoder_forward.2} parent=11 // pred_region
          _
        $region48: #{encoder_forward.2} parent=11 // pred_fallthru
          _
        // Predicated region
        $region49: #{encoder_forward.2} parent=11 // pred_check
          %p448 = pneg %p286
        $region50: #{encoder_forward.2} parent=11 // pred_check_branch
          %450 = sbr.rel (%p448) target = $region52
        $region51: #{encoder_forward.2} parent=11 // pred_region
          %s452 = ssub.s32 16, 16
          %453 = vsyncadd [#allocation11], %s452
          %s455 = sshll.u32 [#allocation12], 4
          %s456 = int_to_ptr.vmem [resolvable:$true] %s455
          %458 = dma.hbm_to_vmem [thread:$0]  %s11, 16, %s456, [#allocation11]
        $region52: #{encoder_forward.2} parent=11 // pred_fallthru
          _
        // Predicated region
        $region53: #{encoder_forward.2} parent=11 // pred_check
          %p459 = pneg %p307
        $region54: #{encoder_forward.2} parent=11 // pred_check_branch
          %461 = sbr.rel (%p459) target = $region56
        $region55: #{encoder_forward.2} parent=11 // pred_region
          _
        $region56: #{encoder_forward.2} parent=11 // pred_fallthru
          _
        // Predicated region
        $region57: #{encoder_forward.2} parent=11 // pred_check
          %p462 = pneg %p328
        $region58: #{encoder_forward.2} parent=11 // pred_check_branch
          %464 = sbr.rel (%p462) target = $region60
        $region59: #{encoder_forward.2} parent=11 // pred_region
          _
        $region60: #{encoder_forward.2} parent=11 // pred_fallthru
          _
      $region12: #{encoder_forward.2} parent=5 // pred_fallthru
        _
      %p465 = scmp.lt.s32.totalorder %s24, 2
      // Predicated region
      $region61: #{encoder_forward.2} parent=5 // pred_check
        %p466 = pneg %p465
      $region62: #{encoder_forward.2} parent=5 // pred_check_branch
        %468 = sbr.rel (%p466) target = $region64
      $region63: #{encoder_forward.2} parent=5 // pred_region
        // Predicated region
        $region65: #{encoder_forward.2} parent=63 // pred_check
          %p469 = pneg %p44
        $region66: #{encoder_forward.2} parent=63 // pred_check_branch
          %471 = sbr.rel (%p469) target = $region68
        $region67: #{encoder_forward.2} parent=63 // pred_region
          %p472 = scmp.lt.s32.totalorder %s24, 1
          %s473 = scalar_select %p472, %s24, 1
          %s474 = smul.addr %s473, 8
          %s475 = scalar_lea.vmem %s0, %s474
        $region68: #{encoder_forward.2} parent=63 // pred_fallthru
          _
        // Predicated region
        $region69: #{encoder_forward.2} parent=63 // pred_check
          %p476 = pneg %p154
        $region70: #{encoder_forward.2} parent=63 // pred_check_branch
          %478 = sbr.rel (%p476) target = $region72
        $region71: #{encoder_forward.2} parent=63 // pred_region
          %p479 = scmp.lt.s32.totalorder %s24, 1
          %s480 = scalar_select %p479, %s24, 1
          %s481 = smul.addr %s480, 2
          %s482 = smul.addr %s481, 8
          %s483 = scalar_lea.vmem %s5, %s482
        $region72: #{encoder_forward.2} parent=63 // pred_fallthru
          _
      $region64: #{encoder_forward.2} parent=5 // pred_fallthru
        _
      %p484 = scmp.le.s32.totalorder 1, %s24
      %p485 = scmp.lt.s32.totalorder %s24, 3
      %p486 = pnand %p484, %p485
      %p487 = pneg %p486
      // Predicated region
      $region73: #{encoder_forward.2} parent=5 // pred_check
        _
      $region74: #{encoder_forward.2} parent=5 // pred_check_branch
        %489 = sbr.rel (%p486) target = $region76
      $region75: #{encoder_forward.2} parent=5 // pred_region
        %s490 = ssub.s32 %s24, 1
        // Predicated region
        $region77: #{encoder_forward.2} parent=75 // pred_check
          %p491 = pneg %p71
        $region78: #{encoder_forward.2} parent=75 // pred_check_branch
          %493 = sbr.rel (%p491) target = $region80
        $region79: #{encoder_forward.2} parent=75 // pred_region
          %494 = dma.done [#allocation3], 16
        $region80: #{encoder_forward.2} parent=75 // pred_fallthru
          _
        // Predicated region
        $region81: #{encoder_forward.2} parent=75 // pred_check
          %p495 = pneg %p92
        $region82: #{encoder_forward.2} parent=75 // pred_check_branch
          %497 = sbr.rel (%p495) target = $region84
        $region83: #{encoder_forward.2} parent=75 // pred_region
          %498 = dma.done [#allocation5], 16
        $region84: #{encoder_forward.2} parent=75 // pred_fallthru
          _
        // Predicated region
        $region85: #{encoder_forward.2} parent=75 // pred_check
          %p499 = pneg %p134
        $region86: #{encoder_forward.2} parent=75 // pred_check_branch
          %501 = sbr.rel (%p499) target = $region88
        $region87: #{encoder_forward.2} parent=75 // pred_region
          %502 = dma.done [#allocation5], 256
        $region88: #{encoder_forward.2} parent=75 // pred_fallthru
          _
        // Predicated region
        $region89: #{encoder_forward.2} parent=75 // pred_check
          %p503 = pneg %p202
        $region90: #{encoder_forward.2} parent=75 // pred_check_branch
          %505 = sbr.rel (%p503) target = $region92
        $region91: #{encoder_forward.2} parent=75 // pred_region
          %506 = dma.done [#allocation8], 16
        $region92: #{encoder_forward.2} parent=75 // pred_fallthru
          _
        // Predicated region
        $region93: #{encoder_forward.2} parent=75 // pred_check
          %p507 = pneg %p223
        $region94: #{encoder_forward.2} parent=75 // pred_check_branch
          %509 = sbr.rel (%p507) target = $region96
        $region95: #{encoder_forward.2} parent=75 // pred_region
          %510 = dma.done [#allocation8], 256
        $region96: #{encoder_forward.2} parent=75 // pred_fallthru
          _
        // Predicated region
        $region97: #{encoder_forward.2} parent=75 // pred_check
          %p511 = pneg %p244
        $region98: #{encoder_forward.2} parent=75 // pred_check_branch
          %513 = sbr.rel (%p511) target = $region100
        $region99: #{encoder_forward.2} parent=75 // pred_region
          %514 = dma.done [#allocation11], 16
        $region100: #{encoder_forward.2} parent=75 // pred_fallthru
          _
        // Predicated region
        $region101: #{encoder_forward.2} parent=75 // pred_check
          %p515 = pneg %p286
        $region102: #{encoder_forward.2} parent=75 // pred_check_branch
          %517 = sbr.rel (%p515) target = $region104
        $region103: #{encoder_forward.2} parent=75 // pred_region
          %518 = dma.done [#allocation11], 16
        $region104: #{encoder_forward.2} parent=75 // pred_fallthru
          _
        %p519 = scmp.lt.s32.totalorder %s29, 1
        %s520 = scalar_select %p519, %s29, 1
        %s521 = smul.addr %s520, 8
        %s522 = scalar_lea.vmem %s0, %s521
        %p523 = pneg %p50
        %p524 = pneg %p47
        %p525 = pneg %p71
        %p526 = pneg %p68
        %p527 = pneg %p92
        %p528 = pneg %p89
        %p529 = pneg %p113
        %p530 = pneg %p110
        %p531 = pneg %p134
        %p532 = pneg %p131
        %p533 = scmp.lt.s32.totalorder %s29, 1
        %s534 = scalar_select %p533, %s29, 1
        %s535 = smul.addr %s534, 2
        %s536 = smul.addr %s535, 8
        %s537 = scalar_lea.vmem %s5, %s536
        %p538 = pneg %p160
        %p539 = pneg %p157
        %p540 = pneg %p181
        %p541 = pneg %p178
        %p542 = pneg %p202
        %p543 = pneg %p199
        %p544 = pneg %p223
        %p545 = pneg %p220
        %p546 = pneg %p244
        %p547 = pneg %p241
        %p548 = pneg %p265
        %p549 = pneg %p262
        %p550 = pneg %p286
        %p551 = pneg %p283
        %p552 = pneg %p307
        %p553 = pneg %p304
        %p554 = pneg %p328
        %p555 = pneg %p325
        %p556 = pneg %p354
        %p557 = pneg %p351
        %p558 = scmp.lt.s32.totalorder %s29, 1
        %s559 = scalar_select %p558, %s29, 1
        %s560 = smul.addr %s559, 8
        %s561 = scalar_lea.vmem %s14, %s560
        %p562 = scmp.lt.s32.totalorder %s29, 1
        %s563 = scalar_select %p562, %s29, 1
        %s564 = smul.addr %s563, 8
        %s565 = scalar_lea.vmem %s0, %s564
        %p566 = scmp.lt.s32.totalorder %s29, 1
        %s567 = scalar_select %p566, %s29, 1
        %s568 = smul.addr %s567, 2
        %s569 = smul.addr %s568, 8
        %s570 = scalar_lea.vmem %s5, %s569
        %p571 = scmp.lt.s32.totalorder %s29, 1
        %s572 = scalar_select %p571, %s29, 1
        %s573 = smul.addr %s572, 8
        %s574 = scalar_lea.vmem %s14, %s573
        %v576 = vld [vmem:[%s565] sm:$0xff]
        %v577 = vld [vmem:[#allocation2] sm:$0x1]
        %v578 = vld [vmem:[#allocation4] sm:$0x1]
        %vm579 = vcmask 261120
        %v580 = vsel %vm579, %v576, 0.0
        %581 = vadd.xlane.f32.xlu0 %v580
        %v582 = vpop.xlane.xlu0 %581
        %v583 = vrcp.pop 32.0
        %v584 = vmul.f32 %v582, %v583
        %v585 = vsub.f32 %v576, %v584
        %v586 = vmul.f32 %v585, %v585
        %v587 = vsel %vm579, %v586, 0.0
        %588 = vadd.xlane.f32.xlu0 %v587
        %v589 = vpop.xlane.xlu0 %588
        %v590 = vmul.f32 %v589, %v583
        %v591 = vadd.f32 %v590, 1e-05
        %v592 = vrsqrt.pop %v591
        %v593 = vmul.f32 %v585, %v592
        %v595 = vlaneseq
        %v596 = vshrl.u32 %v595, 7
        %v597 = vsub.s32 0, %v596
        %v598 = vrot.slane %v577, %v597
        %v600 = vmul.f32 %v593, %v598
        %v602 = vlaneseq
        %v603 = vshrl.u32 %v602, 7
        %v604 = vsub.s32 0, %v603
        %v605 = vrot.slane %v578, %v604
        %v607 = vadd.f32 %v600, %v605
        %v608 = vpack.c.bf16 %v607, %v607
        %v609 = vld [vmem:[%s3] sm:$0xf]
        %v610 = vld [vmem:[%s3 + $0x4] sm:$0xf]
        %v611 = vld [vmem:[%s3 + $0x8] sm:$0xf]
        %v612 = vld [vmem:[%s3 + $0xc] sm:$0xf]
        %v617 = vunpack.c.l.b16 %v609
        %v618 = vunpack.c.l.b16 %v610
        %v619 = vunpack.c.l.b16 %v611
        %v620 = vunpack.c.l.b16 %v612
        %v621 = vpack.c.b16 %v618, %v617
        %v622 = vpack.c.b16 %v620, %v619
        %v626 = vsel %vm579, %v608, 0
        %628 = vmatprep.subr.bf16.mxu0 0
        %629 = vmatpush1.bf16.msra.mxu0 0
        %630 = vmatprep.subr.bf16.mxu0 0
        %631 = vmatpush1.bf16.msra.mxu0 0
        %632 = vmatprep.subr.bf16.mxu0 0
        %633 = vmatpush1.bf16.msra.mxu0 0
        %634 = vmatprep.subr.bf16.mxu0 0
        %635 = vmatpush1.bf16.msra.mxu0 0
        %636 = vmatprep.subr.bf16.mxu0 0
        %637 = vmatpush1.bf16.msra.mxu0 0
        %638 = vmatprep.subr.bf16.mxu0 0
        %639 = vmatpush1.bf16.msra.mxu0 0
        %640 = vmatprep.subr.bf16.mxu0 0
        %641 = vmatpush1.bf16.msra.mxu0 %v622
        %642 = vmatprep.subr.bf16.mxu0 0
        %643 = vmatpush1.bf16.msra.mxu0 %v621
        %644 = vmatprep.subr.bf16.mxu0 0
        %645 = vmatpush2.bf16.msra.mxu0 0
        %646 = vmatprep.subr.bf16.mxu0 0
        %647 = vmatpush2.bf16.msra.mxu0 0
        %648 = vmatprep.subr.bf16.mxu0 0
        %649 = vmatpush2.bf16.msra.mxu0 0
        %650 = vmatprep.subr.bf16.mxu0 0
        %651 = vmatpush2.bf16.msra.mxu0 0
        %652 = vmatprep.subr.bf16.mxu0 0
        %653 = vmatpush2.bf16.msra.mxu0 0
        %654 = vmatprep.subr.bf16.mxu0 0
        %655 = vmatpush2.bf16.msra.mxu0 0
        %656 = vmatprep.subr.bf16.mxu0 0
        %657 = vmatpush2.bf16.msra.mxu0 0
        %658 = vmatprep.subr.bf16.mxu0 0
        %659 = vmatpush2.bf16.msra.mxu0 0
        %660 = vmatprep.mubr.bf16.mxu0 0
        %661 = vmatmul.mubr.bf16.gmra.mxu0 %v626
        %v662 = vpop.f32.mrf.mxu0
        %v663 = vadd.f32 0.0, %v662
        %v664 = vpop.f32.mrf.mxu0
        %v665 = vpop.f32.mrf.mxu0
        %v666 = vpop.f32.mrf.mxu0
        %667 = vdwg.mxu0
        %v668 = vmul.f32 %v663, 0.17677669
        %v669 = vpack.c.bf16 %v668, %v668
        %v670 = vpack.c.bf16 %v663, %v663
        %v671 = vld [vmem:[%s570] sm:$0xff]
        %673 = vrot.lane.b32.xlu0 %v670, 96
        %v674 = vpop.permute.xlu0 %673
        %vm675 = vcmask 130048
        %v677 = vsel %vm675, %v669, 0
        %v680 = vsel %vm675, %v674, 0
        %682 = vmatprep.subr.bf16.mxu0 0
        %683 = vmatpush1.bf16.xpose.msra.mxu0 0
        %684 = vmatprep.subr.bf16.mxu0 0
        %685 = vmatpush1.bf16.xpose.msra.mxu0 0
        %686 = vmatprep.subr.bf16.mxu0 0
        %687 = vmatpush1.bf16.xpose.msra.mxu0 0
        %688 = vmatprep.subr.bf16.mxu0 0
        %689 = vmatpush1.bf16.xpose.msra.mxu0 0
        %690 = vmatprep.subr.bf16.mxu0 0
        %691 = vmatpush1.bf16.xpose.msra.mxu0 0
        %692 = vmatprep.subr.bf16.mxu0 0
        %693 = vmatpush1.bf16.xpose.msra.mxu0 0
        %694 = vmatprep.subr.bf16.mxu0 0
        %695 = vmatpush1.bf16.xpose.msra.mxu0 0
        %696 = vmatprep.subr.bf16.mxu0 0
        %697 = vmatpush1.bf16.xpose.msra.mxu0 %v680
        %698 = vmatprep.subr.bf16.mxu0 0
        %699 = vmatpush2.bf16.xpose.msra.mxu0 0
        %700 = vmatprep.subr.bf16.mxu0 0
        %701 = vmatpush2.bf16.xpose.msra.mxu0 0
        %702 = vmatprep.subr.bf16.mxu0 0
        %703 = vmatpush2.bf16.xpose.msra.mxu0 0
        %704 = vmatprep.subr.bf16.mxu0 0
        %705 = vmatpush2.bf16.xpose.msra.mxu0 0
        %706 = vmatprep.subr.bf16.mxu0 0
        %707 = vmatpush2.bf16.xpose.msra.mxu0 0
        %708 = vmatprep.subr.bf16.mxu0 0
        %709 = vmatpush2.bf16.xpose.msra.mxu0 0
        %710 = vmatprep.subr.bf16.mxu0 0
        %711 = vmatpush2.bf16.xpose.msra.mxu0 0
        %712 = vmatprep.subr.bf16.mxu0 0
        %713 = vmatpush2.bf16.xpose.msra.mxu0 0
        %714 = vmatprep.mubr.bf16.mxu0 0
        %715 = vmatmul.mubr.bf16.gmra.mxu0 %v677
        %v716 = vpop.f32.mrf.mxu0
        %v717 = vadd.f32 %v671, %v716
        %v718 = vpop.f32.mrf.mxu0
        %v719 = vpop.f32.mrf.mxu0
        %v720 = vpop.f32.mrf.mxu0
        %721 = vdwg.mxu0
        %vm722 = vcmask 64512
        %v723 = vsel %vm722, %v717, -inf
        %724 = vmax.xlane.f32.xlu0 %v723
        %v725 = vpop.xlane.xlu0 %724
        %v726 = vsub.f32 %v717, %v725
        %v727 = vmul.f32 %v726, 1.442695
        %v728 = vpow.pop %v727
        %v729 = vsel %vm722, %v728, 0.0
        %730 = vadd.xlane.f32.xlu0 %v729
        %v731 = vpop.xlane.xlu0 %730
        %v732 = vrcp.pop %v731
        %v733 = vmul.f32 %v728, %v732
        %v734 = vpack.c.bf16 %v733, %v733
        %735 = vrot.lane.b32.xlu0 %v670, 64
        %v736 = vpop.permute.xlu0 %735
        %v738 = vsel %vm722, %v734, 0
        %vm740 = vcmask 1043456
        %v742 = vsel %vm740, %v736, 0
        %744 = vmatprep.subr.bf16.mxu0 0
        %745 = vmatpush1.bf16.msra.mxu0 0
        %746 = vmatprep.subr.bf16.mxu0 0
        %747 = vmatpush1.bf16.msra.mxu0 0
        %748 = vmatprep.subr.bf16.mxu0 0
        %749 = vmatpush1.bf16.msra.mxu0 0
        %750 = vmatprep.subr.bf16.mxu0 0
        %751 = vmatpush1.bf16.msra.mxu0 0
        %752 = vmatprep.subr.bf16.mxu0 0
        %753 = vmatpush1.bf16.msra.mxu0 0
        %754 = vmatprep.subr.bf16.mxu0 0
        %755 = vmatpush1.bf16.msra.mxu0 0
        %756 = vmatprep.subr.bf16.mxu0 0
        %757 = vmatpush1.bf16.msra.mxu0 0
        %758 = vmatprep.subr.bf16.mxu0 0
        %759 = vmatpush1.bf16.msra.mxu0 %v742
        %760 = vmatprep.subr.bf16.mxu0 0
        %761 = vmatpush2.bf16.msra.mxu0 0
        %762 = vmatprep.subr.bf16.mxu0 0
        %763 = vmatpush2.bf16.msra.mxu0 0
        %764 = vmatprep.subr.bf16.mxu0 0
        %765 = vmatpush2.bf16.msra.mxu0 0
        %766 = vmatprep.subr.bf16.mxu0 0
        %767 = vmatpush2.bf16.msra.mxu0 0
        %768 = vmatprep.subr.bf16.mxu0 0
        %769 = vmatpush2.bf16.msra.mxu0 0
        %770 = vmatprep.subr.bf16.mxu0 0
        %771 = vmatpush2.bf16.msra.mxu0 0
        %772 = vmatprep.subr.bf16.mxu0 0
        %773 = vmatpush2.bf16.msra.mxu0 0
        %774 = vmatprep.subr.bf16.mxu0 0
        %775 = vmatpush2.bf16.msra.mxu0 0
        %776 = vmatprep.mubr.bf16.mxu0 0
        %777 = vmatmul.mubr.bf16.gmra.mxu0 %v738
        %v778 = vpop.f32.mrf.mxu0
        %v779 = vadd.f32 0.0, %v778
        %v780 = vpop.f32.mrf.mxu0
        %v781 = vpop.f32.mrf.mxu0
        %v782 = vpop.f32.mrf.mxu0
        %783 = vdwg.mxu0
        %v784 = vpack.c.bf16 %v779, %v779
        %v785 = vld [vmem:[#allocation6] sm:$0xf]
        %v786 = vld [vmem:[#allocation6 + $0x4] sm:$0xf]
        %s787 = scalar_lea.vmem %s570, 8
        %v788 = vld [vmem:[%s787] sm:$0xff]
        %790 = vrot.lane.b32.xlu0 %v669, 112
        %v791 = vpop.permute.xlu0 %790
        %792 = vrot.lane.b32.xlu0 %v670, 80
        %v793 = vpop.permute.xlu0 %792
        %v795 = vsel %vm675, %v791, 0
        %v798 = vsel %vm675, %v793, 0
        %800 = vmatprep.subr.bf16.mxu0 0
        %801 = vmatpush1.bf16.xpose.msra.mxu0 0
        %802 = vmatprep.subr.bf16.mxu0 0
        %803 = vmatpush1.bf16.xpose.msra.mxu0 0
        %804 = vmatprep.subr.bf16.mxu0 0
        %805 = vmatpush1.bf16.xpose.msra.mxu0 0
        %806 = vmatprep.subr.bf16.mxu0 0
        %807 = vmatpush1.bf16.xpose.msra.mxu0 0
        %808 = vmatprep.subr.bf16.mxu0 0
        %809 = vmatpush1.bf16.xpose.msra.mxu0 0
        %810 = vmatprep.subr.bf16.mxu0 0
        %811 = vmatpush1.bf16.xpose.msra.mxu0 0
        %812 = vmatprep.subr.bf16.mxu0 0
        %813 = vmatpush1.bf16.xpose.msra.mxu0 0
        %814 = vmatprep.subr.bf16.mxu0 0
        %815 = vmatpush1.bf16.xpose.msra.mxu0 %v798
        %816 = vmatprep.subr.bf16.mxu0 0
        %817 = vmatpush2.bf16.xpose.msra.mxu0 0
        %818 = vmatprep.subr.bf16.mxu0 0
        %819 = vmatpush2.bf16.xpose.msra.mxu0 0
        %820 = vmatprep.subr.bf16.mxu0 0
        %821 = vmatpush2.bf16.xpose.msra.mxu0 0
        %822 = vmatprep.subr.bf16.mxu0 0
        %823 = vmatpush2.bf16.xpose.msra.mxu0 0
        %824 = vmatprep.subr.bf16.mxu0 0
        %825 = vmatpush2.bf16.xpose.msra.mxu0 0
        %826 = vmatprep.subr.bf16.mxu0 0
        %827 = vmatpush2.bf16.xpose.msra.mxu0 0
        %828 = vmatprep.subr.bf16.mxu0 0
        %829 = vmatpush2.bf16.xpose.msra.mxu0 0
        %830 = vmatprep.subr.bf16.mxu0 0
        %831 = vmatpush2.bf16.xpose.msra.mxu0 0
        %832 = vmatprep.mubr.bf16.mxu0 0
        %833 = vmatmul.mubr.bf16.gmra.mxu0 %v795
        %v834 = vpop.f32.mrf.mxu0
        %v835 = vadd.f32 %v788, %v834
        %v836 = vpop.f32.mrf.mxu0
        %v837 = vpop.f32.mrf.mxu0
        %v838 = vpop.f32.mrf.mxu0
        %839 = vdwg.mxu0
        %v840 = vsel %vm722, %v835, -inf
        %841 = vmax.xlane.f32.xlu0 %v840
        %v842 = vpop.xlane.xlu0 %841
        %v843 = vsub.f32 %v835, %v842
        %v844 = vmul.f32 %v843, 1.442695
        %v845 = vpow.pop %v844
        %v846 = vsel %vm722, %v845, 0.0
        %847 = vadd.xlane.f32.xlu0 %v846
        %v848 = vpop.xlane.xlu0 %847
        %v849 = vrcp.pop %v848
        %v850 = vmul.f32 %v845, %v849
        %v851 = vpack.c.bf16 %v850, %v850
        %852 = vrot.lane.b32.xlu0 %v670, 48
        %v853 = vpop.permute.xlu0 %852
        %v855 = vsel %vm722, %v851, 0
        %v858 = vsel %vm740, %v853, 0
        %860 = vmatprep.subr.bf16.mxu0 0
        %861 = vmatpush1.bf16.msra.mxu0 0
        %862 = vmatprep.subr.bf16.mxu0 0
        %863 = vmatpush1.bf16.msra.mxu0 0
        %864 = vmatprep.subr.bf16.mxu0 0
        %865 = vmatpush1.bf16.msra.mxu0 0
        %866 = vmatprep.subr.bf16.mxu0 0
        %867 = vmatpush1.bf16.msra.mxu0 0
        %868 = vmatprep.subr.bf16.mxu0 0
        %869 = vmatpush1.bf16.msra.mxu0 0
        %870 = vmatprep.subr.bf16.mxu0 0
        %871 = vmatpush1.bf16.msra.mxu0 0
        %872 = vmatprep.subr.bf16.mxu0 0
        %873 = vmatpush1.bf16.msra.mxu0 0
        %874 = vmatprep.subr.bf16.mxu0 0
        %875 = vmatpush1.bf16.msra.mxu0 %v858
        %876 = vmatprep.subr.bf16.mxu0 0
        %877 = vmatpush2.bf16.msra.mxu0 0
        %878 = vmatprep.subr.bf16.mxu0 0
        %879 = vmatpush2.bf16.msra.mxu0 0
        %880 = vmatprep.subr.bf16.mxu0 0
        %881 = vmatpush2.bf16.msra.mxu0 0
        %882 = vmatprep.subr.bf16.mxu0 0
        %883 = vmatpush2.bf16.msra.mxu0 0
        %884 = vmatprep.subr.bf16.mxu0 0
        %885 = vmatpush2.bf16.msra.mxu0 0
        %886 = vmatprep.subr.bf16.mxu0 0
        %887 = vmatpush2.bf16.msra.mxu0 0
        %888 = vmatprep.subr.bf16.mxu0 0
        %889 = vmatpush2.bf16.msra.mxu0 0
        %890 = vmatprep.subr.bf16.mxu0 0
        %891 = vmatpush2.bf16.msra.mxu0 0
        %892 = vmatprep.mubr.bf16.mxu0 0
        %893 = vmatmul.mubr.bf16.gmra.mxu0 %v855
        %v894 = vpop.f32.mrf.mxu0
        %v895 = vadd.f32 0.0, %v894
        %v896 = vpop.f32.mrf.mxu0
        %v897 = vpop.f32.mrf.mxu0
        %v898 = vpop.f32.mrf.mxu0
        %899 = vdwg.mxu0
        %v900 = vpack.c.bf16 %v895, %v895
        %v901 = vld [vmem:[#allocation6 + $0x8] sm:$0xf]
        %v902 = vld [vmem:[#allocation6 + $0xc] sm:$0xf]
        %v905 = vunpack.c.l.b16 %v901
        %v906 = vunpack.c.l.b16 %v902
        %v907 = vpack.c.b16 %v906, %v905
        %v910 = vsel %vm675, %v900, 0
        %912 = vmatprep.subr.bf16.mxu0 0
        %913 = vmatpush1.bf16.msra.mxu0 0
        %914 = vmatprep.subr.bf16.mxu0 0
        %915 = vmatpush1.bf16.msra.mxu0 0
        %916 = vmatprep.subr.bf16.mxu0 0
        %917 = vmatpush1.bf16.msra.mxu0 0
        %918 = vmatprep.subr.bf16.mxu0 0
        %919 = vmatpush1.bf16.msra.mxu0 0
        %920 = vmatprep.subr.bf16.mxu0 0
        %921 = vmatpush1.bf16.msra.mxu0 0
        %922 = vmatprep.subr.bf16.mxu0 0
        %923 = vmatpush1.bf16.msra.mxu0 0
        %924 = vmatprep.subr.bf16.mxu0 0
        %925 = vmatpush1.bf16.msra.mxu0 0
        %926 = vmatprep.subr.bf16.mxu0 0
        %927 = vmatpush1.bf16.msra.mxu0 %v907
        %928 = vmatprep.subr.bf16.mxu0 0
        %929 = vmatpush2.bf16.msra.mxu0 0
        %930 = vmatprep.subr.bf16.mxu0 0
        %931 = vmatpush2.bf16.msra.mxu0 0
        %932 = vmatprep.subr.bf16.mxu0 0
        %933 = vmatpush2.bf16.msra.mxu0 0
        %934 = vmatprep.subr.bf16.mxu0 0
        %935 = vmatpush2.bf16.msra.mxu0 0
        %936 = vmatprep.subr.bf16.mxu0 0
        %937 = vmatpush2.bf16.msra.mxu0 0
        %938 = vmatprep.subr.bf16.mxu0 0
        %939 = vmatpush2.bf16.msra.mxu0 0
        %940 = vmatprep.subr.bf16.mxu0 0
        %941 = vmatpush2.bf16.msra.mxu0 0
        %942 = vmatprep.subr.bf16.mxu0 0
        %943 = vmatpush2.bf16.msra.mxu0 0
        %944 = vmatprep.mubr.bf16.mxu0 0
        %945 = vmatmul.mubr.bf16.gmra.mxu0 %v910
        %v946 = vpop.f32.mrf.mxu0
        %v947 = vadd.f32 0.0, %v946
        %v948 = vpop.f32.mrf.mxu0
        %v949 = vpop.f32.mrf.mxu0
        %v950 = vpop.f32.mrf.mxu0
        %951 = vdwg.mxu0
        %v954 = vunpack.c.l.b16 %v785
        %v955 = vunpack.c.l.b16 %v786
        %v956 = vpack.c.b16 %v955, %v954
        %v959 = vsel %vm675, %v784, 0
        %961 = vmatprep.subr.bf16.mxu0 0
        %962 = vmatpush1.bf16.msra.mxu0 0
        %963 = vmatprep.subr.bf16.mxu0 0
        %964 = vmatpush1.bf16.msra.mxu0 0
        %965 = vmatprep.subr.bf16.mxu0 0
        %966 = vmatpush1.bf16.msra.mxu0 0
        %967 = vmatprep.subr.bf16.mxu0 0
        %968 = vmatpush1.bf16.msra.mxu0 0
        %969 = vmatprep.subr.bf16.mxu0 0
        %970 = vmatpush1.bf16.msra.mxu0 0
        %971 = vmatprep.subr.bf16.mxu0 0
        %972 = vmatpush1.bf16.msra.mxu0 0
        %973 = vmatprep.subr.bf16.mxu0 0
        %974 = vmatpush1.bf16.msra.mxu0 0
        %975 = vmatprep.subr.bf16.mxu0 0
        %976 = vmatpush1.bf16.msra.mxu0 %v956
        %977 = vmatprep.subr.bf16.mxu0 0
        %978 = vmatpush2.bf16.msra.mxu0 0
        %979 = vmatprep.subr.bf16.mxu0 0
        %980 = vmatpush2.bf16.msra.mxu0 0
        %981 = vmatprep.subr.bf16.mxu0 0
        %982 = vmatpush2.bf16.msra.mxu0 0
        %983 = vmatprep.subr.bf16.mxu0 0
        %984 = vmatpush2.bf16.msra.mxu0 0
        %985 = vmatprep.subr.bf16.mxu0 0
        %986 = vmatpush2.bf16.msra.mxu0 0
        %987 = vmatprep.subr.bf16.mxu0 0
        %988 = vmatpush2.bf16.msra.mxu0 0
        %989 = vmatprep.subr.bf16.mxu0 0
        %990 = vmatpush2.bf16.msra.mxu0 0
        %991 = vmatprep.subr.bf16.mxu0 0
        %992 = vmatpush2.bf16.msra.mxu0 0
        %993 = vmatprep.mubr.bf16.mxu0 0
        %994 = vmatmul.mubr.bf16.gmra.mxu0 %v959
        %v995 = vpop.f32.mrf.mxu0
        %v996 = vadd.f32 %v947, %v995
        %v997 = vpop.f32.mrf.mxu0
        %v998 = vpop.f32.mrf.mxu0
        %v999 = vpop.f32.mrf.mxu0
        %1000 = vdwg.mxu0
        %v1001 = vadd.f32 %v576, %v996
        %v1002 = vld [vmem:[%s6] sm:$0x1]
        %v1003 = vld [vmem:[#allocation7] sm:$0x1]
        %v1004 = vsel %vm579, %v1001, 0.0
        %1005 = vadd.xlane.f32.xlu0 %v1004
        %v1006 = vpop.xlane.xlu0 %1005
        %v1007 = vmul.f32 %v1006, %v583
        %v1008 = vsub.f32 %v1001, %v1007
        %v1009 = vmul.f32 %v1008, %v1008
        %v1010 = vsel %vm579, %v1009, 0.0
        %1011 = vadd.xlane.f32.xlu0 %v1010
        %v1012 = vpop.xlane.xlu0 %1011
        %v1013 = vmul.f32 %v1012, %v583
        %v1014 = vadd.f32 %v1013, 1e-05
        %v1015 = vrsqrt.pop %v1014
        %v1016 = vmul.f32 %v1008, %v1015
        %v1018 = vlaneseq
        %v1019 = vshrl.u32 %v1018, 7
        %v1020 = vsub.s32 0, %v1019
        %v1021 = vrot.slane %v1002, %v1020
        %v1023 = vmul.f32 %v1016, %v1021
        %v1025 = vlaneseq
        %v1026 = vshrl.u32 %v1025, 7
        %v1027 = vsub.s32 0, %v1026
        %v1028 = vrot.slane %v1003, %v1027
        %v1030 = vadd.f32 %v1023, %v1028
        %v1031 = vpack.c.bf16 %v1030, %v1030
        %v1032 = vld [vmem:[#allocation9] sm:$0xf]
        %v1033 = vld [vmem:[#allocation9 + $0x4] sm:$0xf]
        %v1034 = vld [vmem:[#allocation9 + $0x8] sm:$0xf]
        %v1035 = vld [vmem:[#allocation9 + $0xc] sm:$0xf]
        %v1036 = vld [vmem:[#allocation10] sm:$0x1]
        %v1038 = vlaneseq
        %v1039 = vshrl.u32 %v1038, 7
        %v1040 = vsub.s32 0, %v1039
        %v1041 = vrot.slane %v1036, %v1040
        %v1047 = vunpack.c.l.b16 %v1032
        %v1048 = vunpack.c.l.b16 %v1033
        %v1049 = vunpack.c.l.b16 %v1034
        %v1050 = vunpack.c.l.b16 %v1035
        %v1051 = vpack.c.b16 %v1048, %v1047
        %v1052 = vpack.c.b16 %v1050, %v1049
        %v1056 = vsel %vm579, %v1031, 0
        %1058 = vmatprep.subr.bf16.mxu0 0
        %1059 = vmatpush1.bf16.msra.mxu0 0
        %1060 = vmatprep.subr.bf16.mxu0 0
        %1061 = vmatpush1.bf16.msra.mxu0 0
        %1062 = vmatprep.subr.bf16.mxu0 0
        %1063 = vmatpush1.bf16.msra.mxu0 0
        %1064 = vmatprep.subr.bf16.mxu0 0
        %1065 = vmatpush1.bf16.msra.mxu0 0
        %1066 = vmatprep.subr.bf16.mxu0 0
        %1067 = vmatpush1.bf16.msra.mxu0 0
        %1068 = vmatprep.subr.bf16.mxu0 0
        %1069 = vmatpush1.bf16.msra.mxu0 0
        %1070 = vmatprep.subr.bf16.mxu0 0
        %1071 = vmatpush1.bf16.msra.mxu0 %v1052
        %1072 = vmatprep.subr.bf16.mxu0 0
        %1073 = vmatpush1.bf16.msra.mxu0 %v1051
        %1074 = vmatprep.subr.bf16.mxu0 0
        %1075 = vmatpush2.bf16.msra.mxu0 0
        %1076 = vmatprep.subr.bf16.mxu0 0
        %1077 = vmatpush2.bf16.msra.mxu0 0
        %1078 = vmatprep.subr.bf16.mxu0 0
        %1079 = vmatpush2.bf16.msra.mxu0 0
        %1080 = vmatprep.subr.bf16.mxu0 0
        %1081 = vmatpush2.bf16.msra.mxu0 0
        %1082 = vmatprep.subr.bf16.mxu0 0
        %1083 = vmatpush2.bf16.msra.mxu0 0
        %1084 = vmatprep.subr.bf16.mxu0 0
        %1085 = vmatpush2.bf16.msra.mxu0 0
        %1086 = vmatprep.subr.bf16.mxu0 0
        %1087 = vmatpush2.bf16.msra.mxu0 0
        %1088 = vmatprep.subr.bf16.mxu0 0
        %1089 = vmatpush2.bf16.msra.mxu0 0
        %1090 = vmatprep.mubr.bf16.mxu0 0
        %1091 = vmatmul.mubr.bf16.gmra.mxu0 %v1056
        %v1092 = vpop.f32.mrf.mxu0
        %v1093 = vadd.f32 %v1041, %v1092
        %v1094 = vpop.f32.mrf.mxu0
        %v1095 = vpop.f32.mrf.mxu0
        %v1096 = vpop.f32.mrf.mxu0
        %1097 = vdwg.mxu0
        %v1098 = vmax.f32 %v1093, 0.0
        %v1099 = vpack.c.bf16 %v1098, %v1098
        %v1100 = vld [vmem:[%s10] sm:$0xf]
        %v1101 = vld [vmem:[%s10 + $0x4] sm:$0xf]
        %v1102 = vld [vmem:[%s10 + $0x8] sm:$0xf]
        %v1103 = vld [vmem:[%s10 + $0xc] sm:$0xf]
        %v1104 = vld [vmem:[%s10 + $0x10] sm:$0xf]
        %v1105 = vld [vmem:[%s10 + $0x14] sm:$0xf]
        %v1106 = vld [vmem:[%s10 + $0x18] sm:$0xf]
        %v1107 = vld [vmem:[%s10 + $0x1c] sm:$0xf]
        %v1108 = vld [vmem:[#allocation12] sm:$0x1]
        %v1110 = vlaneseq
        %v1111 = vshrl.u32 %v1110, 7
        %v1112 = vsub.s32 0, %v1111
        %v1113 = vrot.slane %v1108, %v1112
        %v1123 = vunpack.c.l.b16 %v1100
        %v1124 = vunpack.c.l.b16 %v1101
        %v1125 = vunpack.c.l.b16 %v1102
        %v1126 = vunpack.c.l.b16 %v1103
        %v1127 = vunpack.c.l.b16 %v1104
        %v1128 = vunpack.c.l.b16 %v1105
        %v1129 = vunpack.c.l.b16 %v1106
        %v1130 = vunpack.c.l.b16 %v1107
        %v1131 = vpack.c.b16 %v1124, %v1123
        %v1132 = vpack.c.b16 %v1126, %v1125
        %v1133 = vpack.c.b16 %v1128, %v1127
        %v1134 = vpack.c.b16 %v1130, %v1129
        %vm1139 = vcmask 523264
        %v1141 = vsel %vm1139, %v1099, 0
        %1143 = vmatprep.subr.bf16.mxu0 0
        %1144 = vmatpush1.bf16.msra.mxu0 0
        %1145 = vmatprep.subr.bf16.mxu0 0
        %1146 = vmatpush1.bf16.msra.mxu0 0
        %1147 = vmatprep.subr.bf16.mxu0 0
        %1148 = vmatpush1.bf16.msra.mxu0 0
        %1149 = vmatprep.subr.bf16.mxu0 0
        %1150 = vmatpush1.bf16.msra.mxu0 0
        %1151 = vmatprep.subr.bf16.mxu0 0
        %1152 = vmatpush1.bf16.msra.mxu0 %v1134
        %1153 = vmatprep.subr.bf16.mxu0 0
        %1154 = vmatpush1.bf16.msra.mxu0 %v1133
        %1155 = vmatprep.subr.bf16.mxu0 0
        %1156 = vmatpush1.bf16.msra.mxu0 %v1132
        %1157 = vmatprep.subr.bf16.mxu0 0
        %1158 = vmatpush1.bf16.msra.mxu0 %v1131
        %1159 = vmatprep.subr.bf16.mxu0 0
        %1160 = vmatpush2.bf16.msra.mxu0 0
        %1161 = vmatprep.subr.bf16.mxu0 0
        %1162 = vmatpush2.bf16.msra.mxu0 0
        %1163 = vmatprep.subr.bf16.mxu0 0
        %1164 = vmatpush2.bf16.msra.mxu0 0
        %1165 = vmatprep.subr.bf16.mxu0 0
        %1166 = vmatpush2.bf16.msra.mxu0 0
        %1167 = vmatprep.subr.bf16.mxu0 0
        %1168 = vmatpush2.bf16.msra.mxu0 0
        %1169 = vmatprep.subr.bf16.mxu0 0
        %1170 = vmatpush2.bf16.msra.mxu0 0
        %1171 = vmatprep.subr.bf16.mxu0 0
        %1172 = vmatpush2.bf16.msra.mxu0 0
        %1173 = vmatprep.subr.bf16.mxu0 0
        %1174 = vmatpush2.bf16.msra.mxu0 0
        %1175 = vmatprep.mubr.bf16.mxu0 0
        %1176 = vmatmul.mubr.bf16.gmra.mxu0 %v1141
        %v1177 = vpop.f32.mrf.mxu0
        %v1178 = vadd.f32 %v1113, %v1177
        %v1179 = vpop.f32.mrf.mxu0
        %v1180 = vpop.f32.mrf.mxu0
        %v1181 = vpop.f32.mrf.mxu0
        %1182 = vdwg.mxu0
        %v1183 = vadd.f32 %v1001, %v1178
        %1184 = vst.msk [vmem:[%s574] sm:$0xff] %vm579, %v1183
        %p1185 = scmp.lt.s32.totalorder %s29, 1
        %s1186 = scalar_select %p1185, %s29, 1
        %s1187 = smul.addr %s1186, 8
        %s1188 = scalar_lea.vmem %s14, %s1187
        // Predicated region
        $region105: #{encoder_forward.2} parent=75 // pred_check
          %p1189 = pneg %p351
        $region106: #{encoder_forward.2} parent=75 // pred_check_branch
          %1191 = sbr.rel (%p1189) target = $region108
        $region107: #{encoder_forward.2} parent=75 // pred_region
          _
        $region108: #{encoder_forward.2} parent=75 // pred_fallthru
          _
      $region76: #{encoder_forward.2} parent=5 // pred_fallthru
        _
      %p1192 = scmp.le.s32.totalorder 2, %s24
      // Predicated region
      $region109: #{encoder_forward.2} parent=5 // pred_check
        %p1193 = pneg %p1192
      $region110: #{encoder_forward.2} parent=5 // pred_check_branch
        %1195 = sbr.rel (%p1193) target = $region112
      $region111: #{encoder_forward.2} parent=5 // pred_region
        %s1196 = ssub.s32 %s24, 2
        // Predicated region
        $region113: #{encoder_forward.2} parent=111 // pred_check
          %p1197 = pneg %p357
        $region114: #{encoder_forward.2} parent=111 // pred_check_branch
          %1199 = sbr.rel (%p1197) target = $region116
        $region115: #{encoder_forward.2} parent=111 // pred_region
          %p1200 = scmp.lt.s32.totalorder %s30, 1
          %s1201 = scalar_select %p1200, %s30, 1
          %s1202 = smul.addr %s1201, 8
          %s1203 = scalar_lea.vmem %s14, %s1202
        $region116: #{encoder_forward.2} parent=111 // pred_fallthru
          _
      $region112: #{encoder_forward.2} parent=5 // pred_fallthru
        _
    $region6: #{encoder_forward.2} parent=1 // loop_footer
      %s28 = sadd.s32 1, %s24
    $region7: #{encoder_forward.2} parent=1 // loop_footer_branch
      %23 = sbr.rel target = $region3
    $region8: #{encoder_forward.2} parent=1 // loop_exit
      _
    %1204 = vsyncpa [#allocation3], 1
    %s1205 = scalar_lea.sflag [#allocation3], 1
    %1206 = vsyncpa %s1205, 1
    %1207 = vsyncpa [#allocation5], 1
    %1208 = vsyncpa [#allocation8], 1
    %1209 = vsyncpa [#allocation11], 1

// kernel: encoder_forward.3
$region0: #{encoder_forward.3}
  #allocation0 [shape = 'u32[]', space=smem, size = 0x4, offset = 0x4, fixed_abs, tag = 'smem constant byte address 0x4 - core index']
  #allocation1 [shape = 'u32[144,128]{1,0:T(1,128)}', space=vmem, size = 0x12000, scoped, tag = 'internal scratch']
  %s0 = inlined_call_operand.vmem [shape: f32[2,8,32], index: 0, kind: input, shape index: {}]
  %s1 = inlined_call_operand.vmem [shape: f32[1,32], index: 1, kind: input, shape index: {}]
  %s2 = inlined_call_operand.vmem [shape: f32[1,32], index: 2, kind: input, shape index: {}]
  %s3 = inlined_call_operand.vmem [shape: bf16[32,96], index: 3, kind: input, shape index: {}]
  %s4 = inlined_call_operand.vmem [shape: bf16[32,32], index: 4, kind: input, shape index: {}]
  %s5 = inlined_call_operand.vmem [shape: f32[2,2,8,8], index: 5, kind: input, shape index: {}]
  %s6 = inlined_call_operand.vmem [shape: f32[1,32], index: 6, kind: input, shape index: {}]
  %s7 = inlined_call_operand.vmem [shape: f32[1,32], index: 7, kind: input, shape index: {}]
  %s8 = inlined_call_operand.vmem [shape: bf16[32,64], index: 8, kind: input, shape index: {}]
  %s9 = inlined_call_operand.vmem [shape: f32[1,64], index: 9, kind: input, shape index: {}]
  %s10 = inlined_call_operand.vmem [shape: bf16[64,32], index: 10, kind: input, shape index: {}]
  %s11 = inlined_call_operand.vmem [shape: f32[1,32], index: 11, kind: input, shape index: {}]
  %s12 = inlined_call_operand.vmem [shape: f32[1,32], index: 12, kind: input, shape index: {}]
  %s13 = inlined_call_operand.vmem [shape: f32[1,32], index: 13, kind: input, shape index: {}]
  %s14 = inlined_call_operand.hbm [shape: f32[2,8,32], index: 14, kind: output, shape index: {}]
  %s15 = sld [smem:[#allocation0]]
  $region89: #{encoder_forward.3} parent=0
    _
  %s17 = ssub.s32 1, %s15
  %s18 = scalar_select 0, %s17, %s15
  $region1: #{encoder_forward.3} parent=0
    #allocation2 [shape = 'u8[8192]{0}', space=vmem, size = 0x2000, scoped, tag = 'output window, operand 0']
    #allocation3 [shape = 's32[2]{0}', space=sflag, size = 0x8, scoped, tag = 'scoped memory for encoder_forward.3']
    %19 = vsyncpa [#allocation3], 0
    %s20 = scalar_lea.sflag [#allocation3], 1
    %21 = vsyncpa %s20, 0
    loop: start=0, step=1, limit=4
    $region2: #{encoder_forward.3} parent=1 // loop_pre_header
      _
    $region3: #{encoder_forward.3} parent=1 // loop_header
      %s23 = sphi 0, %s27
      %p24 = scmp.ge.s32.totalorder %s23, 4
      %s33 = sphi 0, %s35
      %s36 = sphi 0, %s33
      %s37 = sphi 0, %s36
      %s53 = sphi 0, %s37
      %s57 = sphi 0, %s57
      %s59 = sphi 0, %s57
      %s60 = sphi 0, %s59
      %s74 = sphi 0, %s60
      %s78 = sphi 0, %s78
      %s80 = sphi 0, %s78
      %s81 = sphi 0, %s80
      %s95 = sphi 0, %s81
      %s99 = sphi 0, %s99
      %s101 = sphi 0, %s99
      %s102 = sphi 0, %s101
      %s116 = sphi 0, %s102
      %s120 = sphi 0, %s120
      %s122 = sphi 0, %s120
      %s123 = sphi 0, %s122
      %s137 = sphi 0, %s123
      %s143 = sphi 0, %s145
      %s146 = sphi 0, %s143
      %s147 = sphi 0, %s146
      %s163 = sphi 0, %s147
      %s167 = sphi 0, %s167
      %s169 = sphi 0, %s167
      %s170 = sphi 0, %s169
      %s184 = sphi 0, %s170
      %s188 = sphi 0, %s188
      %s190 = sphi 0, %s188
      %s191 = sphi 0, %s190
      %s205 = sphi 0, %s191
      %s209 = sphi 0, %s209
      %s211 = sphi 0, %s209
      %s212 = sphi 0, %s211
      %s226 = sphi 0, %s212
      %s230 = sphi 0, %s230
      %s232 = sphi 0, %s230
      %s233 = sphi 0, %s232
      %s247 = sphi 0, %s233
      %s251 = sphi 0, %s251
      %s253 = sphi 0, %s251
      %s254 = sphi 0, %s253
      %s268 = sphi 0, %s254
      %s272 = sphi 0, %s272
      %s274 = sphi 0, %s272
      %s275 = sphi 0, %s274
      %s289 = sphi 0, %s275
      %s293 = sphi 0, %s293
      %s295 = sphi 0, %s293
      %s296 = sphi 0, %s295
      %s310 = sphi 0, %s296
      %s314 = sphi 0, %s314
      %s316 = sphi 0, %s314
      %s317 = sphi 0, %s316
      %s331 = sphi 0, %s317
      %s337 = sphi 0, %s339
      %s340 = sphi 0, %s337
      %s341 = sphi 0, %s340
      %s357 = sphi 0, %s341
    $region4: #{encoder_forward.3} parent=1 // loop_header_branch
      %26 = sbr.rel (%p24) target = $region8
    $region5: #{encoder_forward.3} parent=1 // loop_body
      %s28 = ssub.s32 %s23, 1
      %s29 = ssub.s32 %s23, 2
      %s30 = sadd.s32 %s23, 1
      %s31 = ssub.s32 %s23, %s30
      %p32 = scmp.eq.s32.totalorder %s31, 0
      %s34 = sadd.s32 %s33, 1
      %s35 = scalar_select %p32, %s33, %s34
      %p38 = pneg %p32
      %p39 = scmp.eq.s32.totalorder %s23, 1
      %p40 = por %p38, %p39
      %p41 = scmp.ne.s32.totalorder %s33, %s36
      %p42 = scmp.eq.s32.totalorder %s23, 0
      %p43 = por %p41, %p42
      %p44 = scmp.ne.s32.totalorder %s33, %s36
      %p45 = scmp.eq.s32.totalorder %s28, 1
      %p46 = por %p44, %p45
      %p47 = scmp.ne.s32.totalorder %s36, %s37
      %p48 = scmp.eq.s32.totalorder %s28, 0
      %p49 = por %p47, %p48
      %p50 = scmp.ne.s32.totalorder %s36, %s37
      %p51 = scmp.eq.s32.totalorder %s29, 1
      %p52 = por %p50, %p51
      %p54 = scmp.ne.s32.totalorder %s37, %s53
      %p55 = scmp.eq.s32.totalorder %s29, 0
      %p56 = por %p54, %p55
      %s58 = sadd.s32 %s57, 1
      %p61 = scmp.eq.s32.totalorder %s23, 1
      %p62 = scmp.ne.s32.totalorder %s57, %s59
      %p63 = scmp.eq.s32.totalorder %s23, 0
      %p64 = por %p62, %p63
      %p65 = scmp.ne.s32.totalorder %s57, %s59
      %p66 = scmp.eq.s32.totalorder %s28, 1
      %p67 = por %p65, %p66
      %p68 = scmp.ne.s32.totalorder %s59, %s60
      %p69 = scmp.eq.s32.totalorder %s28, 0
      %p70 = por %p68, %p69
      %p71 = scmp.ne.s32.totalorder %s59, %s60
      %p72 = scmp.eq.s32.totalorder %s29, 1
      %p73 = por %p71, %p72
      %p75 = scmp.ne.s32.totalorder %s60, %s74
      %p76 = scmp.eq.s32.totalorder %s29, 0
      %p77 = por %p75, %p76
      %s79 = sadd.s32 %s78, 1
      %p82 = scmp.eq.s32.totalorder %s23, 1
      %p83 = scmp.ne.s32.totalorder %s78, %s80
      %p84 = scmp.eq.s32.totalorder %s23, 0
      %p85 = por %p83, %p84
      %p86 = scmp.ne.s32.totalorder %s78, %s80
      %p87 = scmp.eq.s32.totalorder %s28, 1
      %p88 = por %p86, %p87
      %p89 = scmp.ne.s32.totalorder %s80, %s81
      %p90 = scmp.eq.s32.totalorder %s28, 0
      %p91 = por %p89, %p90
      %p92 = scmp.ne.s32.totalorder %s80, %s81
      %p93 = scmp.eq.s32.totalorder %s29, 1
      %p94 = por %p92, %p93
      %p96 = scmp.ne.s32.totalorder %s81, %s95
      %p97 = scmp.eq.s32.totalorder %s29, 0
      %p98 = por %p96, %p97
      %s100 = sadd.s32 %s99, 1
      %p103 = scmp.eq.s32.totalorder %s23, 1
      %p104 = scmp.ne.s32.totalorder %s99, %s101
      %p105 = scmp.eq.s32.totalorder %s23, 0
      %p106 = por %p104, %p105
      %p107 = scmp.ne.s32.totalorder %s99, %s101
      %p108 = scmp.eq.s32.totalorder %s28, 1
      %p109 = por %p107, %p108
      %p110 = scmp.ne.s32.totalorder %s101, %s102
      %p111 = scmp.eq.s32.totalorder %s28, 0
      %p112 = por %p110, %p111
      %p113 = scmp.ne.s32.totalorder %s101, %s102
      %p114 = scmp.eq.s32.totalorder %s29, 1
      %p115 = por %p113, %p114
      %p117 = scmp.ne.s32.totalorder %s102, %s116
      %p118 = scmp.eq.s32.totalorder %s29, 0
      %p119 = por %p117, %p118
      %s121 = sadd.s32 %s120, 1
      %p124 = scmp.eq.s32.totalorder %s23, 1
      %p125 = scmp.ne.s32.totalorder %s120, %s122
      %p126 = scmp.eq.s32.totalorder %s23, 0
      %p127 = por %p125, %p126
      %p128 = scmp.ne.s32.totalorder %s120, %s122
      %p129 = scmp.eq.s32.totalorder %s28, 1
      %p130 = por %p128, %p129
      %p131 = scmp.ne.s32.totalorder %s122, %s123
      %p132 = scmp.eq.s32.totalorder %s28, 0
      %p133 = por %p131, %p132
      %p134 = scmp.ne.s32.totalorder %s122, %s123
      %p135 = scmp.eq.s32.totalorder %s29, 1
      %p136 = por %p134, %p135
      %p138 = scmp.ne.s32.totalorder %s123, %s137
      %p139 = scmp.eq.s32.totalorder %s29, 0
      %p140 = por %p138, %p139
      %s141 = ssub.s32 %s23, %s30
      %p142 = scmp.eq.s32.totalorder %s141, 0
      %s144 = sadd.s32 %s143, 1
      %s145 = scalar_select %p142, %s143, %s144
      %p148 = pneg %p142
      %p149 = scmp.eq.s32.totalorder %s23, 1
      %p150 = por %p148, %p149
      %p151 = scmp.ne.s32.totalorder %s143, %s146
      %p152 = scmp.eq.s32.totalorder %s23, 0
      %p153 = por %p151, %p152
      %p154 = scmp.ne.s32.totalorder %s143, %s146
      %p155 = scmp.eq.s32.totalorder %s28, 1
      %p156 = por %p154, %p155
      %p157 = scmp.ne.s32.totalorder %s146, %s147
      %p158 = scmp.eq.s32.totalorder %s28, 0
      %p159 = por %p157, %p158
      %p160 = scmp.ne.s32.totalorder %s146, %s147
      %p161 = scmp.eq.s32.totalorder %s29, 1
      %p162 = por %p160, %p161
      %p164 = scmp.ne.s32.totalorder %s147, %s163
      %p165 = scmp.eq.s32.totalorder %s29, 0
      %p166 = por %p164, %p165
      %s168 = sadd.s32 %s167, 1
      %p171 = scmp.eq.s32.totalorder %s23, 1
      %p172 = scmp.ne.s32.totalorder %s167, %s169
      %p173 = scmp.eq.s32.totalorder %s23, 0
      %p174 = por %p172, %p173
      %p175 = scmp.ne.s32.totalorder %s167, %s169
      %p176 = scmp.eq.s32.totalorder %s28, 1
      %p177 = por %p175, %p176
      %p178 = scmp.ne.s32.totalorder %s169, %s170
      %p179 = scmp.eq.s32.totalorder %s28, 0
      %p180 = por %p178, %p179
      %p181 = scmp.ne.s32.totalorder %s169, %s170
      %p182 = scmp.eq.s32.totalorder %s29, 1
      %p183 = por %p181, %p182
      %p185 = scmp.ne.s32.totalorder %s170, %s184
      %p186 = scmp.eq.s32.totalorder %s29, 0
      %p187 = por %p185, %p186
      %s189 = sadd.s32 %s188, 1
      %p192 = scmp.eq.s32.totalorder %s23, 1
      %p193 = scmp.ne.s32.totalorder %s188, %s190
      %p194 = scmp.eq.s32.totalorder %s23, 0
      %p195 = por %p193, %p194
      %p196 = scmp.ne.s32.totalorder %s188, %s190
      %p197 = scmp.eq.s32.totalorder %s28, 1
      %p198 = por %p196, %p197
      %p199 = scmp.ne.s32.totalorder %s190, %s191
      %p200 = scmp.eq.s32.totalorder %s28, 0
      %p201 = por %p199, %p200
      %p202 = scmp.ne.s32.totalorder %s190, %s191
      %p203 = scmp.eq.s32.totalorder %s29, 1
      %p204 = por %p202, %p203
      %p206 = scmp.ne.s32.totalorder %s191, %s205
      %p207 = scmp.eq.s32.totalorder %s29, 0
      %p208 = por %p206, %p207
      %s210 = sadd.s32 %s209, 1
      %p213 = scmp.eq.s32.totalorder %s23, 1
      %p214 = scmp.ne.s32.totalorder %s209, %s211
      %p215 = scmp.eq.s32.totalorder %s23, 0
      %p216 = por %p214, %p215
      %p217 = scmp.ne.s32.totalorder %s209, %s211
      %p218 = scmp.eq.s32.totalorder %s28, 1
      %p219 = por %p217, %p218
      %p220 = scmp.ne.s32.totalorder %s211, %s212
      %p221 = scmp.eq.s32.totalorder %s28, 0
      %p222 = por %p220, %p221
      %p223 = scmp.ne.s32.totalorder %s211, %s212
      %p224 = scmp.eq.s32.totalorder %s29, 1
      %p225 = por %p223, %p224
      %p227 = scmp.ne.s32.totalorder %s212, %s226
      %p228 = scmp.eq.s32.totalorder %s29, 0
      %p229 = por %p227, %p228
      %s231 = sadd.s32 %s230, 1
      %p234 = scmp.eq.s32.totalorder %s23, 1
      %p235 = scmp.ne.s32.totalorder %s230, %s232
      %p236 = scmp.eq.s32.totalorder %s23, 0
      %p237 = por %p235, %p236
      %p238 = scmp.ne.s32.totalorder %s230, %s232
      %p239 = scmp.eq.s32.totalorder %s28, 1
      %p240 = por %p238, %p239
      %p241 = scmp.ne.s32.totalorder %s232, %s233
      %p242 = scmp.eq.s32.totalorder %s28, 0
      %p243 = por %p241, %p242
      %p244 = scmp.ne.s32.totalorder %s232, %s233
      %p245 = scmp.eq.s32.totalorder %s29, 1
      %p246 = por %p244, %p245
      %p248 = scmp.ne.s32.totalorder %s233, %s247
      %p249 = scmp.eq.s32.totalorder %s29, 0
      %p250 = por %p248, %p249
      %s252 = sadd.s32 %s251, 1
      %p255 = scmp.eq.s32.totalorder %s23, 1
      %p256 = scmp.ne.s32.totalorder %s251, %s253
      %p257 = scmp.eq.s32.totalorder %s23, 0
      %p258 = por %p256, %p257
      %p259 = scmp.ne.s32.totalorder %s251, %s253
      %p260 = scmp.eq.s32.totalorder %s28, 1
      %p261 = por %p259, %p260
      %p262 = scmp.ne.s32.totalorder %s253, %s254
      %p263 = scmp.eq.s32.totalorder %s28, 0
      %p264 = por %p262, %p263
      %p265 = scmp.ne.s32.totalorder %s253, %s254
      %p266 = scmp.eq.s32.totalorder %s29, 1
      %p267 = por %p265, %p266
      %p269 = scmp.ne.s32.totalorder %s254, %s268
      %p270 = scmp.eq.s32.totalorder %s29, 0
      %p271 = por %p269, %p270
      %s273 = sadd.s32 %s272, 1
      %p276 = scmp.eq.s32.totalorder %s23, 1
      %p277 = scmp.ne.s32.totalorder %s272, %s274
      %p278 = scmp.eq.s32.totalorder %s23, 0
      %p279 = por %p277, %p278
      %p280 = scmp.ne.s32.totalorder %s272, %s274
      %p281 = scmp.eq.s32.totalorder %s28, 1
      %p282 = por %p280, %p281
      %p283 = scmp.ne.s32.totalorder %s274, %s275
      %p284 = scmp.eq.s32.totalorder %s28, 0
      %p285 = por %p283, %p284
      %p286 = scmp.ne.s32.totalorder %s274, %s275
      %p287 = scmp.eq.s32.totalorder %s29, 1
      %p288 = por %p286, %p287
      %p290 = scmp.ne.s32.totalorder %s275, %s289
      %p291 = scmp.eq.s32.totalorder %s29, 0
      %p292 = por %p290, %p291
      %s294 = sadd.s32 %s293, 1
      %p297 = scmp.eq.s32.totalorder %s23, 1
      %p298 = scmp.ne.s32.totalorder %s293, %s295
      %p299 = scmp.eq.s32.totalorder %s23, 0
      %p300 = por %p298, %p299
      %p301 = scmp.ne.s32.totalorder %s293, %s295
      %p302 = scmp.eq.s32.totalorder %s28, 1
      %p303 = por %p301, %p302
      %p304 = scmp.ne.s32.totalorder %s295, %s296
      %p305 = scmp.eq.s32.totalorder %s28, 0
      %p306 = por %p304, %p305
      %p307 = scmp.ne.s32.totalorder %s295, %s296
      %p308 = scmp.eq.s32.totalorder %s29, 1
      %p309 = por %p307, %p308
      %p311 = scmp.ne.s32.totalorder %s296, %s310
      %p312 = scmp.eq.s32.totalorder %s29, 0
      %p313 = por %p311, %p312
      %s315 = sadd.s32 %s314, 1
      %p318 = scmp.eq.s32.totalorder %s23, 1
      %p319 = scmp.ne.s32.totalorder %s314, %s316
      %p320 = scmp.eq.s32.totalorder %s23, 0
      %p321 = por %p319, %p320
      %p322 = scmp.ne.s32.totalorder %s314, %s316
      %p323 = scmp.eq.s32.totalorder %s28, 1
      %p324 = por %p322, %p323
      %p325 = scmp.ne.s32.totalorder %s316, %s317
      %p326 = scmp.eq.s32.totalorder %s28, 0
      %p327 = por %p325, %p326
      %p328 = scmp.ne.s32.totalorder %s316, %s317
      %p329 = scmp.eq.s32.totalorder %s29, 1
      %p330 = por %p328, %p329
      %p332 = scmp.ne.s32.totalorder %s317, %s331
      %p333 = scmp.eq.s32.totalorder %s29, 0
      %p334 = por %p332, %p333
      %s335 = ssub.s32 %s23, %s30
      %p336 = scmp.eq.s32.totalorder %s335, 0
      %s338 = sadd.s32 %s337, 1
      %s339 = scalar_select %p336, %s337, %s338
      %p342 = pneg %p336
      %p343 = scmp.eq.s32.totalorder %s23, 1
      %p344 = por %p342, %p343
      %p345 = scmp.ne.s32.totalorder %s337, %s340
      %p346 = scmp.eq.s32.totalorder %s23, 0
      %p347 = por %p345, %p346
      %p348 = scmp.ne.s32.totalorder %s337, %s340
      %p349 = scmp.eq.s32.totalorder %s28, 1
      %p350 = por %p348, %p349
      %p351 = scmp.ne.s32.totalorder %s340, %s341
      %p352 = scmp.eq.s32.totalorder %s28, 0
      %p353 = por %p351, %p352
      %p354 = scmp.ne.s32.totalorder %s340, %s341
      %p355 = scmp.eq.s32.totalorder %s29, 1
      %p356 = por %p354, %p355
      %p358 = scmp.ne.s32.totalorder %s341, %s357
      %p359 = scmp.eq.s32.totalorder %s29, 0
      %p360 = por %p358, %p359
      %p361 = scmp.le.s32.totalorder 1, %s23
      %p362 = scmp.lt.s32.totalorder %s23, 3
      %p363 = pnand %p361, %p362
      %p364 = pneg %p363
      // Predicated region
      $region9: #{encoder_forward.3} parent=5 // pred_check
        _
      $region10: #{encoder_forward.3} parent=5 // pred_check_branch
        %366 = sbr.rel (%p363) target = $region12
      $region11: #{encoder_forward.3} parent=5 // pred_region
        %s367 = ssub.s32 %s23, 1
        // Predicated region
        $region13: #{encoder_forward.3} parent=11 // pred_check
          %p368 = pneg %p70
        $region14: #{encoder_forward.3} parent=11 // pred_check_branch
          %370 = sbr.rel (%p368) target = $region16
        $region15: #{encoder_forward.3} parent=11 // pred_region
          _
        $region16: #{encoder_forward.3} parent=11 // pred_fallthru
          _
        // Predicated region
        $region17: #{encoder_forward.3} parent=11 // pred_check
          %p371 = pneg %p91
        $region18: #{encoder_forward.3} parent=11 // pred_check_branch
          %373 = sbr.rel (%p371) target = $region20
        $region19: #{encoder_forward.3} parent=11 // pred_region
          _
        $region20: #{encoder_forward.3} parent=11 // pred_fallthru
          _
        // Predicated region
        $region21: #{encoder_forward.3} parent=11 // pred_check
          %p374 = pneg %p112
        $region22: #{encoder_forward.3} parent=11 // pred_check_branch
          %376 = sbr.rel (%p374) target = $region24
        $region23: #{encoder_forward.3} parent=11 // pred_region
          _
        $region24: #{encoder_forward.3} parent=11 // pred_fallthru
          _
        // Predicated region
        $region25: #{encoder_forward.3} parent=11 // pred_check
          %p377 = pneg %p133
        $region26: #{encoder_forward.3} parent=11 // pred_check_branch
          %379 = sbr.rel (%p377) target = $region28
        $region27: #{encoder_forward.3} parent=11 // pred_region
          _
        $region28: #{encoder_forward.3} parent=11 // pred_fallthru
          _
        // Predicated region
        $region29: #{encoder_forward.3} parent=11 // pred_check
          %p380 = pneg %p180
        $region30: #{encoder_forward.3} parent=11 // pred_check_branch
          %382 = sbr.rel (%p380) target = $region32
        $region31: #{encoder_forward.3} parent=11 // pred_region
          _
        $region32: #{encoder_forward.3} parent=11 // pred_fallthru
          _
        // Predicated region
        $region33: #{encoder_forward.3} parent=11 // pred_check
          %p383 = pneg %p201
        $region34: #{encoder_forward.3} parent=11 // pred_check_branch
          %385 = sbr.rel (%p383) target = $region36
        $region35: #{encoder_forward.3} parent=11 // pred_region
          _
        $region36: #{encoder_forward.3} parent=11 // pred_fallthru
          _
        // Predicated region
        $region37: #{encoder_forward.3} parent=11 // pred_check
          %p386 = pneg %p222
        $region38: #{encoder_forward.3} parent=11 // pred_check_branch
          %388 = sbr.rel (%p386) target = $region40
        $region39: #{encoder_forward.3} parent=11 // pred_region
          _
        $region40: #{encoder_forward.3} parent=11 // pred_fallthru
          _
        // Predicated region
        $region41: #{encoder_forward.3} parent=11 // pred_check
          %p389 = pneg %p243
        $region42: #{encoder_forward.3} parent=11 // pred_check_branch
          %391 = sbr.rel (%p389) target = $region44
        $region43: #{encoder_forward.3} parent=11 // pred_region
          _
        $region44: #{encoder_forward.3} parent=11 // pred_fallthru
          _
        // Predicated region
        $region45: #{encoder_forward.3} parent=11 // pred_check
          %p392 = pneg %p264
        $region46: #{encoder_forward.3} parent=11 // pred_check_branch
          %394 = sbr.rel (%p392) target = $region48
        $region47: #{encoder_forward.3} parent=11 // pred_region
          _
        $region48: #{encoder_forward.3} parent=11 // pred_fallthru
          _
        // Predicated region
        $region49: #{encoder_forward.3} parent=11 // pred_check
          %p395 = pneg %p285
        $region50: #{encoder_forward.3} parent=11 // pred_check_branch
          %397 = sbr.rel (%p395) target = $region52
        $region51: #{encoder_forward.3} parent=11 // pred_region
          _
        $region52: #{encoder_forward.3} parent=11 // pred_fallthru
          _
        // Predicated region
        $region53: #{encoder_forward.3} parent=11 // pred_check
          %p398 = pneg %p306
        $region54: #{encoder_forward.3} parent=11 // pred_check_branch
          %400 = sbr.rel (%p398) target = $region56
        $region55: #{encoder_forward.3} parent=11 // pred_region
          _
        $region56: #{encoder_forward.3} parent=11 // pred_fallthru
          _
        // Predicated region
        $region57: #{encoder_forward.3} parent=11 // pred_check
          %p401 = pneg %p327
        $region58: #{encoder_forward.3} parent=11 // pred_check_branch
          %403 = sbr.rel (%p401) target = $region60
        $region59: #{encoder_forward.3} parent=11 // pred_region
          _
        $region60: #{encoder_forward.3} parent=11 // pred_fallthru
          _
      $region12: #{encoder_forward.3} parent=5 // pred_fallthru
        _
      %p404 = scmp.lt.s32.totalorder %s23, 2
      // Predicated region
      $region61: #{encoder_forward.3} parent=5 // pred_check
        %p405 = pneg %p404
      $region62: #{encoder_forward.3} parent=5 // pred_check_branch
        %407 = sbr.rel (%p405) target = $region64
      $region63: #{encoder_forward.3} parent=5 // pred_region
        // Predicated region
        $region65: #{encoder_forward.3} parent=63 // pred_check
          %p408 = pneg %p43
        $region66: #{encoder_forward.3} parent=63 // pred_check_branch
          %410 = sbr.rel (%p408) target = $region68
        $region67: #{encoder_forward.3} parent=63 // pred_region
          %p411 = scmp.lt.s32.totalorder %s23, 1
          %s412 = scalar_select %p411, %s23, 1
          %s413 = smul.addr %s412, 8
          %s414 = scalar_lea.vmem %s0, %s413
        $region68: #{encoder_forward.3} parent=63 // pred_fallthru
          _
        // Predicated region
        $region69: #{encoder_forward.3} parent=63 // pred_check
          %p415 = pneg %p153
        $region70: #{encoder_forward.3} parent=63 // pred_check_branch
          %417 = sbr.rel (%p415) target = $region72
        $region71: #{encoder_forward.3} parent=63 // pred_region
          %p418 = scmp.lt.s32.totalorder %s23, 1
          %s419 = scalar_select %p418, %s23, 1
          %s420 = smul.addr %s419, 2
          %s421 = smul.addr %s420, 8
          %s422 = scalar_lea.vmem %s5, %s421
        $region72: #{encoder_forward.3} parent=63 // pred_fallthru
          _
      $region64: #{encoder_forward.3} parent=5 // pred_fallthru
        _
      %p423 = scmp.le.s32.totalorder 1, %s23
      %p424 = scmp.lt.s32.totalorder %s23, 3
      %p425 = pnand %p423, %p424
      %p426 = pneg %p425
      // Predicated region
      $region73: #{encoder_forward.3} parent=5 // pred_check
        _
      $region74: #{encoder_forward.3} parent=5 // pred_check_branch
        %428 = sbr.rel (%p425) target = $region76
      $region75: #{encoder_forward.3} parent=5 // pred_region
        %s429 = ssub.s32 %s23, 1
        %p430 = scmp.lt.s32.totalorder %s28, 1
        %s431 = scalar_select %p430, %s28, 1
        %s432 = smul.addr %s431, 8
        %s433 = scalar_lea.vmem %s0, %s432
        %p434 = pneg %p49
        %p435 = pneg %p46
        %p436 = pneg %p70
        %p437 = pneg %p67
        %p438 = pneg %p91
        %p439 = pneg %p88
        %p440 = pneg %p112
        %p441 = pneg %p109
        %p442 = pneg %p133
        %p443 = pneg %p130
        %p444 = scmp.lt.s32.totalorder %s28, 1
        %s445 = scalar_select %p444, %s28, 1
        %s446 = smul.addr %s445, 2
        %s447 = smul.addr %s446, 8
        %s448 = scalar_lea.vmem %s5, %s447
        %p449 = pneg %p159
        %p450 = pneg %p156
        %p451 = pneg %p180
        %p452 = pneg %p177
        %p453 = pneg %p201
        %p454 = pneg %p198
        %p455 = pneg %p222
        %p456 = pneg %p219
        %p457 = pneg %p243
        %p458 = pneg %p240
        %p459 = pneg %p264
        %p460 = pneg %p261
        %p461 = pneg %p285
        %p462 = pneg %p282
        %p463 = pneg %p306
        %p464 = pneg %p303
        %p465 = pneg %p327
        %p466 = pneg %p324
        %p467 = pneg %p353
        %p468 = pneg %p350
        %s469 = sand.u32 %s340, 1
        %s470 = scalar_lea.sflag [#allocation3], %s469
        %s471 = sand.u32 %s340, 1
        %s472 = smul.addr %s471, 8
        %s473 = scalar_lea.vmem [#allocation2], %s472
        %p474 = scmp.lt.s32.totalorder %s28, 1
        %s475 = scalar_select %p474, %s28, 1
        %s476 = smul.addr %s475, 8
        %s477 = scalar_lea.vmem %s0, %s476
        %p478 = scmp.lt.s32.totalorder %s28, 1
        %s479 = scalar_select %p478, %s28, 1
        %s480 = smul.addr %s479, 2
        %s481 = smul.addr %s480, 8
        %s482 = scalar_lea.vmem %s5, %s481
        %v484 = vld [vmem:[%s477] sm:$0xff]
        %v485 = vld [vmem:[%s1] sm:$0x1]
        %v486 = vld [vmem:[%s2] sm:$0x1]
        %vm487 = vcmask 261120
        %v488 = vsel %vm487, %v484, 0.0
        %489 = vadd.xlane.f32.xlu0 %v488
        %v490 = vpop.xlane.xlu0 %489
        %v491 = vrcp.pop 32.0
        %v492 = vmul.f32 %v490, %v491
        %v493 = vsub.f32 %v484, %v492
        %v494 = vmul.f32 %v493, %v493
        %v495 = vsel %vm487, %v494, 0.0
        %496 = vadd.xlane.f32.xlu0 %v495
        %v497 = vpop.xlane.xlu0 %496
        %v498 = vmul.f32 %v497, %v491
        %v499 = vadd.f32 %v498, 1e-05
        %v500 = vrsqrt.pop %v499
        %v501 = vmul.f32 %v493, %v500
        %v503 = vlaneseq
        %v504 = vshrl.u32 %v503, 7
        %v505 = vsub.s32 0, %v504
        %v506 = vrot.slane %v485, %v505
        %v508 = vmul.f32 %v501, %v506
        %v510 = vlaneseq
        %v511 = vshrl.u32 %v510, 7
        %v512 = vsub.s32 0, %v511
        %v513 = vrot.slane %v486, %v512
        %v515 = vadd.f32 %v508, %v513
        %v516 = vpack.c.bf16 %v515, %v515
        %v517 = vld [vmem:[%s3] sm:$0xf]
        %v518 = vld [vmem:[%s3 + $0x4] sm:$0xf]
        %v519 = vld [vmem:[%s3 + $0x8] sm:$0xf]
        %v520 = vld [vmem:[%s3 + $0xc] sm:$0xf]
        %v525 = vunpack.c.l.b16 %v517
        %v526 = vunpack.c.l.b16 %v518
        %v527 = vunpack.c.l.b16 %v519
        %v528 = vunpack.c.l.b16 %v520
        %v529 = vpack.c.b16 %v526, %v525
        %v530 = vpack.c.b16 %v528, %v527
        %v534 = vsel %vm487, %v516, 0
        %536 = vmatprep.subr.bf16.mxu0 0
        %537 = vmatpush1.bf16.msra.mxu0 0
        %538 = vmatprep.subr.bf16.mxu0 0
        %539 = vmatpush1.bf16.msra.mxu0 0
        %540 = vmatprep.subr.bf16.mxu0 0
        %541 = vmatpush1.bf16.msra.mxu0 0
        %542 = vmatprep.subr.bf16.mxu0 0
        %543 = vmatpush1.bf16.msra.mxu0 0
        %544 = vmatprep.subr.bf16.mxu0 0
        %545 = vmatpush1.bf16.msra.mxu0 0
        %546 = vmatprep.subr.bf16.mxu0 0
        %547 = vmatpush1.bf16.msra.mxu0 0
        %548 = vmatprep.subr.bf16.mxu0 0
        %549 = vmatpush1.bf16.msra.mxu0 %v530
        %550 = vmatprep.subr.bf16.mxu0 0
        %551 = vmatpush1.bf16.msra.mxu0 %v529
        %552 = vmatprep.subr.bf16.mxu0 0
        %553 = vmatpush2.bf16.msra.mxu0 0
        %554 = vmatprep.subr.bf16.mxu0 0
        %555 = vmatpush2.bf16.msra.mxu0 0
        %556 = vmatprep.subr.bf16.mxu0 0
        %557 = vmatpush2.bf16.msra.mxu0 0
        %558 = vmatprep.subr.bf16.mxu0 0
        %559 = vmatpush2.bf16.msra.mxu0 0
        %560 = vmatprep.subr.bf16.mxu0 0
        %561 = vmatpush2.bf16.msra.mxu0 0
        %562 = vmatprep.subr.bf16.mxu0 0
        %563 = vmatpush2.bf16.msra.mxu0 0
        %564 = vmatprep.subr.bf16.mxu0 0
        %565 = vmatpush2.bf16.msra.mxu0 0
        %566 = vmatprep.subr.bf16.mxu0 0
        %567 = vmatpush2.bf16.msra.mxu0 0
        %568 = vmatprep.mubr.bf16.mxu0 0
        %569 = vmatmul.mubr.bf16.gmra.mxu0 %v534
        %v570 = vpop.f32.mrf.mxu0
        %v571 = vadd.f32 0.0, %v570
        %v572 = vpop.f32.mrf.mxu0
        %v573 = vpop.f32.mrf.mxu0
        %v574 = vpop.f32.mrf.mxu0
        %575 = vdwg.mxu0
        %v576 = vmul.f32 %v571, 0.17677669
        %v577 = vpack.c.bf16 %v576, %v576
        %v578 = vpack.c.bf16 %v571, %v571
        %v579 = vld [vmem:[%s482] sm:$0xff]
        %581 = vrot.lane.b32.xlu0 %v578, 96
        %v582 = vpop.permute.xlu0 %581
        %vm583 = vcmask 130048
        %v585 = vsel %vm583, %v577, 0
        %v588 = vsel %vm583, %v582, 0
        %590 = vmatprep.subr.bf16.mxu0 0
        %591 = vmatpush1.bf16.xpose.msra.mxu0 0
        %592 = vmatprep.subr.bf16.mxu0 0
        %593 = vmatpush1.bf16.xpose.msra.mxu0 0
        %594 = vmatprep.subr.bf16.mxu0 0
        %595 = vmatpush1.bf16.xpose.msra.mxu0 0
        %596 = vmatprep.subr.bf16.mxu0 0
        %597 = vmatpush1.bf16.xpose.msra.mxu0 0
        %598 = vmatprep.subr.bf16.mxu0 0
        %599 = vmatpush1.bf16.xpose.msra.mxu0 0
        %600 = vmatprep.subr.bf16.mxu0 0
        %601 = vmatpush1.bf16.xpose.msra.mxu0 0
        %602 = vmatprep.subr.bf16.mxu0 0
        %603 = vmatpush1.bf16.xpose.msra.mxu0 0
        %604 = vmatprep.subr.bf16.mxu0 0
        %605 = vmatpush1.bf16.xpose.msra.mxu0 %v588
        %606 = vmatprep.subr.bf16.mxu0 0
        %607 = vmatpush2.bf16.xpose.msra.mxu0 0
        %608 = vmatprep.subr.bf16.mxu0 0
        %609 = vmatpush2.bf16.xpose.msra.mxu0 0
        %610 = vmatprep.subr.bf16.mxu0 0
        %611 = vmatpush2.bf16.xpose.msra.mxu0 0
        %612 = vmatprep.subr.bf16.mxu0 0
        %613 = vmatpush2.bf16.xpose.msra.mxu0 0
        %614 = vmatprep.subr.bf16.mxu0 0
        %615 = vmatpush2.bf16.xpose.msra.mxu0 0
        %616 = vmatprep.subr.bf16.mxu0 0
        %617 = vmatpush2.bf16.xpose.msra.mxu0 0
        %618 = vmatprep.subr.bf16.mxu0 0
        %619 = vmatpush2.bf16.xpose.msra.mxu0 0
        %620 = vmatprep.subr.bf16.mxu0 0
        %621 = vmatpush2.bf16.xpose.msra.mxu0 0
        %622 = vmatprep.mubr.bf16.mxu0 0
        %623 = vmatmul.mubr.bf16.gmra.mxu0 %v585
        %v624 = vpop.f32.mrf.mxu0
        %v625 = vadd.f32 %v579, %v624
        %v626 = vpop.f32.mrf.mxu0
        %v627 = vpop.f32.mrf.mxu0
        %v628 = vpop.f32.mrf.mxu0
        %629 = vdwg.mxu0
        %vm630 = vcmask 64512
        %v631 = vsel %vm630, %v625, -inf
        %632 = vmax.xlane.f32.xlu0 %v631
        %v633 = vpop.xlane.xlu0 %632
        %v634 = vsub.f32 %v625, %v633
        %v635 = vmul.f32 %v634, 1.442695
        %v636 = vpow.pop %v635
        %v637 = vsel %vm630, %v636, 0.0
        %638 = vadd.xlane.f32.xlu0 %v637
        %v639 = vpop.xlane.xlu0 %638
        %v640 = vrcp.pop %v639
        %v641 = vmul.f32 %v636, %v640
        %v642 = vpack.c.bf16 %v641, %v641
        %643 = vrot.lane.b32.xlu0 %v578, 64
        %v644 = vpop.permute.xlu0 %643
        %v646 = vsel %vm630, %v642, 0
        %vm648 = vcmask 1043456
        %v650 = vsel %vm648, %v644, 0
        %652 = vmatprep.subr.bf16.mxu0 0
        %653 = vmatpush1.bf16.msra.mxu0 0
        %654 = vmatprep.subr.bf16.mxu0 0
        %655 = vmatpush1.bf16.msra.mxu0 0
        %656 = vmatprep.subr.bf16.mxu0 0
        %657 = vmatpush1.bf16.msra.mxu0 0
        %658 = vmatprep.subr.bf16.mxu0 0
        %659 = vmatpush1.bf16.msra.mxu0 0
        %660 = vmatprep.subr.bf16.mxu0 0
        %661 = vmatpush1.bf16.msra.mxu0 0
        %662 = vmatprep.subr.bf16.mxu0 0
        %663 = vmatpush1.bf16.msra.mxu0 0
        %664 = vmatprep.subr.bf16.mxu0 0
        %665 = vmatpush1.bf16.msra.mxu0 0
        %666 = vmatprep.subr.bf16.mxu0 0
        %667 = vmatpush1.bf16.msra.mxu0 %v650
        %668 = vmatprep.subr.bf16.mxu0 0
        %669 = vmatpush2.bf16.msra.mxu0 0
        %670 = vmatprep.subr.bf16.mxu0 0
        %671 = vmatpush2.bf16.msra.mxu0 0
        %672 = vmatprep.subr.bf16.mxu0 0
        %673 = vmatpush2.bf16.msra.mxu0 0
        %674 = vmatprep.subr.bf16.mxu0 0
        %675 = vmatpush2.bf16.msra.mxu0 0
        %676 = vmatprep.subr.bf16.mxu0 0
        %677 = vmatpush2.bf16.msra.mxu0 0
        %678 = vmatprep.subr.bf16.mxu0 0
        %679 = vmatpush2.bf16.msra.mxu0 0
        %680 = vmatprep.subr.bf16.mxu0 0
        %681 = vmatpush2.bf16.msra.mxu0 0
        %682 = vmatprep.subr.bf16.mxu0 0
        %683 = vmatpush2.bf16.msra.mxu0 0
        %684 = vmatprep.mubr.bf16.mxu0 0
        %685 = vmatmul.mubr.bf16.gmra.mxu0 %v646
        %v686 = vpop.f32.mrf.mxu0
        %v687 = vadd.f32 0.0, %v686
        %v688 = vpop.f32.mrf.mxu0
        %v689 = vpop.f32.mrf.mxu0
        %v690 = vpop.f32.mrf.mxu0
        %691 = vdwg.mxu0
        %v692 = vpack.c.bf16 %v687, %v687
        %v693 = vld [vmem:[%s4] sm:$0xf]
        %v694 = vld [vmem:[%s4 + $0x4] sm:$0xf]
        %s695 = scalar_lea.vmem %s482, 8
        %v696 = vld [vmem:[%s695] sm:$0xff]
        %698 = vrot.lane.b32.xlu0 %v577, 112
        %v699 = vpop.permute.xlu0 %698
        %700 = vrot.lane.b32.xlu0 %v578, 80
        %v701 = vpop.permute.xlu0 %700
        %v703 = vsel %vm583, %v699, 0
        %v706 = vsel %vm583, %v701, 0
        %708 = vmatprep.subr.bf16.mxu0 0
        %709 = vmatpush1.bf16.xpose.msra.mxu0 0
        %710 = vmatprep.subr.bf16.mxu0 0
        %711 = vmatpush1.bf16.xpose.msra.mxu0 0
        %712 = vmatprep.subr.bf16.mxu0 0
        %713 = vmatpush1.bf16.xpose.msra.mxu0 0
        %714 = vmatprep.subr.bf16.mxu0 0
        %715 = vmatpush1.bf16.xpose.msra.mxu0 0
        %716 = vmatprep.subr.bf16.mxu0 0
        %717 = vmatpush1.bf16.xpose.msra.mxu0 0
        %718 = vmatprep.subr.bf16.mxu0 0
        %719 = vmatpush1.bf16.xpose.msra.mxu0 0
        %720 = vmatprep.subr.bf16.mxu0 0
        %721 = vmatpush1.bf16.xpose.msra.mxu0 0
        %722 = vmatprep.subr.bf16.mxu0 0
        %723 = vmatpush1.bf16.xpose.msra.mxu0 %v706
        %724 = vmatprep.subr.bf16.mxu0 0
        %725 = vmatpush2.bf16.xpose.msra.mxu0 0
        %726 = vmatprep.subr.bf16.mxu0 0
        %727 = vmatpush2.bf16.xpose.msra.mxu0 0
        %728 = vmatprep.subr.bf16.mxu0 0
        %729 = vmatpush2.bf16.xpose.msra.mxu0 0
        %730 = vmatprep.subr.bf16.mxu0 0
        %731 = vmatpush2.bf16.xpose.msra.mxu0 0
        %732 = vmatprep.subr.bf16.mxu0 0
        %733 = vmatpush2.bf16.xpose.msra.mxu0 0
        %734 = vmatprep.subr.bf16.mxu0 0
        %735 = vmatpush2.bf16.xpose.msra.mxu0 0
        %736 = vmatprep.subr.bf16.mxu0 0
        %737 = vmatpush2.bf16.xpose.msra.mxu0 0
        %738 = vmatprep.subr.bf16.mxu0 0
        %739 = vmatpush2.bf16.xpose.msra.mxu0 0
        %740 = vmatprep.mubr.bf16.mxu0 0
        %741 = vmatmul.mubr.bf16.gmra.mxu0 %v703
        %v742 = vpop.f32.mrf.mxu0
        %v743 = vadd.f32 %v696, %v742
        %v744 = vpop.f32.mrf.mxu0
        %v745 = vpop.f32.mrf.mxu0
        %v746 = vpop.f32.mrf.mxu0
        %747 = vdwg.mxu0
        %v748 = vsel %vm630, %v743, -inf
        %749 = vmax.xlane.f32.xlu0 %v748
        %v750 = vpop.xlane.xlu0 %749
        %v751 = vsub.f32 %v743, %v750
        %v752 = vmul.f32 %v751, 1.442695
        %v753 = vpow.pop %v752
        %v754 = vsel %vm630, %v753, 0.0
        %755 = vadd.xlane.f32.xlu0 %v754
        %v756 = vpop.xlane.xlu0 %755
        %v757 = vrcp.pop %v756
        %v758 = vmul.f32 %v753, %v757
        %v759 = vpack.c.bf16 %v758, %v758
        %760 = vrot.lane.b32.xlu0 %v578, 48
        %v761 = vpop.permute.xlu0 %760
        %v763 = vsel %vm630, %v759, 0
        %v766 = vsel %vm648, %v761, 0
        %768 = vmatprep.subr.bf16.mxu0 0
        %769 = vmatpush1.bf16.msra.mxu0 0
        %770 = vmatprep.subr.bf16.mxu0 0
        %771 = vmatpush1.bf16.msra.mxu0 0
        %772 = vmatprep.subr.bf16.mxu0 0
        %773 = vmatpush1.bf16.msra.mxu0 0
        %774 = vmatprep.subr.bf16.mxu0 0
        %775 = vmatpush1.bf16.msra.mxu0 0
        %776 = vmatprep.subr.bf16.mxu0 0
        %777 = vmatpush1.bf16.msra.mxu0 0
        %778 = vmatprep.subr.bf16.mxu0 0
        %779 = vmatpush1.bf16.msra.mxu0 0
        %780 = vmatprep.subr.bf16.mxu0 0
        %781 = vmatpush1.bf16.msra.mxu0 0
        %782 = vmatprep.subr.bf16.mxu0 0
        %783 = vmatpush1.bf16.msra.mxu0 %v766
        %784 = vmatprep.subr.bf16.mxu0 0
        %785 = vmatpush2.bf16.msra.mxu0 0
        %786 = vmatprep.subr.bf16.mxu0 0
        %787 = vmatpush2.bf16.msra.mxu0 0
        %788 = vmatprep.subr.bf16.mxu0 0
        %789 = vmatpush2.bf16.msra.mxu0 0
        %790 = vmatprep.subr.bf16.mxu0 0
        %791 = vmatpush2.bf16.msra.mxu0 0
        %792 = vmatprep.subr.bf16.mxu0 0
        %793 = vmatpush2.bf16.msra.mxu0 0
        %794 = vmatprep.subr.bf16.mxu0 0
        %795 = vmatpush2.bf16.msra.mxu0 0
        %796 = vmatprep.subr.bf16.mxu0 0
        %797 = vmatpush2.bf16.msra.mxu0 0
        %798 = vmatprep.subr.bf16.mxu0 0
        %799 = vmatpush2.bf16.msra.mxu0 0
        %800 = vmatprep.mubr.bf16.mxu0 0
        %801 = vmatmul.mubr.bf16.gmra.mxu0 %v763
        %v802 = vpop.f32.mrf.mxu0
        %v803 = vadd.f32 0.0, %v802
        %v804 = vpop.f32.mrf.mxu0
        %v805 = vpop.f32.mrf.mxu0
        %v806 = vpop.f32.mrf.mxu0
        %807 = vdwg.mxu0
        %v808 = vpack.c.bf16 %v803, %v803
        %v809 = vld [vmem:[%s4 + $0x8] sm:$0xf]
        %v810 = vld [vmem:[%s4 + $0xc] sm:$0xf]
        %v813 = vunpack.c.l.b16 %v809
        %v814 = vunpack.c.l.b16 %v810
        %v815 = vpack.c.b16 %v814, %v813
        %v818 = vsel %vm583, %v808, 0
        %820 = vmatprep.subr.bf16.mxu0 0
        %821 = vmatpush1.bf16.msra.mxu0 0
        %822 = vmatprep.subr.bf16.mxu0 0
        %823 = vmatpush1.bf16.msra.mxu0 0
        %824 = vmatprep.subr.bf16.mxu0 0
        %825 = vmatpush1.bf16.msra.mxu0 0
        %826 = vmatprep.subr.bf16.mxu0 0
        %827 = vmatpush1.bf16.msra.mxu0 0
        %828 = vmatprep.subr.bf16.mxu0 0
        %829 = vmatpush1.bf16.msra.mxu0 0
        %830 = vmatprep.subr.bf16.mxu0 0
        %831 = vmatpush1.bf16.msra.mxu0 0
        %832 = vmatprep.subr.bf16.mxu0 0
        %833 = vmatpush1.bf16.msra.mxu0 0
        %834 = vmatprep.subr.bf16.mxu0 0
        %835 = vmatpush1.bf16.msra.mxu0 %v815
        %836 = vmatprep.subr.bf16.mxu0 0
        %837 = vmatpush2.bf16.msra.mxu0 0
        %838 = vmatprep.subr.bf16.mxu0 0
        %839 = vmatpush2.bf16.msra.mxu0 0
        %840 = vmatprep.subr.bf16.mxu0 0
        %841 = vmatpush2.bf16.msra.mxu0 0
        %842 = vmatprep.subr.bf16.mxu0 0
        %843 = vmatpush2.bf16.msra.mxu0 0
        %844 = vmatprep.subr.bf16.mxu0 0
        %845 = vmatpush2.bf16.msra.mxu0 0
        %846 = vmatprep.subr.bf16.mxu0 0
        %847 = vmatpush2.bf16.msra.mxu0 0
        %848 = vmatprep.subr.bf16.mxu0 0
        %849 = vmatpush2.bf16.msra.mxu0 0
        %850 = vmatprep.subr.bf16.mxu0 0
        %851 = vmatpush2.bf16.msra.mxu0 0
        %852 = vmatprep.mubr.bf16.mxu0 0
        %853 = vmatmul.mubr.bf16.gmra.mxu0 %v818
        %v854 = vpop.f32.mrf.mxu0
        %v855 = vadd.f32 0.0, %v854
        %v856 = vpop.f32.mrf.mxu0
        %v857 = vpop.f32.mrf.mxu0
        %v858 = vpop.f32.mrf.mxu0
        %859 = vdwg.mxu0
        %v862 = vunpack.c.l.b16 %v693
        %v863 = vunpack.c.l.b16 %v694
        %v864 = vpack.c.b16 %v863, %v862
        %v867 = vsel %vm583, %v692, 0
        %869 = vmatprep.subr.bf16.mxu0 0
        %870 = vmatpush1.bf16.msra.mxu0 0
        %871 = vmatprep.subr.bf16.mxu0 0
        %872 = vmatpush1.bf16.msra.mxu0 0
        %873 = vmatprep.subr.bf16.mxu0 0
        %874 = vmatpush1.bf16.msra.mxu0 0
        %875 = vmatprep.subr.bf16.mxu0 0
        %876 = vmatpush1.bf16.msra.mxu0 0
        %877 = vmatprep.subr.bf16.mxu0 0
        %878 = vmatpush1.bf16.msra.mxu0 0
        %879 = vmatprep.subr.bf16.mxu0 0
        %880 = vmatpush1.bf16.msra.mxu0 0
        %881 = vmatprep.subr.bf16.mxu0 0
        %882 = vmatpush1.bf16.msra.mxu0 0
        %883 = vmatprep.subr.bf16.mxu0 0
        %884 = vmatpush1.bf16.msra.mxu0 %v864
        %885 = vmatprep.subr.bf16.mxu0 0
        %886 = vmatpush2.bf16.msra.mxu0 0
        %887 = vmatprep.subr.bf16.mxu0 0
        %888 = vmatpush2.bf16.msra.mxu0 0
        %889 = vmatprep.subr.bf16.mxu0 0
        %890 = vmatpush2.bf16.msra.mxu0 0
        %891 = vmatprep.subr.bf16.mxu0 0
        %892 = vmatpush2.bf16.msra.mxu0 0
        %893 = vmatprep.subr.bf16.mxu0 0
        %894 = vmatpush2.bf16.msra.mxu0 0
        %895 = vmatprep.subr.bf16.mxu0 0
        %896 = vmatpush2.bf16.msra.mxu0 0
        %897 = vmatprep.subr.bf16.mxu0 0
        %898 = vmatpush2.bf16.msra.mxu0 0
        %899 = vmatprep.subr.bf16.mxu0 0
        %900 = vmatpush2.bf16.msra.mxu0 0
        %901 = vmatprep.mubr.bf16.mxu0 0
        %902 = vmatmul.mubr.bf16.gmra.mxu0 %v867
        %v903 = vpop.f32.mrf.mxu0
        %v904 = vadd.f32 %v855, %v903
        %v905 = vpop.f32.mrf.mxu0
        %v906 = vpop.f32.mrf.mxu0
        %v907 = vpop.f32.mrf.mxu0
        %908 = vdwg.mxu0
        %v909 = vadd.f32 %v484, %v904
        %v910 = vld [vmem:[%s6] sm:$0x1]
        %v911 = vld [vmem:[%s7] sm:$0x1]
        %v912 = vsel %vm487, %v909, 0.0
        %913 = vadd.xlane.f32.xlu0 %v912
        %v914 = vpop.xlane.xlu0 %913
        %v915 = vmul.f32 %v914, %v491
        %v916 = vsub.f32 %v909, %v915
        %v917 = vmul.f32 %v916, %v916
        %v918 = vsel %vm487, %v917, 0.0
        %919 = vadd.xlane.f32.xlu0 %v918
        %v920 = vpop.xlane.xlu0 %919
        %v921 = vmul.f32 %v920, %v491
        %v922 = vadd.f32 %v921, 1e-05
        %v923 = vrsqrt.pop %v922
        %v924 = vmul.f32 %v916, %v923
        %v926 = vlaneseq
        %v927 = vshrl.u32 %v926, 7
        %v928 = vsub.s32 0, %v927
        %v929 = vrot.slane %v910, %v928
        %v931 = vmul.f32 %v924, %v929
        %v933 = vlaneseq
        %v934 = vshrl.u32 %v933, 7
        %v935 = vsub.s32 0, %v934
        %v936 = vrot.slane %v911, %v935
        %v938 = vadd.f32 %v931, %v936
        %v939 = vpack.c.bf16 %v938, %v938
        %v940 = vld [vmem:[%s8] sm:$0xf]
        %v941 = vld [vmem:[%s8 + $0x4] sm:$0xf]
        %v942 = vld [vmem:[%s8 + $0x8] sm:$0xf]
        %v943 = vld [vmem:[%s8 + $0xc] sm:$0xf]
        %v944 = vld [vmem:[%s9] sm:$0x1]
        %v946 = vlaneseq
        %v947 = vshrl.u32 %v946, 7
        %v948 = vsub.s32 0, %v947
        %v949 = vrot.slane %v944, %v948
        %v955 = vunpack.c.l.b16 %v940
        %v956 = vunpack.c.l.b16 %v941
        %v957 = vunpack.c.l.b16 %v942
        %v958 = vunpack.c.l.b16 %v943
        %v959 = vpack.c.b16 %v956, %v955
        %v960 = vpack.c.b16 %v958, %v957
        %v964 = vsel %vm487, %v939, 0
        %966 = vmatprep.subr.bf16.mxu0 0
        %967 = vmatpush1.bf16.msra.mxu0 0
        %968 = vmatprep.subr.bf16.mxu0 0
        %969 = vmatpush1.bf16.msra.mxu0 0
        %970 = vmatprep.subr.bf16.mxu0 0
        %971 = vmatpush1.bf16.msra.mxu0 0
        %972 = vmatprep.subr.bf16.mxu0 0
        %973 = vmatpush1.bf16.msra.mxu0 0
        %974 = vmatprep.subr.bf16.mxu0 0
        %975 = vmatpush1.bf16.msra.mxu0 0
        %976 = vmatprep.subr.bf16.mxu0 0
        %977 = vmatpush1.bf16.msra.mxu0 0
        %978 = vmatprep.subr.bf16.mxu0 0
        %979 = vmatpush1.bf16.msra.mxu0 %v960
        %980 = vmatprep.subr.bf16.mxu0 0
        %981 = vmatpush1.bf16.msra.mxu0 %v959
        %982 = vmatprep.subr.bf16.mxu0 0
        %983 = vmatpush2.bf16.msra.mxu0 0
        %984 = vmatprep.subr.bf16.mxu0 0
        %985 = vmatpush2.bf16.msra.mxu0 0
        %986 = vmatprep.subr.bf16.mxu0 0
        %987 = vmatpush2.bf16.msra.mxu0 0
        %988 = vmatprep.subr.bf16.mxu0 0
        %989 = vmatpush2.bf16.msra.mxu0 0
        %990 = vmatprep.subr.bf16.mxu0 0
        %991 = vmatpush2.bf16.msra.mxu0 0
        %992 = vmatprep.subr.bf16.mxu0 0
        %993 = vmatpush2.bf16.msra.mxu0 0
        %994 = vmatprep.subr.bf16.mxu0 0
        %995 = vmatpush2.bf16.msra.mxu0 0
        %996 = vmatprep.subr.bf16.mxu0 0
        %997 = vmatpush2.bf16.msra.mxu0 0
        %998 = vmatprep.mubr.bf16.mxu0 0
        %999 = vmatmul.mubr.bf16.gmra.mxu0 %v964
        %v1000 = vpop.f32.mrf.mxu0
        %v1001 = vadd.f32 %v949, %v1000
        %v1002 = vpop.f32.mrf.mxu0
        %v1003 = vpop.f32.mrf.mxu0
        %v1004 = vpop.f32.mrf.mxu0
        %1005 = vdwg.mxu0
        %v1006 = vmax.f32 %v1001, 0.0
        %v1007 = vpack.c.bf16 %v1006, %v1006
        %v1008 = vld [vmem:[%s10] sm:$0xf]
        %v1009 = vld [vmem:[%s10 + $0x4] sm:$0xf]
        %v1010 = vld [vmem:[%s10 + $0x8] sm:$0xf]
        %v1011 = vld [vmem:[%s10 + $0xc] sm:$0xf]
        %v1012 = vld [vmem:[%s10 + $0x10] sm:$0xf]
        %v1013 = vld [vmem:[%s10 + $0x14] sm:$0xf]
        %v1014 = vld [vmem:[%s10 + $0x18] sm:$0xf]
        %v1015 = vld [vmem:[%s10 + $0x1c] sm:$0xf]
        %v1016 = vld [vmem:[%s11] sm:$0x1]
        %v1018 = vlaneseq
        %v1019 = vshrl.u32 %v1018, 7
        %v1020 = vsub.s32 0, %v1019
        %v1021 = vrot.slane %v1016, %v1020
        %v1031 = vunpack.c.l.b16 %v1008
        %v1032 = vunpack.c.l.b16 %v1009
        %v1033 = vunpack.c.l.b16 %v1010
        %v1034 = vunpack.c.l.b16 %v1011
        %v1035 = vunpack.c.l.b16 %v1012
        %v1036 = vunpack.c.l.b16 %v1013
        %v1037 = vunpack.c.l.b16 %v1014
        %v1038 = vunpack.c.l.b16 %v1015
        %v1039 = vpack.c.b16 %v1032, %v1031
        %v1040 = vpack.c.b16 %v1034, %v1033
        %v1041 = vpack.c.b16 %v1036, %v1035
        %v1042 = vpack.c.b16 %v1038, %v1037
        %vm1047 = vcmask 523264
        %v1049 = vsel %vm1047, %v1007, 0
        %1051 = vmatprep.subr.bf16.mxu0 0
        %1052 = vmatpush1.bf16.msra.mxu0 0
        %1053 = vmatprep.subr.bf16.mxu0 0
        %1054 = vmatpush1.bf16.msra.mxu0 0
        %1055 = vmatprep.subr.bf16.mxu0 0
        %1056 = vmatpush1.bf16.msra.mxu0 0
        %1057 = vmatprep.subr.bf16.mxu0 0
        %1058 = vmatpush1.bf16.msra.mxu0 0
        %1059 = vmatprep.subr.bf16.mxu0 0
        %1060 = vmatpush1.bf16.msra.mxu0 %v1042
        %1061 = vmatprep.subr.bf16.mxu0 0
        %1062 = vmatpush1.bf16.msra.mxu0 %v1041
        %1063 = vmatprep.subr.bf16.mxu0 0
        %1064 = vmatpush1.bf16.msra.mxu0 %v1040
        %1065 = vmatprep.subr.bf16.mxu0 0
        %1066 = vmatpush1.bf16.msra.mxu0 %v1039
        %1067 = vmatprep.subr.bf16.mxu0 0
        %1068 = vmatpush2.bf16.msra.mxu0 0
        %1069 = vmatprep.subr.bf16.mxu0 0
        %1070 = vmatpush2.bf16.msra.mxu0 0
        %1071 = vmatprep.subr.bf16.mxu0 0
        %1072 = vmatpush2.bf16.msra.mxu0 0
        %1073 = vmatprep.subr.bf16.mxu0 0
        %1074 = vmatpush2.bf16.msra.mxu0 0
        %1075 = vmatprep.subr.bf16.mxu0 0
        %1076 = vmatpush2.bf16.msra.mxu0 0
        %1077 = vmatprep.subr.bf16.mxu0 0
        %1078 = vmatpush2.bf16.msra.mxu0 0
        %1079 = vmatprep.subr.bf16.mxu0 0
        %1080 = vmatpush2.bf16.msra.mxu0 0
        %1081 = vmatprep.subr.bf16.mxu0 0
        %1082 = vmatpush2.bf16.msra.mxu0 0
        %1083 = vmatprep.mubr.bf16.mxu0 0
        %1084 = vmatmul.mubr.bf16.gmra.mxu0 %v1049
        %v1085 = vpop.f32.mrf.mxu0
        %v1086 = vadd.f32 %v1021, %v1085
        %v1087 = vpop.f32.mrf.mxu0
        %v1088 = vpop.f32.mrf.mxu0
        %v1089 = vpop.f32.mrf.mxu0
        %1090 = vdwg.mxu0
        %v1091 = vadd.f32 %v909, %v1086
        %v1092 = vld [vmem:[%s12] sm:$0x1]
        %v1093 = vld [vmem:[%s13] sm:$0x1]
        %v1094 = vsel %vm487, %v1091, 0.0
        %1095 = vadd.xlane.f32.xlu0 %v1094
        %v1096 = vpop.xlane.xlu0 %1095
        %v1097 = vmul.f32 %v1096, %v491
        %v1098 = vsub.f32 %v1091, %v1097
        %v1099 = vmul.f32 %v1098, %v1098
        %v1100 = vsel %vm487, %v1099, 0.0
        %1101 = vadd.xlane.f32.xlu0 %v1100
        %v1102 = vpop.xlane.xlu0 %1101
        %v1103 = vmul.f32 %v1102, %v491
        %v1104 = vadd.f32 %v1103, 1e-05
        %v1105 = vrsqrt.pop %v1104
        %v1106 = vmul.f32 %v1098, %v1105
        %v1108 = vlaneseq
        %v1109 = vshrl.u32 %v1108, 7
        %v1110 = vsub.s32 0, %v1109
        %v1111 = vrot.slane %v1092, %v1110
        %v1113 = vmul.f32 %v1106, %v1111
        %v1115 = vlaneseq
        %v1116 = vshrl.u32 %v1115, 7
        %v1117 = vsub.s32 0, %v1116
        %v1118 = vrot.slane %v1093, %v1117
        %v1120 = vadd.f32 %v1113, %v1118
        %1121 = vst.msk [vmem:[%s473] sm:$0xff] %vm487, %v1120
        %s1122 = sand.u32 %s340, 1
        %s1123 = scalar_lea.sflag [#allocation3], %s1122
        %s1124 = sand.u32 %s340, 1
        %s1125 = smul.addr %s1124, 8
        %s1126 = scalar_lea.vmem [#allocation2], %s1125
        // Predicated region
        $region77: #{encoder_forward.3} parent=75 // pred_check
          %p1127 = pneg %p350
        $region78: #{encoder_forward.3} parent=75 // pred_check_branch
          %1129 = sbr.rel (%p1127) target = $region80
        $region79: #{encoder_forward.3} parent=75 // pred_region
          %s1131 = ssub.s32 128, 128
          %1132 = vsyncadd %s1123, %s1131
          %s1133 = smul.addr %s28, 128
          %s1134 = scalar_lea.hbm %s14, %s1133
          %s1136 = sshll.u32 %s1126, 4
          %s1137 = int_to_ptr.vmem [resolvable:$true] %s1136
          %1139 = dma.vmem_to_hbm [thread:$0]  %s1137, 128, %s1134, %s1123
        $region80: #{encoder_forward.3} parent=75 // pred_fallthru
          _
      $region76: #{encoder_forward.3} parent=5 // pred_fallthru
        _
      %p1140 = scmp.le.s32.totalorder 2, %s23
      // Predicated region
      $region81: #{encoder_forward.3} parent=5 // pred_check
        %p1141 = pneg %p1140
      $region82: #{encoder_forward.3} parent=5 // pred_check_branch
        %1143 = sbr.rel (%p1141) target = $region84
      $region83: #{encoder_forward.3} parent=5 // pred_region
        %s1144 = ssub.s32 %s23, 2
        // Predicated region
        $region85: #{encoder_forward.3} parent=83 // pred_check
          %p1145 = pneg %p356
        $region86: #{encoder_forward.3} parent=83 // pred_check_branch
          %1147 = sbr.rel (%p1145) target = $region88
        $region87: #{encoder_forward.3} parent=83 // pred_region
          %s1148 = sand.u32 %s341, 1
          %s1149 = scalar_lea.sflag [#allocation3], %s1148
          %s1150 = sand.u32 %s341, 1
          %s1151 = smul.addr %s1150, 8
          %s1152 = scalar_lea.vmem [#allocation2], %s1151
          %1153 = dma.done %s1149, 128
        $region88: #{encoder_forward.3} parent=83 // pred_fallthru
          _
      $region84: #{encoder_forward.3} parent=5 // pred_fallthru
        _
    $region6: #{encoder_forward.3} parent=1 // loop_footer
      %s27 = sadd.s32 1, %s23
    $region7: #{encoder_forward.3} parent=1 // loop_footer_branch
      %22 = sbr.rel target = $region3
    $region8: #{encoder_forward.3} parent=1 // loop_exit
      _
    %1154 = vsyncpa [#allocation3], 1
    %s1155 = scalar_lea.sflag [#allocation3], 1
    %1156 = vsyncpa %s1155, 1

</llo_original>
